<compile_context>
chip_gen: v6e
topology: v6e:2x2x1
jax: 0.10.0
libtpu: 0.0.40
codegen_flags: <defaults>
</compile_context>

<pallas_src>
import jax
import jax.numpy as jnp
from jax.experimental import pallas as pl
from jax.experimental.pallas import tpu as pltpu

# ----------------------------- config ("opt") ------------------------------ #
CFG = dict(
    vocab_size=50,
    hidden_size=32,          # -> out_features = 64
    video_channels=16,
    c3d_channels=16,
    num_classes=8,
    num_frames=8,
    question_len=8,
    batch=2,
    embed_dim=300,
)
CFG["out_features"] = 2 * CFG["hidden_size"]

VMEM_SPEC = pl.BlockSpec(memory_space=pltpu.MemorySpace.VMEM)


# ------------------------------ math helpers ------------------------------- #
def _elu(y):
    # PyTorch ELU(alpha=1): x if x>0 else exp(x)-1 (clamp arg to avoid overflow)
    return jnp.where(y > 0, y, jnp.exp(jnp.minimum(y, 0.0)) - 1.0)


def _conv1d3_elu(x, w_fold, b):
    # x: (B, T, C) NLC.  w_fold: (3*C, OF), row blocks = taps [x[t-1] | x[t] | x[t+1]]
    # (torch Conv1d weight (OF, C, 3) folded along (k, C)).  Three per-tap matmuls
    # accumulated -- no lane-axis concat of the shifted inputs.
    B, T, C = x.shape
    z = jnp.zeros((B, 1, C), jnp.float32)
    xm1 = jnp.concatenate([z, x[:, :T - 1, :]], axis=1).reshape(B * T, C)   # x[t-1]
    xp1 = jnp.concatenate([x[:, 1:, :], z], axis=1).reshape(B * T, C)       # x[t+1]
    x0 = x.reshape(B * T, C)
    y = (jnp.dot(xm1, w_fold[0:C], preferred_element_type=jnp.float32)
         + jnp.dot(x0, w_fold[C:2 * C], preferred_element_type=jnp.float32)
         + jnp.dot(xp1, w_fold[2 * C:3 * C], preferred_element_type=jnp.float32)
         + b)
    return _elu(y)                                                           # (B*T, OF)


def _bilstm_fused(xproj, whh, Hd, T):
    """Fused bidirectional LSTM, statically unrolled.

    xproj: (B, T, 8*Hd) combined input projection; gate columns interleaved per gate
           type: [i_f,i_b, f_f,f_b, o_f,o_b, g_f,g_b] (Hd-wide blocks).
    whh:   (2*Hd, 8*Hd) with rows [0:Hd]=h_f feeding only fwd columns and rows
           [Hd:2Hd]=h_b feeding only bwd columns.
    Sigmoid-gate (i,f,o) pre-activations were pre-scaled by 0.5 in the packed weights
    so a single tanh covers every gate: sigmoid(x) = 0.5*tanh(0.5*x) + 0.5.
    Returns list hs of length T; hs[s] is (B, 2*Hd) = [h_fwd(time=s) | h_bwd(time=T-1-s)].
    """
    f32 = jnp.float32
    B = xproj.shape[0]
    H2 = 2 * Hd
    W8 = 8 * Hd
    col = jax.lax.broadcasted_iota(jnp.int32, (1, W8), 1)
    if Hd & (Hd - 1) == 0:                       # Hd power of two -> cheap bit test
        fwd_mask = (col & Hd) == 0               # even Hd-blocks = fwd direction
    else:
        fwd_mask = ((col // Hd) % 2) == 0
    is_sig = col < 3 * H2                        # i, f, o columns
    gate_mul = jnp.where(is_sig, 0.5, 1.0).astype(f32)
    gate_add = jnp.where(is_sig, 0.5, 0.0).astype(f32)

    h = jnp.zeros((B, H2), f32)
    c = jnp.zeros((B, H2), f32)
    hs = []
    for step in range(T):
        # fwd columns take x[step], bwd columns take x[T-1-step] -- one vselect
        xg = jnp.where(fwd_mask, xproj[:, step, :], xproj[:, T - 1 - step, :])
        pre = xg + jnp.dot(h, whh, preferred_element_type=f32)
        tg = jnp.tanh(pre) * gate_mul + gate_add          # one EUP op for all gates
        gi = tg[:, 0:H2]
        gf = tg[:, H2:2 * H2]
        go = tg[:, 2 * H2:3 * H2]
        gg = tg[:, 3 * H2:4 * H2]
        c = gf * c + gi * gg
        h = go * jnp.tanh(c)
        hs.append(h)
    return hs


# ------------------------------ fused kernel ------------------------------- #
def _lgcn_fused_kernel(
    q_ids_ref, attn_mask_ref, feat_ref, c3d_ref, emb_ref,
    raw_wih_ref, raw_whh_ref, raw_b_ref,
    vconv_w_ref, vconv_b_ref, cconv_w_ref, cconv_b_ref,
    merge_w_ref, merge_b_ref,
    mat_wih_ref, mat_whh_ref, mat_b_ref,
    cls_w_ref, cls_b_ref,
    out_ref,
):
    f32 = jnp.float32
    B, T, _ = feat_ref.shape
    V = emb_ref.shape[0]
    H = raw_whh_ref.shape[0] // 2                 # raw LSTM per-direction hidden
    OF = merge_w_ref.shape[1]                     # out_features = 2 * hidden_size
    Lq = q_ids_ref.shape[0] // B                  # question length

    # ---- question embedding: one-hot matmul against VMEM-resident table ----
    ids2 = q_ids_ref[...]                                            # (B*Lq, 1) int32
    iota_v = jax.lax.broadcasted_iota(jnp.int32, (B * Lq, V), 1)
    onehot = jnp.where(ids2 == iota_v, 1.0, 0.0).astype(f32)         # (B*Lq, V)
    q_emb = jnp.dot(onehot, emb_ref[...], preferred_element_type=f32)    # (B*Lq, 300)

    # ---- lstm_raw: fused bidirectional recurrence (statically unrolled) ----
    # TODO(synk): pack_padded_sequence masking for question_length < Lq is not
    # replicated inside the recurrence (lengths are full in this config).
    xr = (jnp.dot(q_emb, raw_wih_ref[...], preferred_element_type=f32)
          + raw_b_ref[...]).reshape(B, Lq, 8 * H)
    hs_raw = _bilstm_fused(xr, raw_whh_ref[...], H, Lq)
    # raw_q[b, t] = [h_fwd(t) | h_bwd(t)]  (PyTorch bidirectional output order)
    rows = [jnp.concatenate([hs_raw[t][:, :H], hs_raw[Lq - 1 - t][:, H:]], axis=-1)
            for t in range(Lq)]
    raw_q = jnp.stack(rows, axis=1).reshape(B * Lq, OF)              # (B*Lq, OF)

    # ---- video_fc / c3d_fc (Conv1d k=3 pad=1 + ELU) and merge (Linear + ELU) ----
    vemb = _conv1d3_elu(feat_ref[...], vconv_w_ref[...], vconv_b_ref[...])   # (B*T, OF)
    cemb = _conv1d3_elu(c3d_ref[...], cconv_w_ref[...], cconv_b_ref[...])    # (B*T, OF)
    mw = merge_w_ref[...]
    v2 = _elu(jnp.dot(vemb, mw[0:OF], preferred_element_type=f32)
              + jnp.dot(cemb, mw[OF:2 * OF], preferred_element_type=f32)
              + merge_b_ref[...])                                            # (B*T, OF)

    # ---- BidafAttn('dot'), flattened to plain matmuls with additive mask ----
    # attn_mask already encodes cross-batch exclusion AND question-length masking.
    sc = jax.lax.dot_general(v2, raw_q, dimension_numbers=(((1,), (1,)), ((), ())),
                             preferred_element_type=f32)             # (B*T, B*Lq)
    sc = sc + attn_mask_ref[...]
    sc_max = jnp.max(sc, axis=-1, keepdims=True)
    p = jnp.exp(sc - sc_max)
    denom = jnp.maximum(jnp.sum(p, axis=-1, keepdims=True), 1e-30)   # qlen==0 guard
    p = p / denom                                                    # exact softmax
    u2 = jnp.dot(p, raw_q, preferred_element_type=f32)               # (B*T, OF)
    vu2 = v2 * u2

    # ---- lstm_mature over concat[v, u, v*u] with running max pooling --------
    # Input projection as v@W1 + u@W2 + (v*u)@W3 (weight row blocks; N=8*OF fused).
    mwih = mat_wih_ref[...]
    xm = (jnp.dot(v2, mwih[0:OF], preferred_element_type=f32)
          + jnp.dot(u2, mwih[OF:2 * OF], preferred_element_type=f32)
          + jnp.dot(vu2, mwih[2 * OF:3 * OF], preferred_element_type=f32)
          + mat_b_ref[...]).reshape(B, T, 8 * OF)
    hs_m = _bilstm_fused(xm, mat_whh_ref[...], OF, T)
    # max over time of [h_fwd(t) | h_bwd(t)] == elementwise max over the fused states
    pooled = hs_m[0]
    for s in range(1, T):
        pooled = jnp.maximum(pooled, hs_m[s])                        # (B, 2*OF)

    # ---- classifier ---------------------------------------------------------
    out_ref[...] = (jnp.dot(pooled, cls_w_ref[...], preferred_element_type=f32)
                    + cls_b_ref[...])


# ------------------------------- model glue -------------------------------- #
def lgcn_forward(params, question, question_length, features, c3d_features):
    B, Lq = question.shape
    T = features.shape[1]
    num_classes = CFG["num_classes"]

    q_ids2 = question.astype(jnp.int32).reshape(B * Lq, 1)           # batch-major rows

    # Additive attention mask (B*T, B*Lq): 0 where (same batch AND q-pos < qlen),
    # else -1e30.  Built wrapper-side (tiny), consumed directly by the kernel.
    bv = (jnp.arange(B * T, dtype=jnp.int32) // T)[:, None]
    bq = (jnp.arange(B * Lq, dtype=jnp.int32) // Lq)[None, :]
    qpos = (jnp.arange(B * Lq, dtype=jnp.int32) % Lq)[None, :]
    qlb = jnp.repeat(question_length.astype(jnp.int32), Lq)[None, :]
    valid = (bv == bq) & (qpos < qlb)
    attn_mask = jnp.where(valid, 0.0, -1e30).astype(jnp.float32)

    args = (
        q_ids2, attn_mask,
        features.astype(jnp.float32), c3d_features.astype(jnp.float32),
        params["embedding"],
        params["raw_wih"], params["raw_whh"], params["raw_b"],
        params["video_fc_w"], params["video_fc_b"],
        params["c3d_fc_w"], params["c3d_fc_b"],
        params["merge_wT"], params["merge_b"],
        params["mat_wih"], params["mat_whh"], params["mat_b"],
        params["cls_wT"], params["cls_b"],
    )
    return pl.pallas_call(
        _lgcn_fused_kernel,
        out_shape=jax.ShapeDtypeStruct((B, num_classes), jnp.float32),
        in_specs=[VMEM_SPEC] * len(args),
        out_specs=VMEM_SPEC,
    )(*args)


# ----------------------------- parameter init ------------------------------ #
def init_params(key):
    ks = iter(jax.random.split(key, 64))

    def nrm(shape, scale=0.05):
        return (scale * jax.random.normal(next(ks), shape)).astype(jnp.float32)

    H = CFG["hidden_size"]
    OF = CFG["out_features"]
    E = CFG["embed_dim"]

    def pack_bilstm(in_dim, hidden):
        # Raw per-direction parameters (torch gate order i,f,g,o), then pack:
        #  * reorder gates to [i,f,o,g] and fold the 0.5 sigmoid-input scale into
        #    the i,f,o columns (so the kernel uses a single tanh per step),
        #  * interleave fwd/bwd per gate block: [i_f,i_b, f_f,f_b, o_f,o_b, g_f,g_b],
        #  * build block-structured W_hh^T (2h, 8h): h_f rows feed only fwd columns,
        #    h_b rows feed only bwd columns.
        wih_f = nrm((in_dim, 4 * hidden)); whh_f = nrm((hidden, 4 * hidden))
        b_f = nrm((1, 4 * hidden))
        wih_b = nrm((in_dim, 4 * hidden)); whh_b = nrm((hidden, 4 * hidden))
        b_b = nrm((1, 4 * hidden))

        def perm(w):   # [i,f,g,o] -> [0.5*i, 0.5*f, 0.5*o, g]
            i = w[..., 0 * hidden:1 * hidden]
            f = w[..., 1 * hidden:2 * hidden]
            g = w[..., 2 * hidden:3 * hidden]
            o = w[..., 3 * hidden:4 * hidden]
            return jnp.concatenate([0.5 * i, 0.5 * f, 0.5 * o, g], axis=-1)

        def inter(a, b):   # gate-wise interleave of fwd/bwd blocks along last axis
            parts = []
            for k in range(4):
                parts.append(a[..., k * hidden:(k + 1) * hidden])
                parts.append(b[..., k * hidden:(k + 1) * hidden])
            return jnp.concatenate(parts, axis=-1)

        wih = inter(perm(wih_f), perm(wih_b))                        # (in_dim, 8h)
        z = jnp.zeros((hidden, 4 * hidden), jnp.float32)
        whh = jnp.concatenate([inter(perm(whh_f), z),
                               inter(z, perm(whh_b))], axis=0)       # (2h, 8h)
        bias = inter(perm(b_f), perm(b_b))                           # (1, 8h) (b_ih+b_hh)
        return wih, whh, bias

    raw_wih, raw_whh, raw_b = pack_bilstm(E, H)
    mat_wih, mat_whh, mat_b = pack_bilstm(3 * OF, OF)

    params = {
        "embedding": nrm((CFG["vocab_size"], E), scale=0.1),
        # Conv1d weight torch (Cout, Cin, 3) stored folded as (3*Cin, Cout),
        # row blocks ordered by tap: x[t-1] | x[t] | x[t+1].
        "video_fc_w": nrm((3 * CFG["video_channels"], OF)),
        "video_fc_b": nrm((1, OF)),
        "c3d_fc_w": nrm((3 * CFG["c3d_channels"], OF)),
        "c3d_fc_b": nrm((1, OF)),
        "merge_wT": nrm((2 * OF, OF)),
        "merge_b": nrm((1, OF)),
        "cls_wT": nrm((2 * OF, CFG["num_classes"])),
        "cls_b": nrm((1, CFG["num_classes"])),
        "raw_wih": raw_wih, "raw_whh": raw_whh, "raw_b": raw_b,
        "mat_wih": mat_wih, "mat_whh": mat_whh, "mat_b": mat_b,
    }
    return params


# ---------------------------------- main ----------------------------------- #
if __name__ == "__main__":
    key = jax.random.PRNGKey(0)
    pkey, qkey, fkey, ckey = jax.random.split(key, 4)

    B, Lq, T = CFG["batch"], CFG["question_len"], CFG["num_frames"]
    params = init_params(pkey)

    question = jax.random.randint(qkey, (B, Lq), 0, CFG["vocab_size"], dtype=jnp.int32)
    question_length = jnp.full((B,), Lq, dtype=jnp.int32)
    features = jax.random.normal(fkey, (B, T, CFG["video_channels"]), dtype=jnp.float32)
    c3d_features = jax.random.normal(ckey, (B, T, CFG["c3d_channels"]), dtype=jnp.float32)

    fwd = jax.jit(lgcn_forward)
    out = fwd(params, question, question_length, features, c3d_features)
    out = jax.block_until_ready(out)

    assert out.shape == (B, CFG["num_classes"]), out.shape
    assert bool(jnp.all(jnp.isfinite(out)))
    print("KERNEL_OK")
</pallas_src>

<mosaic_0001>
module attributes {stable_mosaic.version = 11 : i64} {
  func.func @_lgcn_fused_kernel(%arg0: memref<16x1xi32, #tpu.memory_space<vmem>>, %arg1: memref<16x16xf32, #tpu.memory_space<vmem>>, %arg2: memref<2x8x16xf32, #tpu.memory_space<vmem>>, %arg3: memref<2x8x16xf32, #tpu.memory_space<vmem>>, %arg4: memref<50x300xf32, #tpu.memory_space<vmem>>, %arg5: memref<300x256xf32, #tpu.memory_space<vmem>>, %arg6: memref<64x256xf32, #tpu.memory_space<vmem>>, %arg7: memref<1x256xf32, #tpu.memory_space<vmem>>, %arg8: memref<48x64xf32, #tpu.memory_space<vmem>>, %arg9: memref<1x64xf32, #tpu.memory_space<vmem>>, %arg10: memref<48x64xf32, #tpu.memory_space<vmem>>, %arg11: memref<1x64xf32, #tpu.memory_space<vmem>>, %arg12: memref<128x64xf32, #tpu.memory_space<vmem>>, %arg13: memref<1x64xf32, #tpu.memory_space<vmem>>, %arg14: memref<192x512xf32, #tpu.memory_space<vmem>>, %arg15: memref<128x512xf32, #tpu.memory_space<vmem>>, %arg16: memref<1x512xf32, #tpu.memory_space<vmem>>, %arg17: memref<128x8xf32, #tpu.memory_space<vmem>>, %arg18: memref<1x8xf32, #tpu.memory_space<vmem>>, %arg19: memref<2x8xf32, #tpu.memory_space<vmem>>) attributes {dimension_semantics = [], scalar_prefetch = 0 : i64, scratch_operands = 0 : i64, tpu.core_type = #tpu.core_type<tc>} {
    %c0 = arith.constant 0 : index
    %c0_0 = arith.constant 0 : index
    %0 = vector.load %arg0[%c0, %c0_0] : memref<16x1xi32, #tpu.memory_space<vmem>>, vector<16x1xi32>
    %1 = tpu.iota {dimensions = array<i32: 1>} : vector<16x50xi32>
    %2 = vector.broadcast %0 : vector<16x1xi32> to vector<16x50xi32>
    %3 = arith.cmpi eq, %2, %1 : vector<16x50xi32>
    %cst = arith.constant 1.000000e+00 : f32
    %cst_1 = arith.constant 0.000000e+00 : f32
    %4 = vector.broadcast %cst : f32 to vector<16x50xf32>
    %5 = vector.broadcast %cst_1 : f32 to vector<16x50xf32>
    %6 = arith.select %3, %4, %5 : vector<16x50xi1>, vector<16x50xf32>
    %c0_2 = arith.constant 0 : index
    %c0_3 = arith.constant 0 : index
    %7 = vector.load %arg4[%c0_2, %c0_3] : memref<50x300xf32, #tpu.memory_space<vmem>>, vector<50x300xf32>
    %cst_4 = arith.constant dense<0.000000e+00> : vector<16x300xf32>
    %8 = tpu.matmul %6, %7, %cst_4 {dimension_numbers = #tpu.dot_dimension_numbers<[1], [0], [0], [1], [0, 0, 1, 1], [], []>} : vector<16x50xf32>, vector<50x300xf32>, vector<16x300xf32> -> vector<16x300xf32>
    %c0_5 = arith.constant 0 : index
    %c0_6 = arith.constant 0 : index
    %9 = vector.load %arg5[%c0_5, %c0_6] : memref<300x256xf32, #tpu.memory_space<vmem>>, vector<300x256xf32>
    %cst_7 = arith.constant dense<0.000000e+00> : vector<16x256xf32>
    %10 = tpu.matmul %8, %9, %cst_7 {dimension_numbers = #tpu.dot_dimension_numbers<[1], [0], [0], [1], [0, 0, 1, 1], [], []>} : vector<16x300xf32>, vector<300x256xf32>, vector<16x256xf32> -> vector<16x256xf32>
    %c0_8 = arith.constant 0 : index
    %c0_9 = arith.constant 0 : index
    %11 = vector.load %arg7[%c0_8, %c0_9] : memref<1x256xf32, #tpu.memory_space<vmem>>, vector<1x256xf32>
    %12 = vector.broadcast %11 : vector<1x256xf32> to vector<16x256xf32>
    %13 = arith.addf %10, %12 : vector<16x256xf32>
    %14 = vector.shape_cast %13 : vector<16x256xf32> to vector<2x8x256xf32>
    %c0_10 = arith.constant 0 : index
    %c0_11 = arith.constant 0 : index
    %15 = vector.load %arg6[%c0_10, %c0_11] : memref<64x256xf32, #tpu.memory_space<vmem>>, vector<64x256xf32>
    %16 = tpu.iota {dimensions = array<i32: 1>} : vector<1x256xi32>
    %c32_i32 = arith.constant 32 : i32
    %17 = vector.broadcast %c32_i32 : i32 to vector<1x256xi32>
    %18 = arith.andi %16, %17 : vector<1x256xi32>
    %c0_i32 = arith.constant 0 : i32
    %19 = vector.broadcast %c0_i32 : i32 to vector<1x256xi32>
    %20 = arith.cmpi eq, %18, %19 : vector<1x256xi32>
    %c192_i32 = arith.constant 192 : i32
    %21 = vector.broadcast %c192_i32 : i32 to vector<1x256xi32>
    %22 = arith.cmpi slt, %16, %21 : vector<1x256xi32>
    %cst_12 = arith.constant 5.000000e-01 : f32
    %cst_13 = arith.constant 1.000000e+00 : f32
    %23 = vector.broadcast %cst_12 : f32 to vector<1x256xf32>
    %24 = vector.broadcast %cst_13 : f32 to vector<1x256xf32>
    %25 = arith.select %22, %23, %24 : vector<1x256xi1>, vector<1x256xf32>
    %cst_14 = arith.constant 5.000000e-01 : f32
    %cst_15 = arith.constant 0.000000e+00 : f32
    %26 = vector.broadcast %cst_14 : f32 to vector<1x256xf32>
    %27 = vector.broadcast %cst_15 : f32 to vector<1x256xf32>
    %28 = arith.select %22, %26, %27 : vector<1x256xi1>, vector<1x256xf32>
    %cst_16 = arith.constant 0.000000e+00 : f32
    %29 = vector.broadcast %cst_16 : f32 to vector<2x64xf32>
    %cst_17 = arith.constant 0.000000e+00 : f32
    %30 = vector.broadcast %cst_17 : f32 to vector<2x64xf32>
    %31 = vector.extract_strided_slice %14 {offsets = [0, 0, 0], sizes = [2, 1, 256], strides = [1, 1, 1]} : vector<2x8x256xf32> to vector<2x1x256xf32>
    %32 = vector.shape_cast %31 : vector<2x1x256xf32> to vector<2x256xf32>
    %33 = vector.extract_strided_slice %14 {offsets = [0, 7, 0], sizes = [2, 1, 256], strides = [1, 1, 1]} : vector<2x8x256xf32> to vector<2x1x256xf32>
    %34 = vector.shape_cast %33 : vector<2x1x256xf32> to vector<2x256xf32>
    %35 = vector.shape_cast %20 : vector<1x256xi1> to vector<1x256xi1>
    %36 = vector.broadcast %35 : vector<1x256xi1> to vector<2x256xi1>
    %37 = arith.select %36, %32, %34 : vector<2x256xi1>, vector<2x256xf32>
    %cst_18 = arith.constant dense<0.000000e+00> : vector<2x256xf32>
    %38 = tpu.matmul %29, %15, %cst_18 {dimension_numbers = #tpu.dot_dimension_numbers<[1], [0], [0], [1], [0, 0, 1, 1], [], []>} : vector<2x64xf32>, vector<64x256xf32>, vector<2x256xf32> -> vector<2x256xf32>
    %39 = arith.addf %37, %38 : vector<2x256xf32>
    %40 = math.tanh %39 : vector<2x256xf32>
    %41 = vector.broadcast %25 : vector<1x256xf32> to vector<2x256xf32>
    %42 = arith.mulf %40, %41 : vector<2x256xf32>
    %43 = vector.broadcast %28 : vector<1x256xf32> to vector<2x256xf32>
    %44 = arith.addf %42, %43 : vector<2x256xf32>
    %45 = vector.extract_strided_slice %44 {offsets = [0, 0], sizes = [2, 64], strides = [1, 1]} : vector<2x256xf32> to vector<2x64xf32>
    %46 = vector.extract_strided_slice %44 {offsets = [0, 64], sizes = [2, 64], strides = [1, 1]} : vector<2x256xf32> to vector<2x64xf32>
    %47 = vector.extract_strided_slice %44 {offsets = [0, 128], sizes = [2, 64], strides = [1, 1]} : vector<2x256xf32> to vector<2x64xf32>
    %48 = vector.extract_strided_slice %44 {offsets = [0, 192], sizes = [2, 64], strides = [1, 1]} : vector<2x256xf32> to vector<2x64xf32>
    %49 = arith.mulf %46, %30 : vector<2x64xf32>
    %50 = arith.mulf %45, %48 : vector<2x64xf32>
    %51 = arith.addf %49, %50 : vector<2x64xf32>
    %52 = math.tanh %51 : vector<2x64xf32>
    %53 = arith.mulf %47, %52 : vector<2x64xf32>
    %54 = vector.extract_strided_slice %14 {offsets = [0, 1, 0], sizes = [2, 1, 256], strides = [1, 1, 1]} : vector<2x8x256xf32> to vector<2x1x256xf32>
    %55 = vector.shape_cast %54 : vector<2x1x256xf32> to vector<2x256xf32>
    %56 = vector.extract_strided_slice %14 {offsets = [0, 6, 0], sizes = [2, 1, 256], strides = [1, 1, 1]} : vector<2x8x256xf32> to vector<2x1x256xf32>
    %57 = vector.shape_cast %56 : vector<2x1x256xf32> to vector<2x256xf32>
    %58 = vector.shape_cast %20 : vector<1x256xi1> to vector<1x256xi1>
    %59 = vector.broadcast %58 : vector<1x256xi1> to vector<2x256xi1>
    %60 = arith.select %59, %55, %57 : vector<2x256xi1>, vector<2x256xf32>
    %cst_19 = arith.constant dense<0.000000e+00> : vector<2x256xf32>
    %61 = tpu.matmul %53, %15, %cst_19 {dimension_numbers = #tpu.dot_dimension_numbers<[1], [0], [0], [1], [0, 0, 1, 1], [], []>} : vector<2x64xf32>, vector<64x256xf32>, vector<2x256xf32> -> vector<2x256xf32>
    %62 = arith.addf %60, %61 : vector<2x256xf32>
    %63 = math.tanh %62 : vector<2x256xf32>
    %64 = vector.broadcast %25 : vector<1x256xf32> to vector<2x256xf32>
    %65 = arith.mulf %63, %64 : vector<2x256xf32>
    %66 = vector.broadcast %28 : vector<1x256xf32> to vector<2x256xf32>
    %67 = arith.addf %65, %66 : vector<2x256xf32>
    %68 = vector.extract_strided_slice %67 {offsets = [0, 0], sizes = [2, 64], strides = [1, 1]} : vector<2x256xf32> to vector<2x64xf32>
    %69 = vector.extract_strided_slice %67 {offsets = [0, 64], sizes = [2, 64], strides = [1, 1]} : vector<2x256xf32> to vector<2x64xf32>
    %70 = vector.extract_strided_slice %67 {offsets = [0, 128], sizes = [2, 64], strides = [1, 1]} : vector<2x256xf32> to vector<2x64xf32>
    %71 = vector.extract_strided_slice %67 {offsets = [0, 192], sizes = [2, 64], strides = [1, 1]} : vector<2x256xf32> to vector<2x64xf32>
    %72 = arith.mulf %69, %51 : vector<2x64xf32>
    %73 = arith.mulf %68, %71 : vector<2x64xf32>
    %74 = arith.addf %72, %73 : vector<2x64xf32>
    %75 = math.tanh %74 : vector<2x64xf32>
    %76 = arith.mulf %70, %75 : vector<2x64xf32>
    %77 = vector.extract_strided_slice %14 {offsets = [0, 2, 0], sizes = [2, 1, 256], strides = [1, 1, 1]} : vector<2x8x256xf32> to vector<2x1x256xf32>
    %78 = vector.shape_cast %77 : vector<2x1x256xf32> to vector<2x256xf32>
    %79 = vector.extract_strided_slice %14 {offsets = [0, 5, 0], sizes = [2, 1, 256], strides = [1, 1, 1]} : vector<2x8x256xf32> to vector<2x1x256xf32>
    %80 = vector.shape_cast %79 : vector<2x1x256xf32> to vector<2x256xf32>
    %81 = vector.shape_cast %20 : vector<1x256xi1> to vector<1x256xi1>
    %82 = vector.broadcast %81 : vector<1x256xi1> to vector<2x256xi1>
    %83 = arith.select %82, %78, %80 : vector<2x256xi1>, vector<2x256xf32>
    %cst_20 = arith.constant dense<0.000000e+00> : vector<2x256xf32>
    %84 = tpu.matmul %76, %15, %cst_20 {dimension_numbers = #tpu.dot_dimension_numbers<[1], [0], [0], [1], [0, 0, 1, 1], [], []>} : vector<2x64xf32>, vector<64x256xf32>, vector<2x256xf32> -> vector<2x256xf32>
    %85 = arith.addf %83, %84 : vector<2x256xf32>
    %86 = math.tanh %85 : vector<2x256xf32>
    %87 = vector.broadcast %25 : vector<1x256xf32> to vector<2x256xf32>
    %88 = arith.mulf %86, %87 : vector<2x256xf32>
    %89 = vector.broadcast %28 : vector<1x256xf32> to vector<2x256xf32>
    %90 = arith.addf %88, %89 : vector<2x256xf32>
    %91 = vector.extract_strided_slice %90 {offsets = [0, 0], sizes = [2, 64], strides = [1, 1]} : vector<2x256xf32> to vector<2x64xf32>
    %92 = vector.extract_strided_slice %90 {offsets = [0, 64], sizes = [2, 64], strides = [1, 1]} : vector<2x256xf32> to vector<2x64xf32>
    %93 = vector.extract_strided_slice %90 {offsets = [0, 128], sizes = [2, 64], strides = [1, 1]} : vector<2x256xf32> to vector<2x64xf32>
    %94 = vector.extract_strided_slice %90 {offsets = [0, 192], sizes = [2, 64], strides = [1, 1]} : vector<2x256xf32> to vector<2x64xf32>
    %95 = arith.mulf %92, %74 : vector<2x64xf32>
    %96 = arith.mulf %91, %94 : vector<2x64xf32>
    %97 = arith.addf %95, %96 : vector<2x64xf32>
    %98 = math.tanh %97 : vector<2x64xf32>
    %99 = arith.mulf %93, %98 : vector<2x64xf32>
    %100 = vector.extract_strided_slice %14 {offsets = [0, 3, 0], sizes = [2, 1, 256], strides = [1, 1, 1]} : vector<2x8x256xf32> to vector<2x1x256xf32>
    %101 = vector.shape_cast %100 : vector<2x1x256xf32> to vector<2x256xf32>
    %102 = vector.extract_strided_slice %14 {offsets = [0, 4, 0], sizes = [2, 1, 256], strides = [1, 1, 1]} : vector<2x8x256xf32> to vector<2x1x256xf32>
    %103 = vector.shape_cast %102 : vector<2x1x256xf32> to vector<2x256xf32>
    %104 = vector.shape_cast %20 : vector<1x256xi1> to vector<1x256xi1>
    %105 = vector.broadcast %104 : vector<1x256xi1> to vector<2x256xi1>
    %106 = arith.select %105, %101, %103 : vector<2x256xi1>, vector<2x256xf32>
    %cst_21 = arith.constant dense<0.000000e+00> : vector<2x256xf32>
    %107 = tpu.matmul %99, %15, %cst_21 {dimension_numbers = #tpu.dot_dimension_numbers<[1], [0], [0], [1], [0, 0, 1, 1], [], []>} : vector<2x64xf32>, vector<64x256xf32>, vector<2x256xf32> -> vector<2x256xf32>
    %108 = arith.addf %106, %107 : vector<2x256xf32>
    %109 = math.tanh %108 : vector<2x256xf32>
    %110 = vector.broadcast %25 : vector<1x256xf32> to vector<2x256xf32>
    %111 = arith.mulf %109, %110 : vector<2x256xf32>
    %112 = vector.broadcast %28 : vector<1x256xf32> to vector<2x256xf32>
    %113 = arith.addf %111, %112 : vector<2x256xf32>
    %114 = vector.extract_strided_slice %113 {offsets = [0, 0], sizes = [2, 64], strides = [1, 1]} : vector<2x256xf32> to vector<2x64xf32>
    %115 = vector.extract_strided_slice %113 {offsets = [0, 64], sizes = [2, 64], strides = [1, 1]} : vector<2x256xf32> to vector<2x64xf32>
    %116 = vector.extract_strided_slice %113 {offsets = [0, 128], sizes = [2, 64], strides = [1, 1]} : vector<2x256xf32> to vector<2x64xf32>
    %117 = vector.extract_strided_slice %113 {offsets = [0, 192], sizes = [2, 64], strides = [1, 1]} : vector<2x256xf32> to vector<2x64xf32>
    %118 = arith.mulf %115, %97 : vector<2x64xf32>
    %119 = arith.mulf %114, %117 : vector<2x64xf32>
    %120 = arith.addf %118, %119 : vector<2x64xf32>
    %121 = math.tanh %120 : vector<2x64xf32>
    %122 = arith.mulf %116, %121 : vector<2x64xf32>
    %123 = vector.extract_strided_slice %14 {offsets = [0, 4, 0], sizes = [2, 1, 256], strides = [1, 1, 1]} : vector<2x8x256xf32> to vector<2x1x256xf32>
    %124 = vector.shape_cast %123 : vector<2x1x256xf32> to vector<2x256xf32>
    %125 = vector.extract_strided_slice %14 {offsets = [0, 3, 0], sizes = [2, 1, 256], strides = [1, 1, 1]} : vector<2x8x256xf32> to vector<2x1x256xf32>
    %126 = vector.shape_cast %125 : vector<2x1x256xf32> to vector<2x256xf32>
    %127 = vector.shape_cast %20 : vector<1x256xi1> to vector<1x256xi1>
    %128 = vector.broadcast %127 : vector<1x256xi1> to vector<2x256xi1>
    %129 = arith.select %128, %124, %126 : vector<2x256xi1>, vector<2x256xf32>
    %cst_22 = arith.constant dense<0.000000e+00> : vector<2x256xf32>
    %130 = tpu.matmul %122, %15, %cst_22 {dimension_numbers = #tpu.dot_dimension_numbers<[1], [0], [0], [1], [0, 0, 1, 1], [], []>} : vector<2x64xf32>, vector<64x256xf32>, vector<2x256xf32> -> vector<2x256xf32>
    %131 = arith.addf %129, %130 : vector<2x256xf32>
    %132 = math.tanh %131 : vector<2x256xf32>
    %133 = vector.broadcast %25 : vector<1x256xf32> to vector<2x256xf32>
    %134 = arith.mulf %132, %133 : vector<2x256xf32>
    %135 = vector.broadcast %28 : vector<1x256xf32> to vector<2x256xf32>
    %136 = arith.addf %134, %135 : vector<2x256xf32>
    %137 = vector.extract_strided_slice %136 {offsets = [0, 0], sizes = [2, 64], strides = [1, 1]} : vector<2x256xf32> to vector<2x64xf32>
    %138 = vector.extract_strided_slice %136 {offsets = [0, 64], sizes = [2, 64], strides = [1, 1]} : vector<2x256xf32> to vector<2x64xf32>
    %139 = vector.extract_strided_slice %136 {offsets = [0, 128], sizes = [2, 64], strides = [1, 1]} : vector<2x256xf32> to vector<2x64xf32>
    %140 = vector.extract_strided_slice %136 {offsets = [0, 192], sizes = [2, 64], strides = [1, 1]} : vector<2x256xf32> to vector<2x64xf32>
    %141 = arith.mulf %138, %120 : vector<2x64xf32>
    %142 = arith.mulf %137, %140 : vector<2x64xf32>
    %143 = arith.addf %141, %142 : vector<2x64xf32>
    %144 = math.tanh %143 : vector<2x64xf32>
    %145 = arith.mulf %139, %144 : vector<2x64xf32>
    %146 = vector.extract_strided_slice %14 {offsets = [0, 5, 0], sizes = [2, 1, 256], strides = [1, 1, 1]} : vector<2x8x256xf32> to vector<2x1x256xf32>
    %147 = vector.shape_cast %146 : vector<2x1x256xf32> to vector<2x256xf32>
    %148 = vector.extract_strided_slice %14 {offsets = [0, 2, 0], sizes = [2, 1, 256], strides = [1, 1, 1]} : vector<2x8x256xf32> to vector<2x1x256xf32>
    %149 = vector.shape_cast %148 : vector<2x1x256xf32> to vector<2x256xf32>
    %150 = vector.shape_cast %20 : vector<1x256xi1> to vector<1x256xi1>
    %151 = vector.broadcast %150 : vector<1x256xi1> to vector<2x256xi1>
    %152 = arith.select %151, %147, %149 : vector<2x256xi1>, vector<2x256xf32>
    %cst_23 = arith.constant dense<0.000000e+00> : vector<2x256xf32>
    %153 = tpu.matmul %145, %15, %cst_23 {dimension_numbers = #tpu.dot_dimension_numbers<[1], [0], [0], [1], [0, 0, 1, 1], [], []>} : vector<2x64xf32>, vector<64x256xf32>, vector<2x256xf32> -> vector<2x256xf32>
    %154 = arith.addf %152, %153 : vector<2x256xf32>
    %155 = math.tanh %154 : vector<2x256xf32>
    %156 = vector.broadcast %25 : vector<1x256xf32> to vector<2x256xf32>
    %157 = arith.mulf %155, %156 : vector<2x256xf32>
    %158 = vector.broadcast %28 : vector<1x256xf32> to vector<2x256xf32>
    %159 = arith.addf %157, %158 : vector<2x256xf32>
    %160 = vector.extract_strided_slice %159 {offsets = [0, 0], sizes = [2, 64], strides = [1, 1]} : vector<2x256xf32> to vector<2x64xf32>
    %161 = vector.extract_strided_slice %159 {offsets = [0, 64], sizes = [2, 64], strides = [1, 1]} : vector<2x256xf32> to vector<2x64xf32>
    %162 = vector.extract_strided_slice %159 {offsets = [0, 128], sizes = [2, 64], strides = [1, 1]} : vector<2x256xf32> to vector<2x64xf32>
    %163 = vector.extract_strided_slice %159 {offsets = [0, 192], sizes = [2, 64], strides = [1, 1]} : vector<2x256xf32> to vector<2x64xf32>
    %164 = arith.mulf %161, %143 : vector<2x64xf32>
    %165 = arith.mulf %160, %163 : vector<2x64xf32>
    %166 = arith.addf %164, %165 : vector<2x64xf32>
    %167 = math.tanh %166 : vector<2x64xf32>
    %168 = arith.mulf %162, %167 : vector<2x64xf32>
    %169 = vector.extract_strided_slice %14 {offsets = [0, 6, 0], sizes = [2, 1, 256], strides = [1, 1, 1]} : vector<2x8x256xf32> to vector<2x1x256xf32>
    %170 = vector.shape_cast %169 : vector<2x1x256xf32> to vector<2x256xf32>
    %171 = vector.extract_strided_slice %14 {offsets = [0, 1, 0], sizes = [2, 1, 256], strides = [1, 1, 1]} : vector<2x8x256xf32> to vector<2x1x256xf32>
    %172 = vector.shape_cast %171 : vector<2x1x256xf32> to vector<2x256xf32>
    %173 = vector.shape_cast %20 : vector<1x256xi1> to vector<1x256xi1>
    %174 = vector.broadcast %173 : vector<1x256xi1> to vector<2x256xi1>
    %175 = arith.select %174, %170, %172 : vector<2x256xi1>, vector<2x256xf32>
    %cst_24 = arith.constant dense<0.000000e+00> : vector<2x256xf32>
    %176 = tpu.matmul %168, %15, %cst_24 {dimension_numbers = #tpu.dot_dimension_numbers<[1], [0], [0], [1], [0, 0, 1, 1], [], []>} : vector<2x64xf32>, vector<64x256xf32>, vector<2x256xf32> -> vector<2x256xf32>
    %177 = arith.addf %175, %176 : vector<2x256xf32>
    %178 = math.tanh %177 : vector<2x256xf32>
    %179 = vector.broadcast %25 : vector<1x256xf32> to vector<2x256xf32>
    %180 = arith.mulf %178, %179 : vector<2x256xf32>
    %181 = vector.broadcast %28 : vector<1x256xf32> to vector<2x256xf32>
    %182 = arith.addf %180, %181 : vector<2x256xf32>
    %183 = vector.extract_strided_slice %182 {offsets = [0, 0], sizes = [2, 64], strides = [1, 1]} : vector<2x256xf32> to vector<2x64xf32>
    %184 = vector.extract_strided_slice %182 {offsets = [0, 64], sizes = [2, 64], strides = [1, 1]} : vector<2x256xf32> to vector<2x64xf32>
    %185 = vector.extract_strided_slice %182 {offsets = [0, 128], sizes = [2, 64], strides = [1, 1]} : vector<2x256xf32> to vector<2x64xf32>
    %186 = vector.extract_strided_slice %182 {offsets = [0, 192], sizes = [2, 64], strides = [1, 1]} : vector<2x256xf32> to vector<2x64xf32>
    %187 = arith.mulf %184, %166 : vector<2x64xf32>
    %188 = arith.mulf %183, %186 : vector<2x64xf32>
    %189 = arith.addf %187, %188 : vector<2x64xf32>
    %190 = math.tanh %189 : vector<2x64xf32>
    %191 = arith.mulf %185, %190 : vector<2x64xf32>
    %192 = vector.extract_strided_slice %14 {offsets = [0, 7, 0], sizes = [2, 1, 256], strides = [1, 1, 1]} : vector<2x8x256xf32> to vector<2x1x256xf32>
    %193 = vector.shape_cast %192 : vector<2x1x256xf32> to vector<2x256xf32>
    %194 = vector.extract_strided_slice %14 {offsets = [0, 0, 0], sizes = [2, 1, 256], strides = [1, 1, 1]} : vector<2x8x256xf32> to vector<2x1x256xf32>
    %195 = vector.shape_cast %194 : vector<2x1x256xf32> to vector<2x256xf32>
    %196 = vector.shape_cast %20 : vector<1x256xi1> to vector<1x256xi1>
    %197 = vector.broadcast %196 : vector<1x256xi1> to vector<2x256xi1>
    %198 = arith.select %197, %193, %195 : vector<2x256xi1>, vector<2x256xf32>
    %cst_25 = arith.constant dense<0.000000e+00> : vector<2x256xf32>
    %199 = tpu.matmul %191, %15, %cst_25 {dimension_numbers = #tpu.dot_dimension_numbers<[1], [0], [0], [1], [0, 0, 1, 1], [], []>} : vector<2x64xf32>, vector<64x256xf32>, vector<2x256xf32> -> vector<2x256xf32>
    %200 = arith.addf %198, %199 : vector<2x256xf32>
    %201 = math.tanh %200 : vector<2x256xf32>
    %202 = vector.broadcast %25 : vector<1x256xf32> to vector<2x256xf32>
    %203 = arith.mulf %201, %202 : vector<2x256xf32>
    %204 = vector.broadcast %28 : vector<1x256xf32> to vector<2x256xf32>
    %205 = arith.addf %203, %204 : vector<2x256xf32>
    %206 = vector.extract_strided_slice %205 {offsets = [0, 0], sizes = [2, 64], strides = [1, 1]} : vector<2x256xf32> to vector<2x64xf32>
    %207 = vector.extract_strided_slice %205 {offsets = [0, 64], sizes = [2, 64], strides = [1, 1]} : vector<2x256xf32> to vector<2x64xf32>
    %208 = vector.extract_strided_slice %205 {offsets = [0, 128], sizes = [2, 64], strides = [1, 1]} : vector<2x256xf32> to vector<2x64xf32>
    %209 = vector.extract_strided_slice %205 {offsets = [0, 192], sizes = [2, 64], strides = [1, 1]} : vector<2x256xf32> to vector<2x64xf32>
    %210 = arith.mulf %207, %189 : vector<2x64xf32>
    %211 = arith.mulf %206, %209 : vector<2x64xf32>
    %212 = arith.addf %210, %211 : vector<2x64xf32>
    %213 = math.tanh %212 : vector<2x64xf32>
    %214 = arith.mulf %208, %213 : vector<2x64xf32>
    %215 = vector.extract_strided_slice %53 {offsets = [0, 0], sizes = [2, 32], strides = [1, 1]} : vector<2x64xf32> to vector<2x32xf32>
    %216 = vector.extract_strided_slice %214 {offsets = [0, 32], sizes = [2, 32], strides = [1, 1]} : vector<2x64xf32> to vector<2x32xf32>
    %217 = tpu.concatenate %215, %216 in 1 : vector<2x32xf32>, vector<2x32xf32> -> vector<2x64xf32>
    %218 = vector.extract_strided_slice %76 {offsets = [0, 0], sizes = [2, 32], strides = [1, 1]} : vector<2x64xf32> to vector<2x32xf32>
    %219 = vector.extract_strided_slice %191 {offsets = [0, 32], sizes = [2, 32], strides = [1, 1]} : vector<2x64xf32> to vector<2x32xf32>
    %220 = tpu.concatenate %218, %219 in 1 : vector<2x32xf32>, vector<2x32xf32> -> vector<2x64xf32>
    %221 = vector.extract_strided_slice %99 {offsets = [0, 0], sizes = [2, 32], strides = [1, 1]} : vector<2x64xf32> to vector<2x32xf32>
    %222 = vector.extract_strided_slice %168 {offsets = [0, 32], sizes = [2, 32], strides = [1, 1]} : vector<2x64xf32> to vector<2x32xf32>
    %223 = tpu.concatenate %221, %222 in 1 : vector<2x32xf32>, vector<2x32xf32> -> vector<2x64xf32>
    %224 = vector.extract_strided_slice %122 {offsets = [0, 0], sizes = [2, 32], strides = [1, 1]} : vector<2x64xf32> to vector<2x32xf32>
    %225 = vector.extract_strided_slice %145 {offsets = [0, 32], sizes = [2, 32], strides = [1, 1]} : vector<2x64xf32> to vector<2x32xf32>
    %226 = tpu.concatenate %224, %225 in 1 : vector<2x32xf32>, vector<2x32xf32> -> vector<2x64xf32>
    %227 = vector.extract_strided_slice %145 {offsets = [0, 0], sizes = [2, 32], strides = [1, 1]} : vector<2x64xf32> to vector<2x32xf32>
    %228 = vector.extract_strided_slice %122 {offsets = [0, 32], sizes = [2, 32], strides = [1, 1]} : vector<2x64xf32> to vector<2x32xf32>
    %229 = tpu.concatenate %227, %228 in 1 : vector<2x32xf32>, vector<2x32xf32> -> vector<2x64xf32>
    %230 = vector.extract_strided_slice %168 {offsets = [0, 0], sizes = [2, 32], strides = [1, 1]} : vector<2x64xf32> to vector<2x32xf32>
    %231 = vector.extract_strided_slice %99 {offsets = [0, 32], sizes = [2, 32], strides = [1, 1]} : vector<2x64xf32> to vector<2x32xf32>
    %232 = tpu.concatenate %230, %231 in 1 : vector<2x32xf32>, vector<2x32xf32> -> vector<2x64xf32>
    %233 = vector.extract_strided_slice %191 {offsets = [0, 0], sizes = [2, 32], strides = [1, 1]} : vector<2x64xf32> to vector<2x32xf32>
    %234 = vector.extract_strided_slice %76 {offsets = [0, 32], sizes = [2, 32], strides = [1, 1]} : vector<2x64xf32> to vector<2x32xf32>
    %235 = tpu.concatenate %233, %234 in 1 : vector<2x32xf32>, vector<2x32xf32> -> vector<2x64xf32>
    %236 = vector.extract_strided_slice %214 {offsets = [0, 0], sizes = [2, 32], strides = [1, 1]} : vector<2x64xf32> to vector<2x32xf32>
    %237 = vector.extract_strided_slice %53 {offsets = [0, 32], sizes = [2, 32], strides = [1, 1]} : vector<2x64xf32> to vector<2x32xf32>
    %238 = tpu.concatenate %236, %237 in 1 : vector<2x32xf32>, vector<2x32xf32> -> vector<2x64xf32>
    %239 = vector.shape_cast %217 : vector<2x64xf32> to vector<2x1x64xf32>
    %240 = vector.shape_cast %220 : vector<2x64xf32> to vector<2x1x64xf32>
    %241 = vector.shape_cast %223 : vector<2x64xf32> to vector<2x1x64xf32>
    %242 = vector.shape_cast %226 : vector<2x64xf32> to vector<2x1x64xf32>
    %243 = vector.shape_cast %229 : vector<2x64xf32> to vector<2x1x64xf32>
    %244 = vector.shape_cast %232 : vector<2x64xf32> to vector<2x1x64xf32>
    %245 = vector.shape_cast %235 : vector<2x64xf32> to vector<2x1x64xf32>
    %246 = vector.shape_cast %238 : vector<2x64xf32> to vector<2x1x64xf32>
    %247 = tpu.concatenate %239, %240, %241, %242, %243, %244, %245, %246 in 1 : vector<2x1x64xf32>, vector<2x1x64xf32>, vector<2x1x64xf32>, vector<2x1x64xf32>, vector<2x1x64xf32>, vector<2x1x64xf32>, vector<2x1x64xf32>, vector<2x1x64xf32> -> vector<2x8x64xf32>
    %248 = vector.shape_cast %247 : vector<2x8x64xf32> to vector<16x64xf32>
    %c0_26 = arith.constant 0 : index
    %c0_27 = arith.constant 0 : index
    %c0_28 = arith.constant 0 : index
    %249 = vector.load %arg2[%c0_26, %c0_27, %c0_28] : memref<2x8x16xf32, #tpu.memory_space<vmem>>, vector<2x8x16xf32>
    %c0_29 = arith.constant 0 : index
    %c0_30 = arith.constant 0 : index
    %250 = vector.load %arg8[%c0_29, %c0_30] : memref<48x64xf32, #tpu.memory_space<vmem>>, vector<48x64xf32>
    %c0_31 = arith.constant 0 : index
    %c0_32 = arith.constant 0 : index
    %251 = vector.load %arg9[%c0_31, %c0_32] : memref<1x64xf32, #tpu.memory_space<vmem>>, vector<1x64xf32>
    %cst_33 = arith.constant 0.000000e+00 : f32
    %252 = vector.broadcast %cst_33 : f32 to vector<2x1x16xf32>
    %253 = vector.extract_strided_slice %249 {offsets = [0, 0, 0], sizes = [2, 7, 16], strides = [1, 1, 1]} : vector<2x8x16xf32> to vector<2x7x16xf32>
    %254 = tpu.concatenate %252, %253 in 1 : vector<2x1x16xf32>, vector<2x7x16xf32> -> vector<2x8x16xf32>
    %255 = vector.shape_cast %254 : vector<2x8x16xf32> to vector<16x16xf32>
    %256 = vector.extract_strided_slice %249 {offsets = [0, 1, 0], sizes = [2, 7, 16], strides = [1, 1, 1]} : vector<2x8x16xf32> to vector<2x7x16xf32>
    %257 = tpu.concatenate %256, %252 in 1 : vector<2x7x16xf32>, vector<2x1x16xf32> -> vector<2x8x16xf32>
    %258 = vector.shape_cast %257 : vector<2x8x16xf32> to vector<16x16xf32>
    %259 = vector.shape_cast %249 : vector<2x8x16xf32> to vector<16x16xf32>
    %260 = vector.extract_strided_slice %250 {offsets = [0, 0], sizes = [16, 64], strides = [1, 1]} : vector<48x64xf32> to vector<16x64xf32>
    %cst_34 = arith.constant dense<0.000000e+00> : vector<16x64xf32>
    %261 = tpu.matmul %255, %260, %cst_34 {dimension_numbers = #tpu.dot_dimension_numbers<[1], [0], [0], [1], [0, 0, 1, 1], [], []>} : vector<16x16xf32>, vector<16x64xf32>, vector<16x64xf32> -> vector<16x64xf32>
    %262 = vector.extract_strided_slice %250 {offsets = [16, 0], sizes = [16, 64], strides = [1, 1]} : vector<48x64xf32> to vector<16x64xf32>
    %cst_35 = arith.constant dense<0.000000e+00> : vector<16x64xf32>
    %263 = tpu.matmul %259, %262, %cst_35 {dimension_numbers = #tpu.dot_dimension_numbers<[1], [0], [0], [1], [0, 0, 1, 1], [], []>} : vector<16x16xf32>, vector<16x64xf32>, vector<16x64xf32> -> vector<16x64xf32>
    %264 = arith.addf %261, %263 : vector<16x64xf32>
    %265 = vector.extract_strided_slice %250 {offsets = [32, 0], sizes = [16, 64], strides = [1, 1]} : vector<48x64xf32> to vector<16x64xf32>
    %cst_36 = arith.constant dense<0.000000e+00> : vector<16x64xf32>
    %266 = tpu.matmul %258, %265, %cst_36 {dimension_numbers = #tpu.dot_dimension_numbers<[1], [0], [0], [1], [0, 0, 1, 1], [], []>} : vector<16x16xf32>, vector<16x64xf32>, vector<16x64xf32> -> vector<16x64xf32>
    %267 = arith.addf %264, %266 : vector<16x64xf32>
    %268 = vector.broadcast %251 : vector<1x64xf32> to vector<16x64xf32>
    %269 = arith.addf %267, %268 : vector<16x64xf32>
    %cst_37 = arith.constant 0.000000e+00 : f32
    %270 = vector.broadcast %cst_37 : f32 to vector<16x64xf32>
    %271 = arith.cmpf ogt, %269, %270 : vector<16x64xf32>
    %cst_38 = arith.constant 0.000000e+00 : f32
    %272 = vector.broadcast %cst_38 : f32 to vector<16x64xf32>
    %273 = arith.minimumf %269, %272 : vector<16x64xf32>
    %274 = math.exp %273 : vector<16x64xf32>
    %cst_39 = arith.constant 1.000000e+00 : f32
    %275 = vector.broadcast %cst_39 : f32 to vector<16x64xf32>
    %276 = arith.subf %274, %275 : vector<16x64xf32>
    %277 = arith.select %271, %269, %276 : vector<16x64xi1>, vector<16x64xf32>
    %c0_40 = arith.constant 0 : index
    %c0_41 = arith.constant 0 : index
    %c0_42 = arith.constant 0 : index
    %278 = vector.load %arg3[%c0_40, %c0_41, %c0_42] : memref<2x8x16xf32, #tpu.memory_space<vmem>>, vector<2x8x16xf32>
    %c0_43 = arith.constant 0 : index
    %c0_44 = arith.constant 0 : index
    %279 = vector.load %arg10[%c0_43, %c0_44] : memref<48x64xf32, #tpu.memory_space<vmem>>, vector<48x64xf32>
    %c0_45 = arith.constant 0 : index
    %c0_46 = arith.constant 0 : index
    %280 = vector.load %arg11[%c0_45, %c0_46] : memref<1x64xf32, #tpu.memory_space<vmem>>, vector<1x64xf32>
    %cst_47 = arith.constant 0.000000e+00 : f32
    %281 = vector.broadcast %cst_47 : f32 to vector<2x1x16xf32>
    %282 = vector.extract_strided_slice %278 {offsets = [0, 0, 0], sizes = [2, 7, 16], strides = [1, 1, 1]} : vector<2x8x16xf32> to vector<2x7x16xf32>
    %283 = tpu.concatenate %281, %282 in 1 : vector<2x1x16xf32>, vector<2x7x16xf32> -> vector<2x8x16xf32>
    %284 = vector.shape_cast %283 : vector<2x8x16xf32> to vector<16x16xf32>
    %285 = vector.extract_strided_slice %278 {offsets = [0, 1, 0], sizes = [2, 7, 16], strides = [1, 1, 1]} : vector<2x8x16xf32> to vector<2x7x16xf32>
    %286 = tpu.concatenate %285, %281 in 1 : vector<2x7x16xf32>, vector<2x1x16xf32> -> vector<2x8x16xf32>
    %287 = vector.shape_cast %286 : vector<2x8x16xf32> to vector<16x16xf32>
    %288 = vector.shape_cast %278 : vector<2x8x16xf32> to vector<16x16xf32>
    %289 = vector.extract_strided_slice %279 {offsets = [0, 0], sizes = [16, 64], strides = [1, 1]} : vector<48x64xf32> to vector<16x64xf32>
    %cst_48 = arith.constant dense<0.000000e+00> : vector<16x64xf32>
    %290 = tpu.matmul %284, %289, %cst_48 {dimension_numbers = #tpu.dot_dimension_numbers<[1], [0], [0], [1], [0, 0, 1, 1], [], []>} : vector<16x16xf32>, vector<16x64xf32>, vector<16x64xf32> -> vector<16x64xf32>
    %291 = vector.extract_strided_slice %279 {offsets = [16, 0], sizes = [16, 64], strides = [1, 1]} : vector<48x64xf32> to vector<16x64xf32>
    %cst_49 = arith.constant dense<0.000000e+00> : vector<16x64xf32>
    %292 = tpu.matmul %288, %291, %cst_49 {dimension_numbers = #tpu.dot_dimension_numbers<[1], [0], [0], [1], [0, 0, 1, 1], [], []>} : vector<16x16xf32>, vector<16x64xf32>, vector<16x64xf32> -> vector<16x64xf32>
    %293 = arith.addf %290, %292 : vector<16x64xf32>
    %294 = vector.extract_strided_slice %279 {offsets = [32, 0], sizes = [16, 64], strides = [1, 1]} : vector<48x64xf32> to vector<16x64xf32>
    %cst_50 = arith.constant dense<0.000000e+00> : vector<16x64xf32>
    %295 = tpu.matmul %287, %294, %cst_50 {dimension_numbers = #tpu.dot_dimension_numbers<[1], [0], [0], [1], [0, 0, 1, 1], [], []>} : vector<16x16xf32>, vector<16x64xf32>, vector<16x64xf32> -> vector<16x64xf32>
    %296 = arith.addf %293, %295 : vector<16x64xf32>
    %297 = vector.broadcast %280 : vector<1x64xf32> to vector<16x64xf32>
    %298 = arith.addf %296, %297 : vector<16x64xf32>
    %cst_51 = arith.constant 0.000000e+00 : f32
    %299 = vector.broadcast %cst_51 : f32 to vector<16x64xf32>
    %300 = arith.cmpf ogt, %298, %299 : vector<16x64xf32>
    %cst_52 = arith.constant 0.000000e+00 : f32
    %301 = vector.broadcast %cst_52 : f32 to vector<16x64xf32>
    %302 = arith.minimumf %298, %301 : vector<16x64xf32>
    %303 = math.exp %302 : vector<16x64xf32>
    %cst_53 = arith.constant 1.000000e+00 : f32
    %304 = vector.broadcast %cst_53 : f32 to vector<16x64xf32>
    %305 = arith.subf %303, %304 : vector<16x64xf32>
    %306 = arith.select %300, %298, %305 : vector<16x64xi1>, vector<16x64xf32>
    %c0_54 = arith.constant 0 : index
    %c0_55 = arith.constant 0 : index
    %307 = vector.load %arg12[%c0_54, %c0_55] : memref<128x64xf32, #tpu.memory_space<vmem>>, vector<128x64xf32>
    %308 = vector.extract_strided_slice %307 {offsets = [0, 0], sizes = [64, 64], strides = [1, 1]} : vector<128x64xf32> to vector<64x64xf32>
    %cst_56 = arith.constant dense<0.000000e+00> : vector<16x64xf32>
    %309 = tpu.matmul %277, %308, %cst_56 {dimension_numbers = #tpu.dot_dimension_numbers<[1], [0], [0], [1], [0, 0, 1, 1], [], []>} : vector<16x64xf32>, vector<64x64xf32>, vector<16x64xf32> -> vector<16x64xf32>
    %310 = vector.extract_strided_slice %307 {offsets = [64, 0], sizes = [64, 64], strides = [1, 1]} : vector<128x64xf32> to vector<64x64xf32>
    %cst_57 = arith.constant dense<0.000000e+00> : vector<16x64xf32>
    %311 = tpu.matmul %306, %310, %cst_57 {dimension_numbers = #tpu.dot_dimension_numbers<[1], [0], [0], [1], [0, 0, 1, 1], [], []>} : vector<16x64xf32>, vector<64x64xf32>, vector<16x64xf32> -> vector<16x64xf32>
    %312 = arith.addf %309, %311 : vector<16x64xf32>
    %c0_58 = arith.constant 0 : index
    %c0_59 = arith.constant 0 : index
    %313 = vector.load %arg13[%c0_58, %c0_59] : memref<1x64xf32, #tpu.memory_space<vmem>>, vector<1x64xf32>
    %314 = vector.broadcast %313 : vector<1x64xf32> to vector<16x64xf32>
    %315 = arith.addf %312, %314 : vector<16x64xf32>
    %cst_60 = arith.constant 0.000000e+00 : f32
    %316 = vector.broadcast %cst_60 : f32 to vector<16x64xf32>
    %317 = arith.cmpf ogt, %315, %316 : vector<16x64xf32>
    %cst_61 = arith.constant 0.000000e+00 : f32
    %318 = vector.broadcast %cst_61 : f32 to vector<16x64xf32>
    %319 = arith.minimumf %315, %318 : vector<16x64xf32>
    %320 = math.exp %319 : vector<16x64xf32>
    %cst_62 = arith.constant 1.000000e+00 : f32
    %321 = vector.broadcast %cst_62 : f32 to vector<16x64xf32>
    %322 = arith.subf %320, %321 : vector<16x64xf32>
    %323 = arith.select %317, %315, %322 : vector<16x64xi1>, vector<16x64xf32>
    %cst_63 = arith.constant dense<0.000000e+00> : vector<16x16xf32>
    %324 = tpu.matmul %323, %248, %cst_63 {dimension_numbers = #tpu.dot_dimension_numbers<[1], [1], [0], [0], [0, 0, 1, 0], [], []>} : vector<16x64xf32>, vector<16x64xf32>, vector<16x16xf32> -> vector<16x16xf32>
    %c0_64 = arith.constant 0 : index
    %c0_65 = arith.constant 0 : index
    %325 = vector.load %arg1[%c0_64, %c0_65] : memref<16x16xf32, #tpu.memory_space<vmem>>, vector<16x16xf32>
    %326 = arith.addf %324, %325 : vector<16x16xf32>
    %cst_66 = arith.constant dense<0xFF800000> : vector<16xf32>
    %327 = vector.multi_reduction <maximumf>, %326, %cst_66 [1] : vector<16x16xf32> to vector<16xf32>
    %328 = vector.shape_cast %327 : vector<16xf32> to vector<16x1xf32>
    %329 = vector.broadcast %328 : vector<16x1xf32> to vector<16x16xf32>
    %330 = arith.subf %326, %329 : vector<16x16xf32>
    %331 = math.exp %330 : vector<16x16xf32>
    %cst_67 = arith.constant dense<0.000000e+00> : vector<16xf32>
    %332 = vector.multi_reduction <add>, %331, %cst_67 [1] : vector<16x16xf32> to vector<16xf32>
    %333 = vector.shape_cast %332 : vector<16xf32> to vector<16x1xf32>
    %cst_68 = arith.constant 1.000000e-30 : f32
    %334 = vector.broadcast %cst_68 : f32 to vector<16x1xf32>
    %335 = arith.maximumf %333, %334 : vector<16x1xf32>
    %336 = vector.broadcast %335 : vector<16x1xf32> to vector<16x16xf32>
    %337 = arith.divf %331, %336 : vector<16x16xf32>
    %cst_69 = arith.constant dense<0.000000e+00> : vector<16x64xf32>
    %338 = tpu.matmul %337, %248, %cst_69 {dimension_numbers = #tpu.dot_dimension_numbers<[1], [0], [0], [1], [0, 0, 1, 1], [], []>} : vector<16x16xf32>, vector<16x64xf32>, vector<16x64xf32> -> vector<16x64xf32>
    %339 = arith.mulf %323, %338 : vector<16x64xf32>
    %c0_70 = arith.constant 0 : index
    %c0_71 = arith.constant 0 : index
    %340 = vector.load %arg14[%c0_70, %c0_71] : memref<192x512xf32, #tpu.memory_space<vmem>>, vector<192x512xf32>
    %341 = vector.extract_strided_slice %340 {offsets = [0, 0], sizes = [64, 512], strides = [1, 1]} : vector<192x512xf32> to vector<64x512xf32>
    %cst_72 = arith.constant dense<0.000000e+00> : vector<16x512xf32>
    %342 = tpu.matmul %323, %341, %cst_72 {dimension_numbers = #tpu.dot_dimension_numbers<[1], [0], [0], [1], [0, 0, 1, 1], [], []>} : vector<16x64xf32>, vector<64x512xf32>, vector<16x512xf32> -> vector<16x512xf32>
    %343 = vector.extract_strided_slice %340 {offsets = [64, 0], sizes = [64, 512], strides = [1, 1]} : vector<192x512xf32> to vector<64x512xf32>
    %cst_73 = arith.constant dense<0.000000e+00> : vector<16x512xf32>
    %344 = tpu.matmul %338, %343, %cst_73 {dimension_numbers = #tpu.dot_dimension_numbers<[1], [0], [0], [1], [0, 0, 1, 1], [], []>} : vector<16x64xf32>, vector<64x512xf32>, vector<16x512xf32> -> vector<16x512xf32>
    %345 = arith.addf %342, %344 : vector<16x512xf32>
    %346 = vector.extract_strided_slice %340 {offsets = [128, 0], sizes = [64, 512], strides = [1, 1]} : vector<192x512xf32> to vector<64x512xf32>
    %cst_74 = arith.constant dense<0.000000e+00> : vector<16x512xf32>
    %347 = tpu.matmul %339, %346, %cst_74 {dimension_numbers = #tpu.dot_dimension_numbers<[1], [0], [0], [1], [0, 0, 1, 1], [], []>} : vector<16x64xf32>, vector<64x512xf32>, vector<16x512xf32> -> vector<16x512xf32>
    %348 = arith.addf %345, %347 : vector<16x512xf32>
    %c0_75 = arith.constant 0 : index
    %c0_76 = arith.constant 0 : index
    %349 = vector.load %arg16[%c0_75, %c0_76] : memref<1x512xf32, #tpu.memory_space<vmem>>, vector<1x512xf32>
    %350 = vector.broadcast %349 : vector<1x512xf32> to vector<16x512xf32>
    %351 = arith.addf %348, %350 : vector<16x512xf32>
    %352 = vector.shape_cast %351 : vector<16x512xf32> to vector<2x8x512xf32>
    %c0_77 = arith.constant 0 : index
    %c0_78 = arith.constant 0 : index
    %353 = vector.load %arg15[%c0_77, %c0_78] : memref<128x512xf32, #tpu.memory_space<vmem>>, vector<128x512xf32>
    %354 = tpu.iota {dimensions = array<i32: 1>} : vector<1x512xi32>
    %c64_i32 = arith.constant 64 : i32
    %355 = vector.broadcast %c64_i32 : i32 to vector<1x512xi32>
    %356 = arith.andi %354, %355 : vector<1x512xi32>
    %c0_i32_79 = arith.constant 0 : i32
    %357 = vector.broadcast %c0_i32_79 : i32 to vector<1x512xi32>
    %358 = arith.cmpi eq, %356, %357 : vector<1x512xi32>
    %c384_i32 = arith.constant 384 : i32
    %359 = vector.broadcast %c384_i32 : i32 to vector<1x512xi32>
    %360 = arith.cmpi slt, %354, %359 : vector<1x512xi32>
    %cst_80 = arith.constant 5.000000e-01 : f32
    %cst_81 = arith.constant 1.000000e+00 : f32
    %361 = vector.broadcast %cst_80 : f32 to vector<1x512xf32>
    %362 = vector.broadcast %cst_81 : f32 to vector<1x512xf32>
    %363 = arith.select %360, %361, %362 : vector<1x512xi1>, vector<1x512xf32>
    %cst_82 = arith.constant 5.000000e-01 : f32
    %cst_83 = arith.constant 0.000000e+00 : f32
    %364 = vector.broadcast %cst_82 : f32 to vector<1x512xf32>
    %365 = vector.broadcast %cst_83 : f32 to vector<1x512xf32>
    %366 = arith.select %360, %364, %365 : vector<1x512xi1>, vector<1x512xf32>
    %cst_84 = arith.constant 0.000000e+00 : f32
    %367 = vector.broadcast %cst_84 : f32 to vector<2x128xf32>
    %cst_85 = arith.constant 0.000000e+00 : f32
    %368 = vector.broadcast %cst_85 : f32 to vector<2x128xf32>
    %369 = vector.extract_strided_slice %352 {offsets = [0, 0, 0], sizes = [2, 1, 512], strides = [1, 1, 1]} : vector<2x8x512xf32> to vector<2x1x512xf32>
    %370 = vector.shape_cast %369 : vector<2x1x512xf32> to vector<2x512xf32>
    %371 = vector.extract_strided_slice %352 {offsets = [0, 7, 0], sizes = [2, 1, 512], strides = [1, 1, 1]} : vector<2x8x512xf32> to vector<2x1x512xf32>
    %372 = vector.shape_cast %371 : vector<2x1x512xf32> to vector<2x512xf32>
    %373 = vector.shape_cast %358 : vector<1x512xi1> to vector<1x512xi1>
    %374 = vector.broadcast %373 : vector<1x512xi1> to vector<2x512xi1>
    %375 = arith.select %374, %370, %372 : vector<2x512xi1>, vector<2x512xf32>
    %cst_86 = arith.constant dense<0.000000e+00> : vector<2x512xf32>
    %376 = tpu.matmul %367, %353, %cst_86 {dimension_numbers = #tpu.dot_dimension_numbers<[1], [0], [0], [1], [0, 0, 1, 1], [], []>} : vector<2x128xf32>, vector<128x512xf32>, vector<2x512xf32> -> vector<2x512xf32>
    %377 = arith.addf %375, %376 : vector<2x512xf32>
    %378 = math.tanh %377 : vector<2x512xf32>
    %379 = vector.broadcast %363 : vector<1x512xf32> to vector<2x512xf32>
    %380 = arith.mulf %378, %379 : vector<2x512xf32>
    %381 = vector.broadcast %366 : vector<1x512xf32> to vector<2x512xf32>
    %382 = arith.addf %380, %381 : vector<2x512xf32>
    %383 = vector.extract_strided_slice %382 {offsets = [0, 0], sizes = [2, 128], strides = [1, 1]} : vector<2x512xf32> to vector<2x128xf32>
    %384 = vector.extract_strided_slice %382 {offsets = [0, 128], sizes = [2, 128], strides = [1, 1]} : vector<2x512xf32> to vector<2x128xf32>
    %385 = vector.extract_strided_slice %382 {offsets = [0, 256], sizes = [2, 128], strides = [1, 1]} : vector<2x512xf32> to vector<2x128xf32>
    %386 = vector.extract_strided_slice %382 {offsets = [0, 384], sizes = [2, 128], strides = [1, 1]} : vector<2x512xf32> to vector<2x128xf32>
    %387 = arith.mulf %384, %368 : vector<2x128xf32>
    %388 = arith.mulf %383, %386 : vector<2x128xf32>
    %389 = arith.addf %387, %388 : vector<2x128xf32>
    %390 = math.tanh %389 : vector<2x128xf32>
    %391 = arith.mulf %385, %390 : vector<2x128xf32>
    %392 = vector.extract_strided_slice %352 {offsets = [0, 1, 0], sizes = [2, 1, 512], strides = [1, 1, 1]} : vector<2x8x512xf32> to vector<2x1x512xf32>
    %393 = vector.shape_cast %392 : vector<2x1x512xf32> to vector<2x512xf32>
    %394 = vector.extract_strided_slice %352 {offsets = [0, 6, 0], sizes = [2, 1, 512], strides = [1, 1, 1]} : vector<2x8x512xf32> to vector<2x1x512xf32>
    %395 = vector.shape_cast %394 : vector<2x1x512xf32> to vector<2x512xf32>
    %396 = vector.shape_cast %358 : vector<1x512xi1> to vector<1x512xi1>
    %397 = vector.broadcast %396 : vector<1x512xi1> to vector<2x512xi1>
    %398 = arith.select %397, %393, %395 : vector<2x512xi1>, vector<2x512xf32>
    %cst_87 = arith.constant dense<0.000000e+00> : vector<2x512xf32>
    %399 = tpu.matmul %391, %353, %cst_87 {dimension_numbers = #tpu.dot_dimension_numbers<[1], [0], [0], [1], [0, 0, 1, 1], [], []>} : vector<2x128xf32>, vector<128x512xf32>, vector<2x512xf32> -> vector<2x512xf32>
    %400 = arith.addf %398, %399 : vector<2x512xf32>
    %401 = math.tanh %400 : vector<2x512xf32>
    %402 = vector.broadcast %363 : vector<1x512xf32> to vector<2x512xf32>
    %403 = arith.mulf %401, %402 : vector<2x512xf32>
    %404 = vector.broadcast %366 : vector<1x512xf32> to vector<2x512xf32>
    %405 = arith.addf %403, %404 : vector<2x512xf32>
    %406 = vector.extract_strided_slice %405 {offsets = [0, 0], sizes = [2, 128], strides = [1, 1]} : vector<2x512xf32> to vector<2x128xf32>
    %407 = vector.extract_strided_slice %405 {offsets = [0, 128], sizes = [2, 128], strides = [1, 1]} : vector<2x512xf32> to vector<2x128xf32>
    %408 = vector.extract_strided_slice %405 {offsets = [0, 256], sizes = [2, 128], strides = [1, 1]} : vector<2x512xf32> to vector<2x128xf32>
    %409 = vector.extract_strided_slice %405 {offsets = [0, 384], sizes = [2, 128], strides = [1, 1]} : vector<2x512xf32> to vector<2x128xf32>
    %410 = arith.mulf %407, %389 : vector<2x128xf32>
    %411 = arith.mulf %406, %409 : vector<2x128xf32>
    %412 = arith.addf %410, %411 : vector<2x128xf32>
    %413 = math.tanh %412 : vector<2x128xf32>
    %414 = arith.mulf %408, %413 : vector<2x128xf32>
    %415 = vector.extract_strided_slice %352 {offsets = [0, 2, 0], sizes = [2, 1, 512], strides = [1, 1, 1]} : vector<2x8x512xf32> to vector<2x1x512xf32>
    %416 = vector.shape_cast %415 : vector<2x1x512xf32> to vector<2x512xf32>
    %417 = vector.extract_strided_slice %352 {offsets = [0, 5, 0], sizes = [2, 1, 512], strides = [1, 1, 1]} : vector<2x8x512xf32> to vector<2x1x512xf32>
    %418 = vector.shape_cast %417 : vector<2x1x512xf32> to vector<2x512xf32>
    %419 = vector.shape_cast %358 : vector<1x512xi1> to vector<1x512xi1>
    %420 = vector.broadcast %419 : vector<1x512xi1> to vector<2x512xi1>
    %421 = arith.select %420, %416, %418 : vector<2x512xi1>, vector<2x512xf32>
    %cst_88 = arith.constant dense<0.000000e+00> : vector<2x512xf32>
    %422 = tpu.matmul %414, %353, %cst_88 {dimension_numbers = #tpu.dot_dimension_numbers<[1], [0], [0], [1], [0, 0, 1, 1], [], []>} : vector<2x128xf32>, vector<128x512xf32>, vector<2x512xf32> -> vector<2x512xf32>
    %423 = arith.addf %421, %422 : vector<2x512xf32>
    %424 = math.tanh %423 : vector<2x512xf32>
    %425 = vector.broadcast %363 : vector<1x512xf32> to vector<2x512xf32>
    %426 = arith.mulf %424, %425 : vector<2x512xf32>
    %427 = vector.broadcast %366 : vector<1x512xf32> to vector<2x512xf32>
    %428 = arith.addf %426, %427 : vector<2x512xf32>
    %429 = vector.extract_strided_slice %428 {offsets = [0, 0], sizes = [2, 128], strides = [1, 1]} : vector<2x512xf32> to vector<2x128xf32>
    %430 = vector.extract_strided_slice %428 {offsets = [0, 128], sizes = [2, 128], strides = [1, 1]} : vector<2x512xf32> to vector<2x128xf32>
    %431 = vector.extract_strided_slice %428 {offsets = [0, 256], sizes = [2, 128], strides = [1, 1]} : vector<2x512xf32> to vector<2x128xf32>
    %432 = vector.extract_strided_slice %428 {offsets = [0, 384], sizes = [2, 128], strides = [1, 1]} : vector<2x512xf32> to vector<2x128xf32>
    %433 = arith.mulf %430, %412 : vector<2x128xf32>
    %434 = arith.mulf %429, %432 : vector<2x128xf32>
    %435 = arith.addf %433, %434 : vector<2x128xf32>
    %436 = math.tanh %435 : vector<2x128xf32>
    %437 = arith.mulf %431, %436 : vector<2x128xf32>
    %438 = vector.extract_strided_slice %352 {offsets = [0, 3, 0], sizes = [2, 1, 512], strides = [1, 1, 1]} : vector<2x8x512xf32> to vector<2x1x512xf32>
    %439 = vector.shape_cast %438 : vector<2x1x512xf32> to vector<2x512xf32>
    %440 = vector.extract_strided_slice %352 {offsets = [0, 4, 0], sizes = [2, 1, 512], strides = [1, 1, 1]} : vector<2x8x512xf32> to vector<2x1x512xf32>
    %441 = vector.shape_cast %440 : vector<2x1x512xf32> to vector<2x512xf32>
    %442 = vector.shape_cast %358 : vector<1x512xi1> to vector<1x512xi1>
    %443 = vector.broadcast %442 : vector<1x512xi1> to vector<2x512xi1>
    %444 = arith.select %443, %439, %441 : vector<2x512xi1>, vector<2x512xf32>
    %cst_89 = arith.constant dense<0.000000e+00> : vector<2x512xf32>
    %445 = tpu.matmul %437, %353, %cst_89 {dimension_numbers = #tpu.dot_dimension_numbers<[1], [0], [0], [1], [0, 0, 1, 1], [], []>} : vector<2x128xf32>, vector<128x512xf32>, vector<2x512xf32> -> vector<2x512xf32>
    %446 = arith.addf %444, %445 : vector<2x512xf32>
    %447 = math.tanh %446 : vector<2x512xf32>
    %448 = vector.broadcast %363 : vector<1x512xf32> to vector<2x512xf32>
    %449 = arith.mulf %447, %448 : vector<2x512xf32>
    %450 = vector.broadcast %366 : vector<1x512xf32> to vector<2x512xf32>
    %451 = arith.addf %449, %450 : vector<2x512xf32>
    %452 = vector.extract_strided_slice %451 {offsets = [0, 0], sizes = [2, 128], strides = [1, 1]} : vector<2x512xf32> to vector<2x128xf32>
    %453 = vector.extract_strided_slice %451 {offsets = [0, 128], sizes = [2, 128], strides = [1, 1]} : vector<2x512xf32> to vector<2x128xf32>
    %454 = vector.extract_strided_slice %451 {offsets = [0, 256], sizes = [2, 128], strides = [1, 1]} : vector<2x512xf32> to vector<2x128xf32>
    %455 = vector.extract_strided_slice %451 {offsets = [0, 384], sizes = [2, 128], strides = [1, 1]} : vector<2x512xf32> to vector<2x128xf32>
    %456 = arith.mulf %453, %435 : vector<2x128xf32>
    %457 = arith.mulf %452, %455 : vector<2x128xf32>
    %458 = arith.addf %456, %457 : vector<2x128xf32>
    %459 = math.tanh %458 : vector<2x128xf32>
    %460 = arith.mulf %454, %459 : vector<2x128xf32>
    %461 = vector.extract_strided_slice %352 {offsets = [0, 4, 0], sizes = [2, 1, 512], strides = [1, 1, 1]} : vector<2x8x512xf32> to vector<2x1x512xf32>
    %462 = vector.shape_cast %461 : vector<2x1x512xf32> to vector<2x512xf32>
    %463 = vector.extract_strided_slice %352 {offsets = [0, 3, 0], sizes = [2, 1, 512], strides = [1, 1, 1]} : vector<2x8x512xf32> to vector<2x1x512xf32>
    %464 = vector.shape_cast %463 : vector<2x1x512xf32> to vector<2x512xf32>
    %465 = vector.shape_cast %358 : vector<1x512xi1> to vector<1x512xi1>
    %466 = vector.broadcast %465 : vector<1x512xi1> to vector<2x512xi1>
    %467 = arith.select %466, %462, %464 : vector<2x512xi1>, vector<2x512xf32>
    %cst_90 = arith.constant dense<0.000000e+00> : vector<2x512xf32>
    %468 = tpu.matmul %460, %353, %cst_90 {dimension_numbers = #tpu.dot_dimension_numbers<[1], [0], [0], [1], [0, 0, 1, 1], [], []>} : vector<2x128xf32>, vector<128x512xf32>, vector<2x512xf32> -> vector<2x512xf32>
    %469 = arith.addf %467, %468 : vector<2x512xf32>
    %470 = math.tanh %469 : vector<2x512xf32>
    %471 = vector.broadcast %363 : vector<1x512xf32> to vector<2x512xf32>
    %472 = arith.mulf %470, %471 : vector<2x512xf32>
    %473 = vector.broadcast %366 : vector<1x512xf32> to vector<2x512xf32>
    %474 = arith.addf %472, %473 : vector<2x512xf32>
    %475 = vector.extract_strided_slice %474 {offsets = [0, 0], sizes = [2, 128], strides = [1, 1]} : vector<2x512xf32> to vector<2x128xf32>
    %476 = vector.extract_strided_slice %474 {offsets = [0, 128], sizes = [2, 128], strides = [1, 1]} : vector<2x512xf32> to vector<2x128xf32>
    %477 = vector.extract_strided_slice %474 {offsets = [0, 256], sizes = [2, 128], strides = [1, 1]} : vector<2x512xf32> to vector<2x128xf32>
    %478 = vector.extract_strided_slice %474 {offsets = [0, 384], sizes = [2, 128], strides = [1, 1]} : vector<2x512xf32> to vector<2x128xf32>
    %479 = arith.mulf %476, %458 : vector<2x128xf32>
    %480 = arith.mulf %475, %478 : vector<2x128xf32>
    %481 = arith.addf %479, %480 : vector<2x128xf32>
    %482 = math.tanh %481 : vector<2x128xf32>
    %483 = arith.mulf %477, %482 : vector<2x128xf32>
    %484 = vector.extract_strided_slice %352 {offsets = [0, 5, 0], sizes = [2, 1, 512], strides = [1, 1, 1]} : vector<2x8x512xf32> to vector<2x1x512xf32>
    %485 = vector.shape_cast %484 : vector<2x1x512xf32> to vector<2x512xf32>
    %486 = vector.extract_strided_slice %352 {offsets = [0, 2, 0], sizes = [2, 1, 512], strides = [1, 1, 1]} : vector<2x8x512xf32> to vector<2x1x512xf32>
    %487 = vector.shape_cast %486 : vector<2x1x512xf32> to vector<2x512xf32>
    %488 = vector.shape_cast %358 : vector<1x512xi1> to vector<1x512xi1>
    %489 = vector.broadcast %488 : vector<1x512xi1> to vector<2x512xi1>
    %490 = arith.select %489, %485, %487 : vector<2x512xi1>, vector<2x512xf32>
    %cst_91 = arith.constant dense<0.000000e+00> : vector<2x512xf32>
    %491 = tpu.matmul %483, %353, %cst_91 {dimension_numbers = #tpu.dot_dimension_numbers<[1], [0], [0], [1], [0, 0, 1, 1], [], []>} : vector<2x128xf32>, vector<128x512xf32>, vector<2x512xf32> -> vector<2x512xf32>
    %492 = arith.addf %490, %491 : vector<2x512xf32>
    %493 = math.tanh %492 : vector<2x512xf32>
    %494 = vector.broadcast %363 : vector<1x512xf32> to vector<2x512xf32>
    %495 = arith.mulf %493, %494 : vector<2x512xf32>
    %496 = vector.broadcast %366 : vector<1x512xf32> to vector<2x512xf32>
    %497 = arith.addf %495, %496 : vector<2x512xf32>
    %498 = vector.extract_strided_slice %497 {offsets = [0, 0], sizes = [2, 128], strides = [1, 1]} : vector<2x512xf32> to vector<2x128xf32>
    %499 = vector.extract_strided_slice %497 {offsets = [0, 128], sizes = [2, 128], strides = [1, 1]} : vector<2x512xf32> to vector<2x128xf32>
    %500 = vector.extract_strided_slice %497 {offsets = [0, 256], sizes = [2, 128], strides = [1, 1]} : vector<2x512xf32> to vector<2x128xf32>
    %501 = vector.extract_strided_slice %497 {offsets = [0, 384], sizes = [2, 128], strides = [1, 1]} : vector<2x512xf32> to vector<2x128xf32>
    %502 = arith.mulf %499, %481 : vector<2x128xf32>
    %503 = arith.mulf %498, %501 : vector<2x128xf32>
    %504 = arith.addf %502, %503 : vector<2x128xf32>
    %505 = math.tanh %504 : vector<2x128xf32>
    %506 = arith.mulf %500, %505 : vector<2x128xf32>
    %507 = vector.extract_strided_slice %352 {offsets = [0, 6, 0], sizes = [2, 1, 512], strides = [1, 1, 1]} : vector<2x8x512xf32> to vector<2x1x512xf32>
    %508 = vector.shape_cast %507 : vector<2x1x512xf32> to vector<2x512xf32>
    %509 = vector.extract_strided_slice %352 {offsets = [0, 1, 0], sizes = [2, 1, 512], strides = [1, 1, 1]} : vector<2x8x512xf32> to vector<2x1x512xf32>
    %510 = vector.shape_cast %509 : vector<2x1x512xf32> to vector<2x512xf32>
    %511 = vector.shape_cast %358 : vector<1x512xi1> to vector<1x512xi1>
    %512 = vector.broadcast %511 : vector<1x512xi1> to vector<2x512xi1>
    %513 = arith.select %512, %508, %510 : vector<2x512xi1>, vector<2x512xf32>
    %cst_92 = arith.constant dense<0.000000e+00> : vector<2x512xf32>
    %514 = tpu.matmul %506, %353, %cst_92 {dimension_numbers = #tpu.dot_dimension_numbers<[1], [0], [0], [1], [0, 0, 1, 1], [], []>} : vector<2x128xf32>, vector<128x512xf32>, vector<2x512xf32> -> vector<2x512xf32>
    %515 = arith.addf %513, %514 : vector<2x512xf32>
    %516 = math.tanh %515 : vector<2x512xf32>
    %517 = vector.broadcast %363 : vector<1x512xf32> to vector<2x512xf32>
    %518 = arith.mulf %516, %517 : vector<2x512xf32>
    %519 = vector.broadcast %366 : vector<1x512xf32> to vector<2x512xf32>
    %520 = arith.addf %518, %519 : vector<2x512xf32>
    %521 = vector.extract_strided_slice %520 {offsets = [0, 0], sizes = [2, 128], strides = [1, 1]} : vector<2x512xf32> to vector<2x128xf32>
    %522 = vector.extract_strided_slice %520 {offsets = [0, 128], sizes = [2, 128], strides = [1, 1]} : vector<2x512xf32> to vector<2x128xf32>
    %523 = vector.extract_strided_slice %520 {offsets = [0, 256], sizes = [2, 128], strides = [1, 1]} : vector<2x512xf32> to vector<2x128xf32>
    %524 = vector.extract_strided_slice %520 {offsets = [0, 384], sizes = [2, 128], strides = [1, 1]} : vector<2x512xf32> to vector<2x128xf32>
    %525 = arith.mulf %522, %504 : vector<2x128xf32>
    %526 = arith.mulf %521, %524 : vector<2x128xf32>
    %527 = arith.addf %525, %526 : vector<2x128xf32>
    %528 = math.tanh %527 : vector<2x128xf32>
    %529 = arith.mulf %523, %528 : vector<2x128xf32>
    %530 = vector.extract_strided_slice %352 {offsets = [0, 7, 0], sizes = [2, 1, 512], strides = [1, 1, 1]} : vector<2x8x512xf32> to vector<2x1x512xf32>
    %531 = vector.shape_cast %530 : vector<2x1x512xf32> to vector<2x512xf32>
    %532 = vector.extract_strided_slice %352 {offsets = [0, 0, 0], sizes = [2, 1, 512], strides = [1, 1, 1]} : vector<2x8x512xf32> to vector<2x1x512xf32>
    %533 = vector.shape_cast %532 : vector<2x1x512xf32> to vector<2x512xf32>
    %534 = vector.shape_cast %358 : vector<1x512xi1> to vector<1x512xi1>
    %535 = vector.broadcast %534 : vector<1x512xi1> to vector<2x512xi1>
    %536 = arith.select %535, %531, %533 : vector<2x512xi1>, vector<2x512xf32>
    %cst_93 = arith.constant dense<0.000000e+00> : vector<2x512xf32>
    %537 = tpu.matmul %529, %353, %cst_93 {dimension_numbers = #tpu.dot_dimension_numbers<[1], [0], [0], [1], [0, 0, 1, 1], [], []>} : vector<2x128xf32>, vector<128x512xf32>, vector<2x512xf32> -> vector<2x512xf32>
    %538 = arith.addf %536, %537 : vector<2x512xf32>
    %539 = math.tanh %538 : vector<2x512xf32>
    %540 = vector.broadcast %363 : vector<1x512xf32> to vector<2x512xf32>
    %541 = arith.mulf %539, %540 : vector<2x512xf32>
    %542 = vector.broadcast %366 : vector<1x512xf32> to vector<2x512xf32>
    %543 = arith.addf %541, %542 : vector<2x512xf32>
    %544 = vector.extract_strided_slice %543 {offsets = [0, 0], sizes = [2, 128], strides = [1, 1]} : vector<2x512xf32> to vector<2x128xf32>
    %545 = vector.extract_strided_slice %543 {offsets = [0, 128], sizes = [2, 128], strides = [1, 1]} : vector<2x512xf32> to vector<2x128xf32>
    %546 = vector.extract_strided_slice %543 {offsets = [0, 256], sizes = [2, 128], strides = [1, 1]} : vector<2x512xf32> to vector<2x128xf32>
    %547 = vector.extract_strided_slice %543 {offsets = [0, 384], sizes = [2, 128], strides = [1, 1]} : vector<2x512xf32> to vector<2x128xf32>
    %548 = arith.mulf %545, %527 : vector<2x128xf32>
    %549 = arith.mulf %544, %547 : vector<2x128xf32>
    %550 = arith.addf %548, %549 : vector<2x128xf32>
    %551 = math.tanh %550 : vector<2x128xf32>
    %552 = arith.mulf %546, %551 : vector<2x128xf32>
    %553 = arith.maximumf %391, %414 : vector<2x128xf32>
    %554 = arith.maximumf %553, %437 : vector<2x128xf32>
    %555 = arith.maximumf %554, %460 : vector<2x128xf32>
    %556 = arith.maximumf %555, %483 : vector<2x128xf32>
    %557 = arith.maximumf %556, %506 : vector<2x128xf32>
    %558 = arith.maximumf %557, %529 : vector<2x128xf32>
    %559 = arith.maximumf %558, %552 : vector<2x128xf32>
    %c0_94 = arith.constant 0 : index
    %c0_95 = arith.constant 0 : index
    %560 = vector.load %arg17[%c0_94, %c0_95] : memref<128x8xf32, #tpu.memory_space<vmem>>, vector<128x8xf32>
    %cst_96 = arith.constant dense<0.000000e+00> : vector<2x8xf32>
    %561 = tpu.matmul %559, %560, %cst_96 {dimension_numbers = #tpu.dot_dimension_numbers<[1], [0], [0], [1], [0, 0, 1, 1], [], []>} : vector<2x128xf32>, vector<128x8xf32>, vector<2x8xf32> -> vector<2x8xf32>
    %c0_97 = arith.constant 0 : index
    %c0_98 = arith.constant 0 : index
    %562 = vector.load %arg18[%c0_97, %c0_98] : memref<1x8xf32, #tpu.memory_space<vmem>>, vector<1x8xf32>
    %563 = vector.broadcast %562 : vector<1x8xf32> to vector<2x8xf32>
    %564 = arith.addf %561, %563 : vector<2x8xf32>
    %c0_99 = arith.constant 0 : index
    %c0_100 = arith.constant 0 : index
    %565 = vector.load %arg19[%c0_99, %c0_100] : memref<2x8xf32, #tpu.memory_space<vmem>>, vector<2x8xf32>
    tpu.vector_store %arg19[%c0_99, %c0_100], %564 {strides = array<i32>} : memref<2x8xf32, #tpu.memory_space<vmem>>, vector<2x8xf32>,
    return
  }
}

</mosaic_0001>

<llo_original>
// kernel: lgcn_forward.1
$region0: #{lgcn_forward.1}
  #allocation0 [shape = 'u32[]', space=smem, size = 0x4, offset = 0x4, fixed_abs, tag = 'smem constant byte address 0x4 - core index']
  #allocation1 [shape = 'u32[144,128]{1,0:T(1,128)}', space=vmem, size = 0x12000, scoped, tag = 'internal scratch']
  %s0 = inlined_call_operand.vmem [shape: s32[16,1], index: 0, kind: input, shape index: {}]
  %s1 = inlined_call_operand.vmem [shape: f32[16,16], index: 1, kind: input, shape index: {}]
  %s2 = inlined_call_operand.vmem [shape: f32[2,8,16], index: 2, kind: input, shape index: {}]
  %s3 = inlined_call_operand.vmem [shape: f32[2,8,16], index: 3, kind: input, shape index: {}]
  %s4 = inlined_call_operand.vmem [shape: f32[50,300], index: 4, kind: input, shape index: {}]
  %s5 = inlined_call_operand.hbm [shape: f32[300,256], index: 5, kind: input, shape index: {}]
  %s6 = inlined_call_operand.vmem [shape: f32[64,256], index: 6, kind: input, shape index: {}]
  %s7 = inlined_call_operand.hbm [shape: f32[1,256], index: 7, kind: input, shape index: {}]
  %s8 = inlined_call_operand.hbm [shape: f32[48,64], index: 8, kind: input, shape index: {}]
  %s9 = inlined_call_operand.hbm [shape: f32[1,64], index: 9, kind: input, shape index: {}]
  %s10 = inlined_call_operand.hbm [shape: f32[48,64], index: 10, kind: input, shape index: {}]
  %s11 = inlined_call_operand.hbm [shape: f32[1,64], index: 11, kind: input, shape index: {}]
  %s12 = inlined_call_operand.vmem [shape: f32[128,64], index: 12, kind: input, shape index: {}]
  %s13 = inlined_call_operand.hbm [shape: f32[1,64], index: 13, kind: input, shape index: {}]
  %s14 = inlined_call_operand.hbm [shape: f32[192,512], index: 14, kind: input, shape index: {}]
  %s15 = inlined_call_operand.hbm [shape: f32[128,512], index: 15, kind: input, shape index: {}]
  %s16 = inlined_call_operand.vmem [shape: f32[1,512], index: 16, kind: input, shape index: {}]
  %s17 = inlined_call_operand.vmem [shape: f32[128,8], index: 17, kind: input, shape index: {}]
  %s18 = inlined_call_operand.hbm [shape: f32[1,8], index: 18, kind: input, shape index: {}]
  %s19 = inlined_call_operand.hbm [shape: f32[2,8], index: 19, kind: output, shape index: {}]
  %s20 = sld [smem:[#allocation0]]
  $region126: #{lgcn_forward.1} parent=0
    _
  %s22 = ssub.s32 1, %s20
  %s23 = scalar_select 0, %s22, %s20
  $region1: #{lgcn_forward.1} parent=0
    #allocation2 [shape = 'u8[311296]{0}', space=vmem, size = 0x4c000, scoped, tag = 'input window, operand 5, single buffered']
    #allocation3 [shape = 's32[1]{0}', space=sflag, size = 0x4, scoped, tag = 'scoped memory for lgcn_forward.1']
    #allocation4 [shape = 's32[1]{0}', space=sflag, size = 0x4, scoped, tag = 'scoped memory for lgcn_forward.1']
    #allocation5 [shape = 'u8[1024]{0}', space=vmem, size = 0x400, scoped, tag = 'input window, operand 7, single buffered']
    #allocation6 [shape = 's32[1]{0}', space=sflag, size = 0x4, scoped, tag = 'scoped memory for lgcn_forward.1']
    #allocation7 [shape = 'u8[24576]{0}', space=vmem, size = 0x6000, scoped, tag = 'input window, operand 8, single buffered']
    #allocation8 [shape = 'u8[512]{0}', space=vmem, size = 0x400, scoped, tag = 'input window, operand 9, single buffered']
    #allocation9 [shape = 's32[1]{0}', space=sflag, size = 0x4, scoped, tag = 'scoped memory for lgcn_forward.1']
    #allocation10 [shape = 'u8[24576]{0}', space=vmem, size = 0x6000, scoped, tag = 'input window, operand 10, single buffered']
    #allocation11 [shape = 'u8[512]{0}', space=vmem, size = 0x400, scoped, tag = 'input window, operand 11, single buffered']
    #allocation12 [shape = 's32[1]{0}', space=sflag, size = 0x4, scoped, tag = 'scoped memory for lgcn_forward.1']
    #allocation13 [shape = 'u8[512]{0}', space=vmem, size = 0x400, scoped, tag = 'input window, operand 13, single buffered']
    #allocation14 [shape = 'u8[393216]{0}', space=vmem, size = 0x60000, scoped, tag = 'input window, operand 14, single buffered']
    #allocation15 [shape = 's32[1]{0}', space=sflag, size = 0x4, scoped, tag = 'scoped memory for lgcn_forward.1']
    #allocation16 [shape = 'u8[262144]{0}', space=vmem, size = 0x40000, scoped, tag = 'input window, operand 15, single buffered']
    #allocation17 [shape = 'u8[512]{0}', space=vmem, size = 0x400, scoped, tag = 'input window, operand 18, single buffered']
    #allocation18 [shape = 's32[1]{0}', space=sflag, size = 0x4, scoped, tag = 'scoped memory for lgcn_forward.1']
    #allocation19 [shape = 'u8[1024]{0}', space=vmem, size = 0x400, scoped, tag = 'output window, operand 0, single buffered']
    %24 = vsyncpa [#allocation3], 0
    %25 = vsyncpa [#allocation6], 0
    %26 = vsyncpa [#allocation9], 0
    %27 = vsyncpa [#allocation12], 0
    %28 = vsyncpa [#allocation15], 0
    %29 = vsyncpa [#allocation18], 0
    %30 = vsyncpa [#allocation4], 0
    // Predicated region
    $region2: #{lgcn_forward.1} parent=1 // pred_check
      _
    $region3: #{lgcn_forward.1} parent=1 // pred_check_branch
      %32 = sbr.rel (0) target = $region5
    $region4: #{lgcn_forward.1} parent=1 // pred_region
      _
    $region5: #{lgcn_forward.1} parent=1 // pred_fallthru
      _
    // Predicated region
    $region6: #{lgcn_forward.1} parent=1 // pred_check
      _
    $region7: #{lgcn_forward.1} parent=1 // pred_check_branch
      %34 = sbr.rel (0) target = $region9
    $region8: #{lgcn_forward.1} parent=1 // pred_region
      _
    $region9: #{lgcn_forward.1} parent=1 // pred_fallthru
      _
    // Predicated region
    $region10: #{lgcn_forward.1} parent=1 // pred_check
      _
    $region11: #{lgcn_forward.1} parent=1 // pred_check_branch
      %36 = sbr.rel (0) target = $region13
    $region12: #{lgcn_forward.1} parent=1 // pred_region
      _
    $region13: #{lgcn_forward.1} parent=1 // pred_fallthru
      _
    // Predicated region
    $region14: #{lgcn_forward.1} parent=1 // pred_check
      _
    $region15: #{lgcn_forward.1} parent=1 // pred_check_branch
      %38 = sbr.rel (0) target = $region17
    $region16: #{lgcn_forward.1} parent=1 // pred_region
      _
    $region17: #{lgcn_forward.1} parent=1 // pred_fallthru
      _
    // Predicated region
    $region18: #{lgcn_forward.1} parent=1 // pred_check
      _
    $region19: #{lgcn_forward.1} parent=1 // pred_check_branch
      %40 = sbr.rel (0) target = $region21
    $region20: #{lgcn_forward.1} parent=1 // pred_region
      _
    $region21: #{lgcn_forward.1} parent=1 // pred_fallthru
      _
    // Predicated region
    $region22: #{lgcn_forward.1} parent=1 // pred_check
      _
    $region23: #{lgcn_forward.1} parent=1 // pred_check_branch
      %42 = sbr.rel (0) target = $region25
    $region24: #{lgcn_forward.1} parent=1 // pred_region
      %s44 = ssub.s32 9728, 9728
      %45 = vsyncadd [#allocation3], %s44
      %s46 = sshll.u32 [#allocation2], 4
      %s47 = int_to_ptr.vmem [resolvable:$true] %s46
      %52 = dma.hbm_to_vmem [thread:$0]  %s5, 9728, %s47, [#allocation3], 256, 256, 16
    $region25: #{lgcn_forward.1} parent=1 // pred_fallthru
      _
    // Predicated region
    $region26: #{lgcn_forward.1} parent=1 // pred_check
      _
    $region27: #{lgcn_forward.1} parent=1 // pred_check_branch
      %54 = sbr.rel (0) target = $region29
    $region28: #{lgcn_forward.1} parent=1 // pred_region
      _
    $region29: #{lgcn_forward.1} parent=1 // pred_fallthru
      _
    // Predicated region
    $region30: #{lgcn_forward.1} parent=1 // pred_check
      _
    $region31: #{lgcn_forward.1} parent=1 // pred_check_branch
      %56 = sbr.rel (0) target = $region33
    $region32: #{lgcn_forward.1} parent=1 // pred_region
      %s58 = ssub.s32 32, 32
      %59 = vsyncadd [#allocation6], %s58
      %s61 = sshll.u32 [#allocation5], 4
      %s62 = int_to_ptr.vmem [resolvable:$true] %s61
      %64 = dma.hbm_to_vmem [thread:$0]  %s7, 32, %s62, [#allocation6]
    $region33: #{lgcn_forward.1} parent=1 // pred_fallthru
      _
    // Predicated region
    $region34: #{lgcn_forward.1} parent=1 // pred_check
      _
    $region35: #{lgcn_forward.1} parent=1 // pred_check_branch
      %66 = sbr.rel (0) target = $region37
    $region36: #{lgcn_forward.1} parent=1 // pred_region
      %s68 = ssub.s32 768, 768
      %69 = vsyncadd [#allocation6], %s68
      %s70 = sshll.u32 [#allocation7], 4
      %s71 = int_to_ptr.vmem [resolvable:$true] %s70
      %76 = dma.hbm_to_vmem [thread:$0]  %s8, 768, %s71, [#allocation6], 128, 128, 8
    $region37: #{lgcn_forward.1} parent=1 // pred_fallthru
      _
    // Predicated region
    $region38: #{lgcn_forward.1} parent=1 // pred_check
      _
    $region39: #{lgcn_forward.1} parent=1 // pred_check_branch
      %78 = sbr.rel (0) target = $region41
    $region40: #{lgcn_forward.1} parent=1 // pred_region
      %s80 = ssub.s32 16, 16
      %81 = vsyncadd [#allocation9], %s80
      %s83 = sshll.u32 [#allocation8], 4
      %s84 = int_to_ptr.vmem [resolvable:$true] %s83
      %86 = dma.hbm_to_vmem [thread:$0]  %s9, 16, %s84, [#allocation9]
    $region41: #{lgcn_forward.1} parent=1 // pred_fallthru
      _
    // Predicated region
    $region42: #{lgcn_forward.1} parent=1 // pred_check
      _
    $region43: #{lgcn_forward.1} parent=1 // pred_check_branch
      %88 = sbr.rel (0) target = $region45
    $region44: #{lgcn_forward.1} parent=1 // pred_region
      %s90 = ssub.s32 768, 768
      %91 = vsyncadd [#allocation9], %s90
      %s92 = sshll.u32 [#allocation10], 4
      %s93 = int_to_ptr.vmem [resolvable:$true] %s92
      %98 = dma.hbm_to_vmem [thread:$0]  %s10, 768, %s93, [#allocation9], 128, 128, 8
    $region45: #{lgcn_forward.1} parent=1 // pred_fallthru
      _
    // Predicated region
    $region46: #{lgcn_forward.1} parent=1 // pred_check
      _
    $region47: #{lgcn_forward.1} parent=1 // pred_check_branch
      %100 = sbr.rel (0) target = $region49
    $region48: #{lgcn_forward.1} parent=1 // pred_region
      %s102 = ssub.s32 16, 16
      %103 = vsyncadd [#allocation12], %s102
      %s105 = sshll.u32 [#allocation11], 4
      %s106 = int_to_ptr.vmem [resolvable:$true] %s105
      %108 = dma.hbm_to_vmem [thread:$0]  %s11, 16, %s106, [#allocation12]
    $region49: #{lgcn_forward.1} parent=1 // pred_fallthru
      _
    // Predicated region
    $region50: #{lgcn_forward.1} parent=1 // pred_check
      _
    $region51: #{lgcn_forward.1} parent=1 // pred_check_branch
      %110 = sbr.rel (0) target = $region53
    $region52: #{lgcn_forward.1} parent=1 // pred_region
      _
    $region53: #{lgcn_forward.1} parent=1 // pred_fallthru
      _
    // Predicated region
    $region54: #{lgcn_forward.1} parent=1 // pred_check
      _
    $region55: #{lgcn_forward.1} parent=1 // pred_check_branch
      %112 = sbr.rel (0) target = $region57
    $region56: #{lgcn_forward.1} parent=1 // pred_region
      %s114 = ssub.s32 16, 16
      %115 = vsyncadd [#allocation12], %s114
      %s117 = sshll.u32 [#allocation13], 4
      %s118 = int_to_ptr.vmem [resolvable:$true] %s117
      %120 = dma.hbm_to_vmem [thread:$0]  %s13, 16, %s118, [#allocation12]
    $region57: #{lgcn_forward.1} parent=1 // pred_fallthru
      _
    // Predicated region
    $region58: #{lgcn_forward.1} parent=1 // pred_check
      _
    $region59: #{lgcn_forward.1} parent=1 // pred_check_branch
      %122 = sbr.rel (0) target = $region61
    $region60: #{lgcn_forward.1} parent=1 // pred_region
      %s124 = ssub.s32 12288, 12288
      %125 = vsyncadd [#allocation15], %s124
      %s126 = sshll.u32 [#allocation14], 4
      %s127 = int_to_ptr.vmem [resolvable:$true] %s126
      %132 = dma.hbm_to_vmem [thread:$0]  %s14, 12288, %s127, [#allocation15], 512, 512, 32
    $region61: #{lgcn_forward.1} parent=1 // pred_fallthru
      _
    // Predicated region
    $region62: #{lgcn_forward.1} parent=1 // pred_check
      _
    $region63: #{lgcn_forward.1} parent=1 // pred_check_branch
      %134 = sbr.rel (0) target = $region65
    $region64: #{lgcn_forward.1} parent=1 // pred_region
      %s136 = ssub.s32 8192, 8192
      %137 = vsyncadd [#allocation15], %s136
      %s138 = sshll.u32 [#allocation16], 4
      %s139 = int_to_ptr.vmem [resolvable:$true] %s138
      %144 = dma.hbm_to_vmem [thread:$0]  %s15, 8192, %s139, [#allocation15], 512, 512, 32
    $region65: #{lgcn_forward.1} parent=1 // pred_fallthru
      _
    // Predicated region
    $region66: #{lgcn_forward.1} parent=1 // pred_check
      _
    $region67: #{lgcn_forward.1} parent=1 // pred_check_branch
      %146 = sbr.rel (0) target = $region69
    $region68: #{lgcn_forward.1} parent=1 // pred_region
      _
    $region69: #{lgcn_forward.1} parent=1 // pred_fallthru
      _
    // Predicated region
    $region70: #{lgcn_forward.1} parent=1 // pred_check
      _
    $region71: #{lgcn_forward.1} parent=1 // pred_check_branch
      %148 = sbr.rel (0) target = $region73
    $region72: #{lgcn_forward.1} parent=1 // pred_region
      _
    $region73: #{lgcn_forward.1} parent=1 // pred_fallthru
      _
    // Predicated region
    $region74: #{lgcn_forward.1} parent=1 // pred_check
      _
    $region75: #{lgcn_forward.1} parent=1 // pred_check_branch
      %150 = sbr.rel (0) target = $region77
    $region76: #{lgcn_forward.1} parent=1 // pred_region
      %s152 = ssub.s32 16, 16
      %153 = vsyncadd [#allocation18], %s152
      %s155 = sshll.u32 [#allocation17], 4
      %s156 = int_to_ptr.vmem [resolvable:$true] %s155
      %158 = dma.hbm_to_vmem [thread:$0]  %s18, 16, %s156, [#allocation18]
    $region77: #{lgcn_forward.1} parent=1 // pred_fallthru
      _
    // Predicated region
    $region78: #{lgcn_forward.1} parent=1 // pred_check
      _
    $region79: #{lgcn_forward.1} parent=1 // pred_check_branch
      %160 = sbr.rel (0) target = $region81
    $region80: #{lgcn_forward.1} parent=1 // pred_region
      %161 = dma.done [#allocation3], 9728
    $region81: #{lgcn_forward.1} parent=1 // pred_fallthru
      _
    // Predicated region
    $region82: #{lgcn_forward.1} parent=1 // pred_check
      _
    $region83: #{lgcn_forward.1} parent=1 // pred_check_branch
      %163 = sbr.rel (0) target = $region85
    $region84: #{lgcn_forward.1} parent=1 // pred_region
      %164 = dma.done [#allocation6], 32
    $region85: #{lgcn_forward.1} parent=1 // pred_fallthru
      _
    // Predicated region
    $region86: #{lgcn_forward.1} parent=1 // pred_check
      _
    $region87: #{lgcn_forward.1} parent=1 // pred_check_branch
      %166 = sbr.rel (0) target = $region89
    $region88: #{lgcn_forward.1} parent=1 // pred_region
      %167 = dma.done [#allocation6], 768
    $region89: #{lgcn_forward.1} parent=1 // pred_fallthru
      _
    // Predicated region
    $region90: #{lgcn_forward.1} parent=1 // pred_check
      _
    $region91: #{lgcn_forward.1} parent=1 // pred_check_branch
      %169 = sbr.rel (0) target = $region93
    $region92: #{lgcn_forward.1} parent=1 // pred_region
      %170 = dma.done [#allocation9], 16
    $region93: #{lgcn_forward.1} parent=1 // pred_fallthru
      _
    // Predicated region
    $region94: #{lgcn_forward.1} parent=1 // pred_check
      _
    $region95: #{lgcn_forward.1} parent=1 // pred_check_branch
      %172 = sbr.rel (0) target = $region97
    $region96: #{lgcn_forward.1} parent=1 // pred_region
      %173 = dma.done [#allocation9], 768
    $region97: #{lgcn_forward.1} parent=1 // pred_fallthru
      _
    // Predicated region
    $region98: #{lgcn_forward.1} parent=1 // pred_check
      _
    $region99: #{lgcn_forward.1} parent=1 // pred_check_branch
      %175 = sbr.rel (0) target = $region101
    $region100: #{lgcn_forward.1} parent=1 // pred_region
      %176 = dma.done [#allocation12], 16
    $region101: #{lgcn_forward.1} parent=1 // pred_fallthru
      _
    // Predicated region
    $region102: #{lgcn_forward.1} parent=1 // pred_check
      _
    $region103: #{lgcn_forward.1} parent=1 // pred_check_branch
      %178 = sbr.rel (0) target = $region105
    $region104: #{lgcn_forward.1} parent=1 // pred_region
      %179 = dma.done [#allocation12], 16
    $region105: #{lgcn_forward.1} parent=1 // pred_fallthru
      _
    // Predicated region
    $region106: #{lgcn_forward.1} parent=1 // pred_check
      _
    $region107: #{lgcn_forward.1} parent=1 // pred_check_branch
      %181 = sbr.rel (0) target = $region109
    $region108: #{lgcn_forward.1} parent=1 // pred_region
      %182 = dma.done [#allocation15], 12288
    $region109: #{lgcn_forward.1} parent=1 // pred_fallthru
      _
    // Predicated region
    $region110: #{lgcn_forward.1} parent=1 // pred_check
      _
    $region111: #{lgcn_forward.1} parent=1 // pred_check_branch
      %184 = sbr.rel (0) target = $region113
    $region112: #{lgcn_forward.1} parent=1 // pred_region
      %185 = dma.done [#allocation15], 8192
    $region113: #{lgcn_forward.1} parent=1 // pred_fallthru
      _
    // Predicated region
    $region114: #{lgcn_forward.1} parent=1 // pred_check
      _
    $region115: #{lgcn_forward.1} parent=1 // pred_check_branch
      %187 = sbr.rel (0) target = $region117
    $region116: #{lgcn_forward.1} parent=1 // pred_region
      %188 = dma.done [#allocation18], 16
    $region117: #{lgcn_forward.1} parent=1 // pred_fallthru
      _
    %v189 = vld [vmem:[%s0] sm:$0xff]
    %v190 = vld [vmem:[%s0 + $0x8] sm:$0xff]
    %v191 = vlaneseq
    %v192 = vand.u32 %v191, 127
    %193 = vset.pattern.permute.xlu0 0
    %194 = vperm.xlu0 %193, %v189
    %v195 = vpop.permute.xlu0 %194
    %196 = vset.pattern.permute.xlu0 0
    %197 = vperm.xlu0 %196, %v190
    %v198 = vpop.permute.xlu0 %197
    %vm199 = vcmp.eq.s32.totalorder %v195, %v192
    %vm200 = vcmp.eq.s32.totalorder %v198, %v192
    %v201 = vsel %vm199, 1.0, 0.0
    %v202 = vsel %vm200, 1.0, 0.0
    %v203 = vld [vmem:[%s4] sm:$0xff]
    %v204 = vld [vmem:[%s4 + $0x8] sm:$0xff]
    %v205 = vld [vmem:[%s4 + $0x10] sm:$0xff]
    %v206 = vld [vmem:[%s4 + $0x18] sm:$0xff]
    %v207 = vld [vmem:[%s4 + $0x20] sm:$0xff]
    %v208 = vld [vmem:[%s4 + $0x28] sm:$0xff]
    %v209 = vld [vmem:[%s4 + $0x30] sm:$0xff]
    %v210 = vld [vmem:[%s4 + $0x38] sm:$0xff]
    %v211 = vld [vmem:[%s4 + $0x40] sm:$0xff]
    %v212 = vld [vmem:[%s4 + $0x48] sm:$0xff]
    %v213 = vld [vmem:[%s4 + $0x50] sm:$0xff]
    %v214 = vld [vmem:[%s4 + $0x58] sm:$0xff]
    %v215 = vld [vmem:[%s4 + $0x60] sm:$0xff]
    %v216 = vld [vmem:[%s4 + $0x68] sm:$0xff]
    %v217 = vld [vmem:[%s4 + $0x70] sm:$0xff]
    %v218 = vld [vmem:[%s4 + $0x78] sm:$0xff]
    %v219 = vld [vmem:[%s4 + $0x80] sm:$0xff]
    %v220 = vld [vmem:[%s4 + $0x88] sm:$0xff]
    %v221 = vld [vmem:[%s4 + $0x90] sm:$0x3]
    %v222 = vld [vmem:[%s4 + $0x98] sm:$0x3]
    %v223 = vld [vmem:[%s4 + $0xa0] sm:$0x3]
    %vm224 = vcmask 408576
    %v226 = vsel %vm224, %v201, 0
    %v229 = vsel %vm224, %v202, 0
    %vm231 = vcmask 1041408
    %v233 = vsel %vm231, %v221, 0
    %v236 = vsel %vm231, %v222, 0
    %v239 = vsel %vm231, %v223, 0
    %241 = vmatprep.subr.mxu0 0.0
    %242 = vmatpush1.msra.mxu0 0.0
    %243 = vmatprep.subr.mxu0 0.0
    %244 = vmatpush1.msra.mxu0 0.0
    %245 = vmatprep.subr.mxu0 0.0
    %246 = vmatpush1.msra.mxu0 0.0
    %247 = vmatprep.subr.mxu0 0.0
    %248 = vmatpush1.msra.mxu0 0.0
    %249 = vmatprep.subr.mxu0 0.0
    %250 = vmatpush1.msra.mxu0 0.0
    %251 = vmatprep.subr.mxu0 0.0
    %252 = vmatpush1.msra.mxu0 0.0
    %253 = vmatprep.subr.mxu0 0.0
    %254 = vmatpush1.msra.mxu0 0.0
    %255 = vmatprep.subr.mxu0 0.0
    %256 = vmatpush1.msra.mxu0 0.0
    %257 = vmatprep.subr.mxu0 0.0
    %258 = vmatpush1.msra.mxu0 0.0
    %259 = vmatprep.subr.mxu0 %v236
    %260 = vmatpush1.msra.mxu0 %v233
    %261 = vmatprep.subr.mxu0 %v219
    %262 = vmatpush1.msra.mxu0 %v218
    %263 = vmatprep.subr.mxu0 %v216
    %264 = vmatpush1.msra.mxu0 %v215
    %265 = vmatprep.subr.mxu0 %v213
    %266 = vmatpush1.msra.mxu0 %v212
    %267 = vmatprep.subr.mxu0 %v210
    %268 = vmatpush1.msra.mxu0 %v209
    %269 = vmatprep.subr.mxu0 %v207
    %270 = vmatpush1.msra.mxu0 %v206
    %271 = vmatprep.subr.mxu0 %v204
    %272 = vmatpush1.msra.mxu0 %v203
    %273 = vmatprep.subr.mxu0 0.0
    %274 = vmatpush2.msra.mxu0 0.0
    %275 = vmatprep.subr.mxu0 0.0
    %276 = vmatpush2.msra.mxu0 0.0
    %277 = vmatprep.subr.mxu0 0.0
    %278 = vmatpush2.msra.mxu0 0.0
    %279 = vmatprep.subr.mxu0 0.0
    %280 = vmatpush2.msra.mxu0 0.0
    %281 = vmatprep.subr.mxu0 0.0
    %282 = vmatpush2.msra.mxu0 0.0
    %283 = vmatprep.subr.mxu0 0.0
    %284 = vmatpush2.msra.mxu0 0.0
    %285 = vmatprep.subr.mxu0 0.0
    %286 = vmatpush2.msra.mxu0 0.0
    %287 = vmatprep.subr.mxu0 0.0
    %288 = vmatpush2.msra.mxu0 0.0
    %289 = vmatprep.subr.mxu0 0.0
    %290 = vmatpush2.msra.mxu0 0.0
    %291 = vmatprep.subr.mxu0 0.0
    %292 = vmatpush2.msra.mxu0 0.0
    %293 = vmatprep.subr.mxu0 0.0
    %294 = vmatpush2.msra.mxu0 0.0
    %295 = vmatprep.subr.mxu0 0.0
    %296 = vmatpush2.msra.mxu0 0.0
    %297 = vmatprep.subr.mxu0 0.0
    %298 = vmatpush2.msra.mxu0 0.0
    %299 = vmatprep.subr.mxu0 0.0
    %300 = vmatpush2.msra.mxu0 0.0
    %301 = vmatprep.subr.mxu0 0.0
    %302 = vmatpush2.msra.mxu0 0.0
    %303 = vmatprep.subr.mxu0 0.0
    %304 = vmatpush2.msra.mxu0 0.0
    %305 = vmatprep.mubr.f32.mxu0 0.0
    %306 = vmatmul.mubr.f32.gmra.mxu0 %v226
    %v307 = vpop.f32.mrf.mxu0
    %v308 = vadd.f32 0.0, %v307
    %v309 = vpop.f32.mrf.mxu0
    %v310 = vadd.f32 0.0, %v309
    %311 = vmatprep.mubr.f32.mxu0 0.0
    %312 = vmatmul.mubr.f32.gmra.mxu0 %v229
    %v313 = vpop.f32.mrf.mxu0
    %v314 = vadd.f32 0.0, %v313
    %v315 = vpop.f32.mrf.mxu0
    %v316 = vadd.f32 0.0, %v315
    %317 = vdwg.mxu0
    %318 = vmatprep.subr.mxu0 0.0
    %319 = vmatpush1.msra.mxu0 0.0
    %320 = vmatprep.subr.mxu0 0.0
    %321 = vmatpush1.msra.mxu0 0.0
    %322 = vmatprep.subr.mxu0 0.0
    %323 = vmatpush1.msra.mxu0 0.0
    %324 = vmatprep.subr.mxu0 0.0
    %325 = vmatpush1.msra.mxu0 0.0
    %326 = vmatprep.subr.mxu0 0.0
    %327 = vmatpush1.msra.mxu0 0.0
    %328 = vmatprep.subr.mxu0 0.0
    %329 = vmatpush1.msra.mxu0 0.0
    %330 = vmatprep.subr.mxu0 0.0
    %331 = vmatpush1.msra.mxu0 0.0
    %332 = vmatprep.subr.mxu0 0.0
    %333 = vmatpush1.msra.mxu0 0.0
    %334 = vmatprep.subr.mxu0 0.0
    %335 = vmatpush1.msra.mxu0 0.0
    %336 = vmatprep.subr.mxu0 0.0
    %337 = vmatpush1.msra.mxu0 %v239
    %338 = vmatprep.subr.mxu0 0.0
    %339 = vmatpush1.msra.mxu0 %v220
    %340 = vmatprep.subr.mxu0 0.0
    %341 = vmatpush1.msra.mxu0 %v217
    %342 = vmatprep.subr.mxu0 0.0
    %343 = vmatpush1.msra.mxu0 %v214
    %344 = vmatprep.subr.mxu0 0.0
    %345 = vmatpush1.msra.mxu0 %v211
    %346 = vmatprep.subr.mxu0 0.0
    %347 = vmatpush1.msra.mxu0 %v208
    %348 = vmatprep.subr.mxu0 0.0
    %349 = vmatpush1.msra.mxu0 %v205
    %350 = vmatprep.subr.mxu0 0.0
    %351 = vmatpush2.msra.mxu0 0.0
    %352 = vmatprep.subr.mxu0 0.0
    %353 = vmatpush2.msra.mxu0 0.0
    %354 = vmatprep.subr.mxu0 0.0
    %355 = vmatpush2.msra.mxu0 0.0
    %356 = vmatprep.subr.mxu0 0.0
    %357 = vmatpush2.msra.mxu0 0.0
    %358 = vmatprep.subr.mxu0 0.0
    %359 = vmatpush2.msra.mxu0 0.0
    %360 = vmatprep.subr.mxu0 0.0
    %361 = vmatpush2.msra.mxu0 0.0
    %362 = vmatprep.subr.mxu0 0.0
    %363 = vmatpush2.msra.mxu0 0.0
    %364 = vmatprep.subr.mxu0 0.0
    %365 = vmatpush2.msra.mxu0 0.0
    %366 = vmatprep.subr.mxu0 0.0
    %367 = vmatpush2.msra.mxu0 0.0
    %368 = vmatprep.subr.mxu0 0.0
    %369 = vmatpush2.msra.mxu0 0.0
    %370 = vmatprep.subr.mxu0 0.0
    %371 = vmatpush2.msra.mxu0 0.0
    %372 = vmatprep.subr.mxu0 0.0
    %373 = vmatpush2.msra.mxu0 0.0
    %374 = vmatprep.subr.mxu0 0.0
    %375 = vmatpush2.msra.mxu0 0.0
    %376 = vmatprep.subr.mxu0 0.0
    %377 = vmatpush2.msra.mxu0 0.0
    %378 = vmatprep.subr.mxu0 0.0
    %379 = vmatpush2.msra.mxu0 0.0
    %380 = vmatprep.subr.mxu0 0.0
    %381 = vmatpush2.msra.mxu0 0.0
    %382 = vmatprep.mubr.f32.mxu0 0.0
    %383 = vmatmul.mubr.f32.gmra.mxu0 %v226
    %v384 = vpop.f32.mrf.mxu0
    %v385 = vadd.f32 0.0, %v384
    %v386 = vpop.f32.mrf.mxu0
    %387 = vmatprep.mubr.f32.mxu0 0.0
    %388 = vmatmul.mubr.f32.gmra.mxu0 %v229
    %v389 = vpop.f32.mrf.mxu0
    %v390 = vadd.f32 0.0, %v389
    %v391 = vpop.f32.mrf.mxu0
    %392 = vdwg.mxu0
    %v393 = vld [vmem:[#allocation2] sm:$0xff]
    %v394 = vld [vmem:[#allocation2 + $0x8] sm:$0xff]
    %v395 = vld [vmem:[#allocation2 + $0x10] sm:$0xff]
    %v396 = vld [vmem:[#allocation2 + $0x18] sm:$0xff]
    %v397 = vld [vmem:[#allocation2 + $0x20] sm:$0xff]
    %v398 = vld [vmem:[#allocation2 + $0x28] sm:$0xff]
    %v399 = vld [vmem:[#allocation2 + $0x30] sm:$0xff]
    %v400 = vld [vmem:[#allocation2 + $0x38] sm:$0xff]
    %v401 = vld [vmem:[#allocation2 + $0x40] sm:$0xff]
    %v402 = vld [vmem:[#allocation2 + $0x48] sm:$0xff]
    %v403 = vld [vmem:[#allocation2 + $0x50] sm:$0xff]
    %v404 = vld [vmem:[#allocation2 + $0x58] sm:$0xff]
    %v405 = vld [vmem:[#allocation2 + $0x60] sm:$0xff]
    %v406 = vld [vmem:[#allocation2 + $0x68] sm:$0xff]
    %v407 = vld [vmem:[#allocation2 + $0x70] sm:$0xff]
    %v408 = vld [vmem:[#allocation2 + $0x78] sm:$0xff]
    %v409 = vld [vmem:[#allocation2 + $0x80] sm:$0xff]
    %v410 = vld [vmem:[#allocation2 + $0x88] sm:$0xff]
    %v411 = vld [vmem:[#allocation2 + $0x90] sm:$0xff]
    %v412 = vld [vmem:[#allocation2 + $0x98] sm:$0xff]
    %v413 = vld [vmem:[#allocation2 + $0xa0] sm:$0xff]
    %v414 = vld [vmem:[#allocation2 + $0xa8] sm:$0xff]
    %v415 = vld [vmem:[#allocation2 + $0xb0] sm:$0xff]
    %v416 = vld [vmem:[#allocation2 + $0xb8] sm:$0xff]
    %v417 = vld [vmem:[#allocation2 + $0xc0] sm:$0xff]
    %v418 = vld [vmem:[#allocation2 + $0xc8] sm:$0xff]
    %v419 = vld [vmem:[#allocation2 + $0xd0] sm:$0xff]
    %v420 = vld [vmem:[#allocation2 + $0xd8] sm:$0xff]
    %v421 = vld [vmem:[#allocation2 + $0xe0] sm:$0xff]
    %v422 = vld [vmem:[#allocation2 + $0xe8] sm:$0xff]
    %v423 = vld [vmem:[#allocation2 + $0xf0] sm:$0xff]
    %v424 = vld [vmem:[#allocation2 + $0xf8] sm:$0xff]
    %v425 = vld [vmem:[#allocation2 + $0x100] sm:$0xff]
    %v426 = vld [vmem:[#allocation2 + $0x108] sm:$0xff]
    %v427 = vld [vmem:[#allocation2 + $0x110] sm:$0xff]
    %v428 = vld [vmem:[#allocation2 + $0x118] sm:$0xff]
    %v429 = vld [vmem:[#allocation2 + $0x120] sm:$0xff]
    %v430 = vld [vmem:[#allocation2 + $0x128] sm:$0xff]
    %v431 = vld [vmem:[#allocation2 + $0x130] sm:$0xff]
    %v432 = vld [vmem:[#allocation2 + $0x138] sm:$0xff]
    %v433 = vld [vmem:[#allocation2 + $0x140] sm:$0xff]
    %v434 = vld [vmem:[#allocation2 + $0x148] sm:$0xff]
    %v435 = vld [vmem:[#allocation2 + $0x150] sm:$0xff]
    %v436 = vld [vmem:[#allocation2 + $0x158] sm:$0xff]
    %v437 = vld [vmem:[#allocation2 + $0x160] sm:$0xff]
    %v438 = vld [vmem:[#allocation2 + $0x168] sm:$0xff]
    %v439 = vld [vmem:[#allocation2 + $0x170] sm:$0xff]
    %v440 = vld [vmem:[#allocation2 + $0x178] sm:$0xff]
    %v441 = vld [vmem:[#allocation2 + $0x180] sm:$0xff]
    %v442 = vld [vmem:[#allocation2 + $0x188] sm:$0xff]
    %v443 = vld [vmem:[#allocation2 + $0x190] sm:$0xff]
    %v444 = vld [vmem:[#allocation2 + $0x198] sm:$0xff]
    %v445 = vld [vmem:[#allocation2 + $0x1a0] sm:$0xff]
    %v446 = vld [vmem:[#allocation2 + $0x1a8] sm:$0xff]
    %v447 = vld [vmem:[#allocation2 + $0x1b0] sm:$0xff]
    %v448 = vld [vmem:[#allocation2 + $0x1b8] sm:$0xff]
    %v449 = vld [vmem:[#allocation2 + $0x1c0] sm:$0xff]
    %v450 = vld [vmem:[#allocation2 + $0x1c8] sm:$0xff]
    %v451 = vld [vmem:[#allocation2 + $0x1d0] sm:$0xff]
    %v452 = vld [vmem:[#allocation2 + $0x1d8] sm:$0xff]
    %v453 = vld [vmem:[#allocation2 + $0x1e0] sm:$0xff]
    %v454 = vld [vmem:[#allocation2 + $0x1e8] sm:$0xff]
    %v455 = vld [vmem:[#allocation2 + $0x1f0] sm:$0xff]
    %v456 = vld [vmem:[#allocation2 + $0x1f8] sm:$0xff]
    %v457 = vld [vmem:[#allocation2 + $0x200] sm:$0xff]
    %v458 = vld [vmem:[#allocation2 + $0x208] sm:$0xff]
    %v459 = vld [vmem:[#allocation2 + $0x210] sm:$0xff]
    %v460 = vld [vmem:[#allocation2 + $0x218] sm:$0xff]
    %v461 = vld [vmem:[#allocation2 + $0x220] sm:$0xff]
    %v462 = vld [vmem:[#allocation2 + $0x228] sm:$0xff]
    %v463 = vld [vmem:[#allocation2 + $0x230] sm:$0xff]
    %v464 = vld [vmem:[#allocation2 + $0x238] sm:$0xff]
    %v465 = vld [vmem:[#allocation2 + $0x240] sm:$0xff]
    %v466 = vld [vmem:[#allocation2 + $0x248] sm:$0xff]
    %v467 = vld [vmem:[#allocation2 + $0x250] sm:$0xf]
    %v468 = vld [vmem:[#allocation2 + $0x258] sm:$0xf]
    %v469 = vld [vmem:[#allocation5] sm:$0x3]
    %v471 = vlaneseq
    %v472 = vshrl.u32 %v471, 7
    %v473 = vsub.s32 0, %v472
    %v474 = vrot.slane %v469, %v473
    %v475 = vlaneseq
    %v476 = vshrl.u32 %v475, 7
    %v477 = vsub.s32 1, %v476
    %v478 = vrot.slane %v469, %v477
    %vm481 = vcmask 359424
    %v483 = vsel %vm481, %v385, 0
    %v486 = vsel %vm481, %v390, 0
    %vm488 = vcmask 1043456
    %v490 = vsel %vm488, %v467, 0
    %v493 = vsel %vm488, %v468, 0
    %495 = vmatprep.subr.mxu0 %v424
    %496 = vmatpush1.msra.mxu0 %v423
    %497 = vmatprep.subr.mxu0 %v422
    %498 = vmatpush1.msra.mxu0 %v421
    %499 = vmatprep.subr.mxu0 %v420
    %500 = vmatpush1.msra.mxu0 %v419
    %501 = vmatprep.subr.mxu0 %v418
    %502 = vmatpush1.msra.mxu0 %v417
    %503 = vmatprep.subr.mxu0 %v416
    %504 = vmatpush1.msra.mxu0 %v415
    %505 = vmatprep.subr.mxu0 %v414
    %506 = vmatpush1.msra.mxu0 %v413
    %507 = vmatprep.subr.mxu0 %v412
    %508 = vmatpush1.msra.mxu0 %v411
    %509 = vmatprep.subr.mxu0 %v410
    %510 = vmatpush1.msra.mxu0 %v409
    %511 = vmatprep.subr.mxu0 %v408
    %512 = vmatpush1.msra.mxu0 %v407
    %513 = vmatprep.subr.mxu0 %v406
    %514 = vmatpush1.msra.mxu0 %v405
    %515 = vmatprep.subr.mxu0 %v404
    %516 = vmatpush1.msra.mxu0 %v403
    %517 = vmatprep.subr.mxu0 %v402
    %518 = vmatpush1.msra.mxu0 %v401
    %519 = vmatprep.subr.mxu0 %v400
    %520 = vmatpush1.msra.mxu0 %v399
    %521 = vmatprep.subr.mxu0 %v398
    %522 = vmatpush1.msra.mxu0 %v397
    %523 = vmatprep.subr.mxu0 %v396
    %524 = vmatpush1.msra.mxu0 %v395
    %525 = vmatprep.subr.mxu0 %v394
    %526 = vmatpush1.msra.mxu0 %v393
    %527 = vmatprep.subr.mxu0 %v456
    %528 = vmatpush2.msra.mxu0 %v455
    %529 = vmatprep.subr.mxu0 %v454
    %530 = vmatpush2.msra.mxu0 %v453
    %531 = vmatprep.subr.mxu0 %v452
    %532 = vmatpush2.msra.mxu0 %v451
    %533 = vmatprep.subr.mxu0 %v450
    %534 = vmatpush2.msra.mxu0 %v449
    %535 = vmatprep.subr.mxu0 %v448
    %536 = vmatpush2.msra.mxu0 %v447
    %537 = vmatprep.subr.mxu0 %v446
    %538 = vmatpush2.msra.mxu0 %v445
    %539 = vmatprep.subr.mxu0 %v444
    %540 = vmatpush2.msra.mxu0 %v443
    %541 = vmatprep.subr.mxu0 %v442
    %542 = vmatpush2.msra.mxu0 %v441
    %543 = vmatprep.subr.mxu0 %v440
    %544 = vmatpush2.msra.mxu0 %v439
    %545 = vmatprep.subr.mxu0 %v438
    %546 = vmatpush2.msra.mxu0 %v437
    %547 = vmatprep.subr.mxu0 %v436
    %548 = vmatpush2.msra.mxu0 %v435
    %549 = vmatprep.subr.mxu0 %v434
    %550 = vmatpush2.msra.mxu0 %v433
    %551 = vmatprep.subr.mxu0 %v432
    %552 = vmatpush2.msra.mxu0 %v431
    %553 = vmatprep.subr.mxu0 %v430
    %554 = vmatpush2.msra.mxu0 %v429
    %555 = vmatprep.subr.mxu0 %v428
    %556 = vmatpush2.msra.mxu0 %v427
    %557 = vmatprep.subr.mxu0 %v426
    %558 = vmatpush2.msra.mxu0 %v425
    %559 = vmatprep.mubr.f32.mxu0 %v310
    %560 = vmatmul.mubr.f32.gmra.mxu0 %v308
    %v561 = vpop.f32.mrf.mxu0
    %v562 = vadd.f32 %v474, %v561
    %v563 = vpop.f32.mrf.mxu0
    %v564 = vadd.f32 %v478, %v563
    %565 = vmatprep.mubr.f32.mxu0 %v316
    %566 = vmatmul.mubr.f32.gmra.mxu0 %v314
    %v567 = vpop.f32.mrf.mxu0
    %v568 = vadd.f32 %v474, %v567
    %v569 = vpop.f32.mrf.mxu0
    %v570 = vadd.f32 %v478, %v569
    %571 = vdwg.mxu0
    %572 = vmatprep.subr.mxu0 0.0
    %573 = vmatpush1.msra.mxu0 0.0
    %574 = vmatprep.subr.mxu0 0.0
    %575 = vmatpush1.msra.mxu0 0.0
    %576 = vmatprep.subr.mxu0 0.0
    %577 = vmatpush1.msra.mxu0 0.0
    %578 = vmatprep.subr.mxu0 0.0
    %579 = vmatpush1.msra.mxu0 0.0
    %580 = vmatprep.subr.mxu0 0.0
    %581 = vmatpush1.msra.mxu0 0.0
    %582 = vmatprep.subr.mxu0 0.0
    %583 = vmatpush1.msra.mxu0 0.0
    %584 = vmatprep.subr.mxu0 0.0
    %585 = vmatpush1.msra.mxu0 0.0
    %586 = vmatprep.subr.mxu0 0.0
    %587 = vmatpush1.msra.mxu0 0.0
    %588 = vmatprep.subr.mxu0 0.0
    %589 = vmatpush1.msra.mxu0 0.0
    %590 = vmatprep.subr.mxu0 0.0
    %591 = vmatpush1.msra.mxu0 0.0
    %592 = vmatprep.subr.mxu0 %v493
    %593 = vmatpush1.msra.mxu0 %v490
    %594 = vmatprep.subr.mxu0 %v466
    %595 = vmatpush1.msra.mxu0 %v465
    %596 = vmatprep.subr.mxu0 %v464
    %597 = vmatpush1.msra.mxu0 %v463
    %598 = vmatprep.subr.mxu0 %v462
    %599 = vmatpush1.msra.mxu0 %v461
    %600 = vmatprep.subr.mxu0 %v460
    %601 = vmatpush1.msra.mxu0 %v459
    %602 = vmatprep.subr.mxu0 %v458
    %603 = vmatpush1.msra.mxu0 %v457
    %604 = vmatprep.subr.mxu0 0.0
    %605 = vmatpush2.msra.mxu0 0.0
    %606 = vmatprep.subr.mxu0 0.0
    %607 = vmatpush2.msra.mxu0 0.0
    %608 = vmatprep.subr.mxu0 0.0
    %609 = vmatpush2.msra.mxu0 0.0
    %610 = vmatprep.subr.mxu0 0.0
    %611 = vmatpush2.msra.mxu0 0.0
    %612 = vmatprep.subr.mxu0 0.0
    %613 = vmatpush2.msra.mxu0 0.0
    %614 = vmatprep.subr.mxu0 0.0
    %615 = vmatpush2.msra.mxu0 0.0
    %616 = vmatprep.subr.mxu0 0.0
    %617 = vmatpush2.msra.mxu0 0.0
    %618 = vmatprep.subr.mxu0 0.0
    %619 = vmatpush2.msra.mxu0 0.0
    %620 = vmatprep.subr.mxu0 0.0
    %621 = vmatpush2.msra.mxu0 0.0
    %622 = vmatprep.subr.mxu0 0.0
    %623 = vmatpush2.msra.mxu0 0.0
    %624 = vmatprep.subr.mxu0 0.0
    %625 = vmatpush2.msra.mxu0 0.0
    %626 = vmatprep.subr.mxu0 0.0
    %627 = vmatpush2.msra.mxu0 0.0
    %628 = vmatprep.subr.mxu0 0.0
    %629 = vmatpush2.msra.mxu0 0.0
    %630 = vmatprep.subr.mxu0 0.0
    %631 = vmatpush2.msra.mxu0 0.0
    %632 = vmatprep.subr.mxu0 0.0
    %633 = vmatpush2.msra.mxu0 0.0
    %634 = vmatprep.subr.mxu0 0.0
    %635 = vmatpush2.msra.mxu0 0.0
    %636 = vmatprep.mubr.f32.mxu0 0.0
    %637 = vmatmul.mubr.f32.gmra.mxu0 %v483
    %v638 = vpop.f32.mrf.mxu0
    %v639 = vadd.f32 %v562, %v638
    %v640 = vpop.f32.mrf.mxu0
    %v641 = vadd.f32 %v564, %v640
    %642 = vmatprep.mubr.f32.mxu0 0.0
    %643 = vmatmul.mubr.f32.gmra.mxu0 %v486
    %v644 = vpop.f32.mrf.mxu0
    %v645 = vadd.f32 %v568, %v644
    %v646 = vpop.f32.mrf.mxu0
    %v647 = vadd.f32 %v570, %v646
    %648 = vdwg.mxu0
    %v649 = vld [vmem:[%s6] sm:$0xff]
    %v650 = vld [vmem:[%s6 + $0x8] sm:$0xff]
    %v651 = vld [vmem:[%s6 + $0x10] sm:$0xff]
    %v652 = vld [vmem:[%s6 + $0x18] sm:$0xff]
    %v653 = vld [vmem:[%s6 + $0x20] sm:$0xff]
    %v654 = vld [vmem:[%s6 + $0x28] sm:$0xff]
    %v655 = vld [vmem:[%s6 + $0x30] sm:$0xff]
    %v656 = vld [vmem:[%s6 + $0x38] sm:$0xff]
    %v657 = vld [vmem:[%s6 + $0x40] sm:$0xff]
    %v658 = vld [vmem:[%s6 + $0x48] sm:$0xff]
    %v659 = vld [vmem:[%s6 + $0x50] sm:$0xff]
    %v660 = vld [vmem:[%s6 + $0x58] sm:$0xff]
    %v661 = vld [vmem:[%s6 + $0x60] sm:$0xff]
    %v662 = vld [vmem:[%s6 + $0x68] sm:$0xff]
    %v663 = vld [vmem:[%s6 + $0x70] sm:$0xff]
    %v664 = vld [vmem:[%s6 + $0x78] sm:$0xff]
    %v665 = vadd.s32 %v192, 128
    %v666 = vand.u32 %v192, 32
    %v667 = vand.u32 %v665, 32
    %vm668 = vcmp.eq.s32.totalorder %v666, 0
    %vm669 = vcmp.eq.s32.totalorder %v667, 0
    %vm670 = vcmp.lt.s32.totalorder %v192, 192
    %vm671 = vcmp.lt.s32.totalorder %v665, 192
    %v672 = vsel %vm670, 0.5, 1.0
    %v673 = vsel %vm671, 0.5, 1.0
    %v674 = vsel %vm670, 0.5, 0.0
    %v675 = vsel %vm671, 0.5, 0.0
    %v676 = vsel %vm668, 1, 0
    %v677 = vsel %vm669, 1, 0
    %vm678 = vcmp.eq.s32.totalorder %v676, 1
    %vm679 = vcmp.eq.s32.totalorder %v677, 1
    %v684 = vrot.slane %v645, 7
    %vm685 = vcmask 1041409
    %v686 = vsel %vm685, %v684, %v639
    %v687 = vrot.slane %v647, 7
    %v688 = vsel %vm685, %v687, %v641
    %v691 = vrot.slane %v639, 7
    %v692 = vrot.slane %v645, 6
    %v693 = vsel %vm685, %v692, %v691
    %v694 = vrot.slane %v641, 7
    %v695 = vrot.slane %v647, 6
    %v696 = vsel %vm685, %v695, %v694
    %v699 = vsel %vm678, %v686, %v693
    %v700 = vsel %vm679, %v688, %v696
    %vm701 = vcmask 523264
    %v703 = vsel %vm701, 0.0, 0
    %705 = vmatprep.subr.mxu0 0.0
    %706 = vmatpush1.msra.mxu0 0.0
    %707 = vmatprep.subr.mxu0 0.0
    %708 = vmatpush1.msra.mxu0 0.0
    %709 = vmatprep.subr.mxu0 0.0
    %710 = vmatpush1.msra.mxu0 0.0
    %711 = vmatprep.subr.mxu0 0.0
    %712 = vmatpush1.msra.mxu0 0.0
    %713 = vmatprep.subr.mxu0 0.0
    %714 = vmatpush1.msra.mxu0 0.0
    %715 = vmatprep.subr.mxu0 0.0
    %716 = vmatpush1.msra.mxu0 0.0
    %717 = vmatprep.subr.mxu0 0.0
    %718 = vmatpush1.msra.mxu0 0.0
    %719 = vmatprep.subr.mxu0 0.0
    %720 = vmatpush1.msra.mxu0 0.0
    %721 = vmatprep.subr.mxu0 %v664
    %722 = vmatpush1.msra.mxu0 %v663
    %723 = vmatprep.subr.mxu0 %v662
    %724 = vmatpush1.msra.mxu0 %v661
    %725 = vmatprep.subr.mxu0 %v660
    %726 = vmatpush1.msra.mxu0 %v659
    %727 = vmatprep.subr.mxu0 %v658
    %728 = vmatpush1.msra.mxu0 %v657
    %729 = vmatprep.subr.mxu0 %v656
    %730 = vmatpush1.msra.mxu0 %v655
    %731 = vmatprep.subr.mxu0 %v654
    %732 = vmatpush1.msra.mxu0 %v653
    %733 = vmatprep.subr.mxu0 %v652
    %734 = vmatpush1.msra.mxu0 %v651
    %735 = vmatprep.subr.mxu0 %v650
    %736 = vmatpush1.msra.mxu0 %v649
    %737 = vmatprep.subr.mxu0 0.0
    %738 = vmatpush2.msra.mxu0 0.0
    %739 = vmatprep.subr.mxu0 0.0
    %740 = vmatpush2.msra.mxu0 0.0
    %741 = vmatprep.subr.mxu0 0.0
    %742 = vmatpush2.msra.mxu0 0.0
    %743 = vmatprep.subr.mxu0 0.0
    %744 = vmatpush2.msra.mxu0 0.0
    %745 = vmatprep.subr.mxu0 0.0
    %746 = vmatpush2.msra.mxu0 0.0
    %747 = vmatprep.subr.mxu0 0.0
    %748 = vmatpush2.msra.mxu0 0.0
    %749 = vmatprep.subr.mxu0 0.0
    %750 = vmatpush2.msra.mxu0 0.0
    %751 = vmatprep.subr.mxu0 0.0
    %752 = vmatpush2.msra.mxu0 0.0
    %753 = vmatprep.subr.mxu0 0.0
    %754 = vmatpush2.msra.mxu0 0.0
    %755 = vmatprep.subr.mxu0 0.0
    %756 = vmatpush2.msra.mxu0 0.0
    %757 = vmatprep.subr.mxu0 0.0
    %758 = vmatpush2.msra.mxu0 0.0
    %759 = vmatprep.subr.mxu0 0.0
    %760 = vmatpush2.msra.mxu0 0.0
    %761 = vmatprep.subr.mxu0 0.0
    %762 = vmatpush2.msra.mxu0 0.0
    %763 = vmatprep.subr.mxu0 0.0
    %764 = vmatpush2.msra.mxu0 0.0
    %765 = vmatprep.subr.mxu0 0.0
    %766 = vmatpush2.msra.mxu0 0.0
    %767 = vmatprep.subr.mxu0 0.0
    %768 = vmatpush2.msra.mxu0 0.0
    %769 = vmatprep.mubr.f32.mxu0 0.0
    %770 = vmatmul.mubr.f32.gmra.mxu0 %v703
    %v771 = vpop.f32.mrf.mxu0
    %v772 = vadd.f32 0.0, %v771
    %v773 = vpop.f32.mrf.mxu0
    %v774 = vadd.f32 0.0, %v773
    %775 = vdwg.mxu0
    %v776 = vadd.f32 %v699, %v772
    %v777 = vadd.f32 %v700, %v774
    %v778 = vtanh.pop %v776
    %v779 = vtanh.pop %v777
    %v780 = vmul.f32 %v778, %v672
    %v781 = vmul.f32 %v779, %v673
    %v782 = vadd.f32 %v780, %v674
    %v783 = vadd.f32 %v781, %v675
    %v784 = vmul.f32 %v782, 0.0
    %786 = vrot.lane.b32.xlu0 %v783, 64
    %v787 = vpop.permute.xlu0 %786
    %v789 = vmul.f32 %v782, %v787
    %791 = vrot.lane.b32.xlu0 %v789, 64
    %v792 = vpop.permute.xlu0 %791
    %v794 = vadd.f32 %v784, %v792
    %v795 = vtanh.pop %v794
    %797 = vrot.lane.b32.xlu0 %v795, 64
    %v798 = vpop.permute.xlu0 %797
    %v800 = vmul.f32 %v783, %v798
    %v801 = vrot.slane %v639, 1
    %v802 = vsel %vm685, %v645, %v801
    %v803 = vrot.slane %v641, 1
    %v804 = vsel %vm685, %v647, %v803
    %v807 = vrot.slane %v639, 6
    %v808 = vrot.slane %v645, 5
    %v809 = vsel %vm685, %v808, %v807
    %v810 = vrot.slane %v641, 6
    %v811 = vrot.slane %v647, 5
    %v812 = vsel %vm685, %v811, %v810
    %v815 = vsel %vm678, %v802, %v809
    %v816 = vsel %vm679, %v804, %v812
    %v818 = vsel %vm701, %v800, 0
    %820 = vmatprep.subr.mxu0 0.0
    %821 = vmatpush1.msra.mxu0 0.0
    %822 = vmatprep.subr.mxu0 0.0
    %823 = vmatpush1.msra.mxu0 0.0
    %824 = vmatprep.subr.mxu0 0.0
    %825 = vmatpush1.msra.mxu0 0.0
    %826 = vmatprep.subr.mxu0 0.0
    %827 = vmatpush1.msra.mxu0 0.0
    %828 = vmatprep.subr.mxu0 0.0
    %829 = vmatpush1.msra.mxu0 0.0
    %830 = vmatprep.subr.mxu0 0.0
    %831 = vmatpush1.msra.mxu0 0.0
    %832 = vmatprep.subr.mxu0 0.0
    %833 = vmatpush1.msra.mxu0 0.0
    %834 = vmatprep.subr.mxu0 0.0
    %835 = vmatpush1.msra.mxu0 0.0
    %836 = vmatprep.subr.mxu0 %v664
    %837 = vmatpush1.msra.mxu0 %v663
    %838 = vmatprep.subr.mxu0 %v662
    %839 = vmatpush1.msra.mxu0 %v661
    %840 = vmatprep.subr.mxu0 %v660
    %841 = vmatpush1.msra.mxu0 %v659
    %842 = vmatprep.subr.mxu0 %v658
    %843 = vmatpush1.msra.mxu0 %v657
    %844 = vmatprep.subr.mxu0 %v656
    %845 = vmatpush1.msra.mxu0 %v655
    %846 = vmatprep.subr.mxu0 %v654
    %847 = vmatpush1.msra.mxu0 %v653
    %848 = vmatprep.subr.mxu0 %v652
    %849 = vmatpush1.msra.mxu0 %v651
    %850 = vmatprep.subr.mxu0 %v650
    %851 = vmatpush1.msra.mxu0 %v649
    %852 = vmatprep.subr.mxu0 0.0
    %853 = vmatpush2.msra.mxu0 0.0
    %854 = vmatprep.subr.mxu0 0.0
    %855 = vmatpush2.msra.mxu0 0.0
    %856 = vmatprep.subr.mxu0 0.0
    %857 = vmatpush2.msra.mxu0 0.0
    %858 = vmatprep.subr.mxu0 0.0
    %859 = vmatpush2.msra.mxu0 0.0
    %860 = vmatprep.subr.mxu0 0.0
    %861 = vmatpush2.msra.mxu0 0.0
    %862 = vmatprep.subr.mxu0 0.0
    %863 = vmatpush2.msra.mxu0 0.0
    %864 = vmatprep.subr.mxu0 0.0
    %865 = vmatpush2.msra.mxu0 0.0
    %866 = vmatprep.subr.mxu0 0.0
    %867 = vmatpush2.msra.mxu0 0.0
    %868 = vmatprep.subr.mxu0 0.0
    %869 = vmatpush2.msra.mxu0 0.0
    %870 = vmatprep.subr.mxu0 0.0
    %871 = vmatpush2.msra.mxu0 0.0
    %872 = vmatprep.subr.mxu0 0.0
    %873 = vmatpush2.msra.mxu0 0.0
    %874 = vmatprep.subr.mxu0 0.0
    %875 = vmatpush2.msra.mxu0 0.0
    %876 = vmatprep.subr.mxu0 0.0
    %877 = vmatpush2.msra.mxu0 0.0
    %878 = vmatprep.subr.mxu0 0.0
    %879 = vmatpush2.msra.mxu0 0.0
    %880 = vmatprep.subr.mxu0 0.0
    %881 = vmatpush2.msra.mxu0 0.0
    %882 = vmatprep.subr.mxu0 0.0
    %883 = vmatpush2.msra.mxu0 0.0
    %884 = vmatprep.mubr.f32.mxu0 0.0
    %885 = vmatmul.mubr.f32.gmra.mxu0 %v818
    %v886 = vpop.f32.mrf.mxu0
    %v887 = vadd.f32 0.0, %v886
    %v888 = vpop.f32.mrf.mxu0
    %v889 = vadd.f32 0.0, %v888
    %890 = vdwg.mxu0
    %v891 = vadd.f32 %v815, %v887
    %v892 = vadd.f32 %v816, %v889
    %v893 = vtanh.pop %v891
    %v894 = vtanh.pop %v892
    %v895 = vmul.f32 %v893, %v672
    %v896 = vmul.f32 %v894, %v673
    %v897 = vadd.f32 %v895, %v674
    %v898 = vadd.f32 %v896, %v675
    %v899 = vmul.f32 %v897, %v794
    %901 = vrot.lane.b32.xlu0 %v898, 64
    %v902 = vpop.permute.xlu0 %901
    %v904 = vmul.f32 %v897, %v902
    %906 = vrot.lane.b32.xlu0 %v904, 64
    %v907 = vpop.permute.xlu0 %906
    %v909 = vadd.f32 %v899, %v907
    %v910 = vtanh.pop %v909
    %912 = vrot.lane.b32.xlu0 %v910, 64
    %v913 = vpop.permute.xlu0 %912
    %v915 = vmul.f32 %v898, %v913
    %v916 = vrot.slane %v639, 2
    %v917 = vrot.slane %v645, 1
    %v918 = vsel %vm685, %v917, %v916
    %v919 = vrot.slane %v641, 2
    %v920 = vrot.slane %v647, 1
    %v921 = vsel %vm685, %v920, %v919
    %v924 = vrot.slane %v639, 5
    %v925 = vrot.slane %v645, 4
    %v926 = vsel %vm685, %v925, %v924
    %v927 = vrot.slane %v641, 5
    %v928 = vrot.slane %v647, 4
    %v929 = vsel %vm685, %v928, %v927
    %v932 = vsel %vm678, %v918, %v926
    %v933 = vsel %vm679, %v921, %v929
    %v935 = vsel %vm701, %v915, 0
    %937 = vmatprep.subr.mxu0 0.0
    %938 = vmatpush1.msra.mxu0 0.0
    %939 = vmatprep.subr.mxu0 0.0
    %940 = vmatpush1.msra.mxu0 0.0
    %941 = vmatprep.subr.mxu0 0.0
    %942 = vmatpush1.msra.mxu0 0.0
    %943 = vmatprep.subr.mxu0 0.0
    %944 = vmatpush1.msra.mxu0 0.0
    %945 = vmatprep.subr.mxu0 0.0
    %946 = vmatpush1.msra.mxu0 0.0
    %947 = vmatprep.subr.mxu0 0.0
    %948 = vmatpush1.msra.mxu0 0.0
    %949 = vmatprep.subr.mxu0 0.0
    %950 = vmatpush1.msra.mxu0 0.0
    %951 = vmatprep.subr.mxu0 0.0
    %952 = vmatpush1.msra.mxu0 0.0
    %953 = vmatprep.subr.mxu0 %v664
    %954 = vmatpush1.msra.mxu0 %v663
    %955 = vmatprep.subr.mxu0 %v662
    %956 = vmatpush1.msra.mxu0 %v661
    %957 = vmatprep.subr.mxu0 %v660
    %958 = vmatpush1.msra.mxu0 %v659
    %959 = vmatprep.subr.mxu0 %v658
    %960 = vmatpush1.msra.mxu0 %v657
    %961 = vmatprep.subr.mxu0 %v656
    %962 = vmatpush1.msra.mxu0 %v655
    %963 = vmatprep.subr.mxu0 %v654
    %964 = vmatpush1.msra.mxu0 %v653
    %965 = vmatprep.subr.mxu0 %v652
    %966 = vmatpush1.msra.mxu0 %v651
    %967 = vmatprep.subr.mxu0 %v650
    %968 = vmatpush1.msra.mxu0 %v649
    %969 = vmatprep.subr.mxu0 0.0
    %970 = vmatpush2.msra.mxu0 0.0
    %971 = vmatprep.subr.mxu0 0.0
    %972 = vmatpush2.msra.mxu0 0.0
    %973 = vmatprep.subr.mxu0 0.0
    %974 = vmatpush2.msra.mxu0 0.0
    %975 = vmatprep.subr.mxu0 0.0
    %976 = vmatpush2.msra.mxu0 0.0
    %977 = vmatprep.subr.mxu0 0.0
    %978 = vmatpush2.msra.mxu0 0.0
    %979 = vmatprep.subr.mxu0 0.0
    %980 = vmatpush2.msra.mxu0 0.0
    %981 = vmatprep.subr.mxu0 0.0
    %982 = vmatpush2.msra.mxu0 0.0
    %983 = vmatprep.subr.mxu0 0.0
    %984 = vmatpush2.msra.mxu0 0.0
    %985 = vmatprep.subr.mxu0 0.0
    %986 = vmatpush2.msra.mxu0 0.0
    %987 = vmatprep.subr.mxu0 0.0
    %988 = vmatpush2.msra.mxu0 0.0
    %989 = vmatprep.subr.mxu0 0.0
    %990 = vmatpush2.msra.mxu0 0.0
    %991 = vmatprep.subr.mxu0 0.0
    %992 = vmatpush2.msra.mxu0 0.0
    %993 = vmatprep.subr.mxu0 0.0
    %994 = vmatpush2.msra.mxu0 0.0
    %995 = vmatprep.subr.mxu0 0.0
    %996 = vmatpush2.msra.mxu0 0.0
    %997 = vmatprep.subr.mxu0 0.0
    %998 = vmatpush2.msra.mxu0 0.0
    %999 = vmatprep.subr.mxu0 0.0
    %1000 = vmatpush2.msra.mxu0 0.0
    %1001 = vmatprep.mubr.f32.mxu0 0.0
    %1002 = vmatmul.mubr.f32.gmra.mxu0 %v935
    %v1003 = vpop.f32.mrf.mxu0
    %v1004 = vadd.f32 0.0, %v1003
    %v1005 = vpop.f32.mrf.mxu0
    %v1006 = vadd.f32 0.0, %v1005
    %1007 = vdwg.mxu0
    %v1008 = vadd.f32 %v932, %v1004
    %v1009 = vadd.f32 %v933, %v1006
    %v1010 = vtanh.pop %v1008
    %v1011 = vtanh.pop %v1009
    %v1012 = vmul.f32 %v1010, %v672
    %v1013 = vmul.f32 %v1011, %v673
    %v1014 = vadd.f32 %v1012, %v674
    %v1015 = vadd.f32 %v1013, %v675
    %v1016 = vmul.f32 %v1014, %v909
    %1018 = vrot.lane.b32.xlu0 %v1015, 64
    %v1019 = vpop.permute.xlu0 %1018
    %v1021 = vmul.f32 %v1014, %v1019
    %1023 = vrot.lane.b32.xlu0 %v1021, 64
    %v1024 = vpop.permute.xlu0 %1023
    %v1026 = vadd.f32 %v1016, %v1024
    %v1027 = vtanh.pop %v1026
    %1029 = vrot.lane.b32.xlu0 %v1027, 64
    %v1030 = vpop.permute.xlu0 %1029
    %v1032 = vmul.f32 %v1015, %v1030
    %v1033 = vrot.slane %v639, 3
    %v1034 = vrot.slane %v645, 2
    %v1035 = vsel %vm685, %v1034, %v1033
    %v1036 = vrot.slane %v641, 3
    %v1037 = vrot.slane %v647, 2
    %v1038 = vsel %vm685, %v1037, %v1036
    %v1041 = vrot.slane %v639, 4
    %v1042 = vrot.slane %v645, 3
    %v1043 = vsel %vm685, %v1042, %v1041
    %v1044 = vrot.slane %v641, 4
    %v1045 = vrot.slane %v647, 3
    %v1046 = vsel %vm685, %v1045, %v1044
    %v1049 = vsel %vm678, %v1035, %v1043
    %v1050 = vsel %vm679, %v1038, %v1046
    %v1052 = vsel %vm701, %v1032, 0
    %1054 = vmatprep.subr.mxu0 0.0
    %1055 = vmatpush1.msra.mxu0 0.0
    %1056 = vmatprep.subr.mxu0 0.0
    %1057 = vmatpush1.msra.mxu0 0.0
    %1058 = vmatprep.subr.mxu0 0.0
    %1059 = vmatpush1.msra.mxu0 0.0
    %1060 = vmatprep.subr.mxu0 0.0
    %1061 = vmatpush1.msra.mxu0 0.0
    %1062 = vmatprep.subr.mxu0 0.0
    %1063 = vmatpush1.msra.mxu0 0.0
    %1064 = vmatprep.subr.mxu0 0.0
    %1065 = vmatpush1.msra.mxu0 0.0
    %1066 = vmatprep.subr.mxu0 0.0
    %1067 = vmatpush1.msra.mxu0 0.0
    %1068 = vmatprep.subr.mxu0 0.0
    %1069 = vmatpush1.msra.mxu0 0.0
    %1070 = vmatprep.subr.mxu0 %v664
    %1071 = vmatpush1.msra.mxu0 %v663
    %1072 = vmatprep.subr.mxu0 %v662
    %1073 = vmatpush1.msra.mxu0 %v661
    %1074 = vmatprep.subr.mxu0 %v660
    %1075 = vmatpush1.msra.mxu0 %v659
    %1076 = vmatprep.subr.mxu0 %v658
    %1077 = vmatpush1.msra.mxu0 %v657
    %1078 = vmatprep.subr.mxu0 %v656
    %1079 = vmatpush1.msra.mxu0 %v655
    %1080 = vmatprep.subr.mxu0 %v654
    %1081 = vmatpush1.msra.mxu0 %v653
    %1082 = vmatprep.subr.mxu0 %v652
    %1083 = vmatpush1.msra.mxu0 %v651
    %1084 = vmatprep.subr.mxu0 %v650
    %1085 = vmatpush1.msra.mxu0 %v649
    %1086 = vmatprep.subr.mxu0 0.0
    %1087 = vmatpush2.msra.mxu0 0.0
    %1088 = vmatprep.subr.mxu0 0.0
    %1089 = vmatpush2.msra.mxu0 0.0
    %1090 = vmatprep.subr.mxu0 0.0
    %1091 = vmatpush2.msra.mxu0 0.0
    %1092 = vmatprep.subr.mxu0 0.0
    %1093 = vmatpush2.msra.mxu0 0.0
    %1094 = vmatprep.subr.mxu0 0.0
    %1095 = vmatpush2.msra.mxu0 0.0
    %1096 = vmatprep.subr.mxu0 0.0
    %1097 = vmatpush2.msra.mxu0 0.0
    %1098 = vmatprep.subr.mxu0 0.0
    %1099 = vmatpush2.msra.mxu0 0.0
    %1100 = vmatprep.subr.mxu0 0.0
    %1101 = vmatpush2.msra.mxu0 0.0
    %1102 = vmatprep.subr.mxu0 0.0
    %1103 = vmatpush2.msra.mxu0 0.0
    %1104 = vmatprep.subr.mxu0 0.0
    %1105 = vmatpush2.msra.mxu0 0.0
    %1106 = vmatprep.subr.mxu0 0.0
    %1107 = vmatpush2.msra.mxu0 0.0
    %1108 = vmatprep.subr.mxu0 0.0
    %1109 = vmatpush2.msra.mxu0 0.0
    %1110 = vmatprep.subr.mxu0 0.0
    %1111 = vmatpush2.msra.mxu0 0.0
    %1112 = vmatprep.subr.mxu0 0.0
    %1113 = vmatpush2.msra.mxu0 0.0
    %1114 = vmatprep.subr.mxu0 0.0
    %1115 = vmatpush2.msra.mxu0 0.0
    %1116 = vmatprep.subr.mxu0 0.0
    %1117 = vmatpush2.msra.mxu0 0.0
    %1118 = vmatprep.mubr.f32.mxu0 0.0
    %1119 = vmatmul.mubr.f32.gmra.mxu0 %v1052
    %v1120 = vpop.f32.mrf.mxu0
    %v1121 = vadd.f32 0.0, %v1120
    %v1122 = vpop.f32.mrf.mxu0
    %v1123 = vadd.f32 0.0, %v1122
    %1124 = vdwg.mxu0
    %v1125 = vadd.f32 %v1049, %v1121
    %v1126 = vadd.f32 %v1050, %v1123
    %v1127 = vtanh.pop %v1125
    %v1128 = vtanh.pop %v1126
    %v1129 = vmul.f32 %v1127, %v672
    %v1130 = vmul.f32 %v1128, %v673
    %v1131 = vadd.f32 %v1129, %v674
    %v1132 = vadd.f32 %v1130, %v675
    %v1133 = vmul.f32 %v1131, %v1026
    %1135 = vrot.lane.b32.xlu0 %v1132, 64
    %v1136 = vpop.permute.xlu0 %1135
    %v1138 = vmul.f32 %v1131, %v1136
    %1140 = vrot.lane.b32.xlu0 %v1138, 64
    %v1141 = vpop.permute.xlu0 %1140
    %v1143 = vadd.f32 %v1133, %v1141
    %v1144 = vtanh.pop %v1143
    %1146 = vrot.lane.b32.xlu0 %v1144, 64
    %v1147 = vpop.permute.xlu0 %1146
    %v1149 = vmul.f32 %v1132, %v1147
    %v1150 = vsel %vm678, %v1043, %v1035
    %v1151 = vsel %vm679, %v1046, %v1038
    %v1153 = vsel %vm701, %v1149, 0
    %1155 = vmatprep.subr.mxu0 0.0
    %1156 = vmatpush1.msra.mxu0 0.0
    %1157 = vmatprep.subr.mxu0 0.0
    %1158 = vmatpush1.msra.mxu0 0.0
    %1159 = vmatprep.subr.mxu0 0.0
    %1160 = vmatpush1.msra.mxu0 0.0
    %1161 = vmatprep.subr.mxu0 0.0
    %1162 = vmatpush1.msra.mxu0 0.0
    %1163 = vmatprep.subr.mxu0 0.0
    %1164 = vmatpush1.msra.mxu0 0.0
    %1165 = vmatprep.subr.mxu0 0.0
    %1166 = vmatpush1.msra.mxu0 0.0
    %1167 = vmatprep.subr.mxu0 0.0
    %1168 = vmatpush1.msra.mxu0 0.0
    %1169 = vmatprep.subr.mxu0 0.0
    %1170 = vmatpush1.msra.mxu0 0.0
    %1171 = vmatprep.subr.mxu0 %v664
    %1172 = vmatpush1.msra.mxu0 %v663
    %1173 = vmatprep.subr.mxu0 %v662
    %1174 = vmatpush1.msra.mxu0 %v661
    %1175 = vmatprep.subr.mxu0 %v660
    %1176 = vmatpush1.msra.mxu0 %v659
    %1177 = vmatprep.subr.mxu0 %v658
    %1178 = vmatpush1.msra.mxu0 %v657
    %1179 = vmatprep.subr.mxu0 %v656
    %1180 = vmatpush1.msra.mxu0 %v655
    %1181 = vmatprep.subr.mxu0 %v654
    %1182 = vmatpush1.msra.mxu0 %v653
    %1183 = vmatprep.subr.mxu0 %v652
    %1184 = vmatpush1.msra.mxu0 %v651
    %1185 = vmatprep.subr.mxu0 %v650
    %1186 = vmatpush1.msra.mxu0 %v649
    %1187 = vmatprep.subr.mxu0 0.0
    %1188 = vmatpush2.msra.mxu0 0.0
    %1189 = vmatprep.subr.mxu0 0.0
    %1190 = vmatpush2.msra.mxu0 0.0
    %1191 = vmatprep.subr.mxu0 0.0
    %1192 = vmatpush2.msra.mxu0 0.0
    %1193 = vmatprep.subr.mxu0 0.0
    %1194 = vmatpush2.msra.mxu0 0.0
    %1195 = vmatprep.subr.mxu0 0.0
    %1196 = vmatpush2.msra.mxu0 0.0
    %1197 = vmatprep.subr.mxu0 0.0
    %1198 = vmatpush2.msra.mxu0 0.0
    %1199 = vmatprep.subr.mxu0 0.0
    %1200 = vmatpush2.msra.mxu0 0.0
    %1201 = vmatprep.subr.mxu0 0.0
    %1202 = vmatpush2.msra.mxu0 0.0
    %1203 = vmatprep.subr.mxu0 0.0
    %1204 = vmatpush2.msra.mxu0 0.0
    %1205 = vmatprep.subr.mxu0 0.0
    %1206 = vmatpush2.msra.mxu0 0.0
    %1207 = vmatprep.subr.mxu0 0.0
    %1208 = vmatpush2.msra.mxu0 0.0
    %1209 = vmatprep.subr.mxu0 0.0
    %1210 = vmatpush2.msra.mxu0 0.0
    %1211 = vmatprep.subr.mxu0 0.0
    %1212 = vmatpush2.msra.mxu0 0.0
    %1213 = vmatprep.subr.mxu0 0.0
    %1214 = vmatpush2.msra.mxu0 0.0
    %1215 = vmatprep.subr.mxu0 0.0
    %1216 = vmatpush2.msra.mxu0 0.0
    %1217 = vmatprep.subr.mxu0 0.0
    %1218 = vmatpush2.msra.mxu0 0.0
    %1219 = vmatprep.mubr.f32.mxu0 0.0
    %1220 = vmatmul.mubr.f32.gmra.mxu0 %v1153
    %v1221 = vpop.f32.mrf.mxu0
    %v1222 = vadd.f32 0.0, %v1221
    %v1223 = vpop.f32.mrf.mxu0
    %v1224 = vadd.f32 0.0, %v1223
    %1225 = vdwg.mxu0
    %v1226 = vadd.f32 %v1150, %v1222
    %v1227 = vadd.f32 %v1151, %v1224
    %v1228 = vtanh.pop %v1226
    %v1229 = vtanh.pop %v1227
    %v1230 = vmul.f32 %v1228, %v672
    %v1231 = vmul.f32 %v1229, %v673
    %v1232 = vadd.f32 %v1230, %v674
    %v1233 = vadd.f32 %v1231, %v675
    %v1234 = vmul.f32 %v1232, %v1143
    %1236 = vrot.lane.b32.xlu0 %v1233, 64
    %v1237 = vpop.permute.xlu0 %1236
    %v1239 = vmul.f32 %v1232, %v1237
    %1241 = vrot.lane.b32.xlu0 %v1239, 64
    %v1242 = vpop.permute.xlu0 %1241
    %v1244 = vadd.f32 %v1234, %v1242
    %v1245 = vtanh.pop %v1244
    %1247 = vrot.lane.b32.xlu0 %v1245, 64
    %v1248 = vpop.permute.xlu0 %1247
    %v1250 = vmul.f32 %v1233, %v1248
    %v1251 = vsel %vm678, %v926, %v918
    %v1252 = vsel %vm679, %v929, %v921
    %v1254 = vsel %vm701, %v1250, 0
    %1256 = vmatprep.subr.mxu0 0.0
    %1257 = vmatpush1.msra.mxu0 0.0
    %1258 = vmatprep.subr.mxu0 0.0
    %1259 = vmatpush1.msra.mxu0 0.0
    %1260 = vmatprep.subr.mxu0 0.0
    %1261 = vmatpush1.msra.mxu0 0.0
    %1262 = vmatprep.subr.mxu0 0.0
    %1263 = vmatpush1.msra.mxu0 0.0
    %1264 = vmatprep.subr.mxu0 0.0
    %1265 = vmatpush1.msra.mxu0 0.0
    %1266 = vmatprep.subr.mxu0 0.0
    %1267 = vmatpush1.msra.mxu0 0.0
    %1268 = vmatprep.subr.mxu0 0.0
    %1269 = vmatpush1.msra.mxu0 0.0
    %1270 = vmatprep.subr.mxu0 0.0
    %1271 = vmatpush1.msra.mxu0 0.0
    %1272 = vmatprep.subr.mxu0 %v664
    %1273 = vmatpush1.msra.mxu0 %v663
    %1274 = vmatprep.subr.mxu0 %v662
    %1275 = vmatpush1.msra.mxu0 %v661
    %1276 = vmatprep.subr.mxu0 %v660
    %1277 = vmatpush1.msra.mxu0 %v659
    %1278 = vmatprep.subr.mxu0 %v658
    %1279 = vmatpush1.msra.mxu0 %v657
    %1280 = vmatprep.subr.mxu0 %v656
    %1281 = vmatpush1.msra.mxu0 %v655
    %1282 = vmatprep.subr.mxu0 %v654
    %1283 = vmatpush1.msra.mxu0 %v653
    %1284 = vmatprep.subr.mxu0 %v652
    %1285 = vmatpush1.msra.mxu0 %v651
    %1286 = vmatprep.subr.mxu0 %v650
    %1287 = vmatpush1.msra.mxu0 %v649
    %1288 = vmatprep.subr.mxu0 0.0
    %1289 = vmatpush2.msra.mxu0 0.0
    %1290 = vmatprep.subr.mxu0 0.0
    %1291 = vmatpush2.msra.mxu0 0.0
    %1292 = vmatprep.subr.mxu0 0.0
    %1293 = vmatpush2.msra.mxu0 0.0
    %1294 = vmatprep.subr.mxu0 0.0
    %1295 = vmatpush2.msra.mxu0 0.0
    %1296 = vmatprep.subr.mxu0 0.0
    %1297 = vmatpush2.msra.mxu0 0.0
    %1298 = vmatprep.subr.mxu0 0.0
    %1299 = vmatpush2.msra.mxu0 0.0
    %1300 = vmatprep.subr.mxu0 0.0
    %1301 = vmatpush2.msra.mxu0 0.0
    %1302 = vmatprep.subr.mxu0 0.0
    %1303 = vmatpush2.msra.mxu0 0.0
    %1304 = vmatprep.subr.mxu0 0.0
    %1305 = vmatpush2.msra.mxu0 0.0
    %1306 = vmatprep.subr.mxu0 0.0
    %1307 = vmatpush2.msra.mxu0 0.0
    %1308 = vmatprep.subr.mxu0 0.0
    %1309 = vmatpush2.msra.mxu0 0.0
    %1310 = vmatprep.subr.mxu0 0.0
    %1311 = vmatpush2.msra.mxu0 0.0
    %1312 = vmatprep.subr.mxu0 0.0
    %1313 = vmatpush2.msra.mxu0 0.0
    %1314 = vmatprep.subr.mxu0 0.0
    %1315 = vmatpush2.msra.mxu0 0.0
    %1316 = vmatprep.subr.mxu0 0.0
    %1317 = vmatpush2.msra.mxu0 0.0
    %1318 = vmatprep.subr.mxu0 0.0
    %1319 = vmatpush2.msra.mxu0 0.0
    %1320 = vmatprep.mubr.f32.mxu0 0.0
    %1321 = vmatmul.mubr.f32.gmra.mxu0 %v1254
    %v1322 = vpop.f32.mrf.mxu0
    %v1323 = vadd.f32 0.0, %v1322
    %v1324 = vpop.f32.mrf.mxu0
    %v1325 = vadd.f32 0.0, %v1324
    %1326 = vdwg.mxu0
    %v1327 = vadd.f32 %v1251, %v1323
    %v1328 = vadd.f32 %v1252, %v1325
    %v1329 = vtanh.pop %v1327
    %v1330 = vtanh.pop %v1328
    %v1331 = vmul.f32 %v1329, %v672
    %v1332 = vmul.f32 %v1330, %v673
    %v1333 = vadd.f32 %v1331, %v674
    %v1334 = vadd.f32 %v1332, %v675
    %v1335 = vmul.f32 %v1333, %v1244
    %1337 = vrot.lane.b32.xlu0 %v1334, 64
    %v1338 = vpop.permute.xlu0 %1337
    %v1340 = vmul.f32 %v1333, %v1338
    %1342 = vrot.lane.b32.xlu0 %v1340, 64
    %v1343 = vpop.permute.xlu0 %1342
    %v1345 = vadd.f32 %v1335, %v1343
    %v1346 = vtanh.pop %v1345
    %1348 = vrot.lane.b32.xlu0 %v1346, 64
    %v1349 = vpop.permute.xlu0 %1348
    %v1351 = vmul.f32 %v1334, %v1349
    %v1352 = vsel %vm678, %v809, %v802
    %v1353 = vsel %vm679, %v812, %v804
    %v1355 = vsel %vm701, %v1351, 0
    %1357 = vmatprep.subr.mxu0 0.0
    %1358 = vmatpush1.msra.mxu0 0.0
    %1359 = vmatprep.subr.mxu0 0.0
    %1360 = vmatpush1.msra.mxu0 0.0
    %1361 = vmatprep.subr.mxu0 0.0
    %1362 = vmatpush1.msra.mxu0 0.0
    %1363 = vmatprep.subr.mxu0 0.0
    %1364 = vmatpush1.msra.mxu0 0.0
    %1365 = vmatprep.subr.mxu0 0.0
    %1366 = vmatpush1.msra.mxu0 0.0
    %1367 = vmatprep.subr.mxu0 0.0
    %1368 = vmatpush1.msra.mxu0 0.0
    %1369 = vmatprep.subr.mxu0 0.0
    %1370 = vmatpush1.msra.mxu0 0.0
    %1371 = vmatprep.subr.mxu0 0.0
    %1372 = vmatpush1.msra.mxu0 0.0
    %1373 = vmatprep.subr.mxu0 %v664
    %1374 = vmatpush1.msra.mxu0 %v663
    %1375 = vmatprep.subr.mxu0 %v662
    %1376 = vmatpush1.msra.mxu0 %v661
    %1377 = vmatprep.subr.mxu0 %v660
    %1378 = vmatpush1.msra.mxu0 %v659
    %1379 = vmatprep.subr.mxu0 %v658
    %1380 = vmatpush1.msra.mxu0 %v657
    %1381 = vmatprep.subr.mxu0 %v656
    %1382 = vmatpush1.msra.mxu0 %v655
    %1383 = vmatprep.subr.mxu0 %v654
    %1384 = vmatpush1.msra.mxu0 %v653
    %1385 = vmatprep.subr.mxu0 %v652
    %1386 = vmatpush1.msra.mxu0 %v651
    %1387 = vmatprep.subr.mxu0 %v650
    %1388 = vmatpush1.msra.mxu0 %v649
    %1389 = vmatprep.subr.mxu0 0.0
    %1390 = vmatpush2.msra.mxu0 0.0
    %1391 = vmatprep.subr.mxu0 0.0
    %1392 = vmatpush2.msra.mxu0 0.0
    %1393 = vmatprep.subr.mxu0 0.0
    %1394 = vmatpush2.msra.mxu0 0.0
    %1395 = vmatprep.subr.mxu0 0.0
    %1396 = vmatpush2.msra.mxu0 0.0
    %1397 = vmatprep.subr.mxu0 0.0
    %1398 = vmatpush2.msra.mxu0 0.0
    %1399 = vmatprep.subr.mxu0 0.0
    %1400 = vmatpush2.msra.mxu0 0.0
    %1401 = vmatprep.subr.mxu0 0.0
    %1402 = vmatpush2.msra.mxu0 0.0
    %1403 = vmatprep.subr.mxu0 0.0
    %1404 = vmatpush2.msra.mxu0 0.0
    %1405 = vmatprep.subr.mxu0 0.0
    %1406 = vmatpush2.msra.mxu0 0.0
    %1407 = vmatprep.subr.mxu0 0.0
    %1408 = vmatpush2.msra.mxu0 0.0
    %1409 = vmatprep.subr.mxu0 0.0
    %1410 = vmatpush2.msra.mxu0 0.0
    %1411 = vmatprep.subr.mxu0 0.0
    %1412 = vmatpush2.msra.mxu0 0.0
    %1413 = vmatprep.subr.mxu0 0.0
    %1414 = vmatpush2.msra.mxu0 0.0
    %1415 = vmatprep.subr.mxu0 0.0
    %1416 = vmatpush2.msra.mxu0 0.0
    %1417 = vmatprep.subr.mxu0 0.0
    %1418 = vmatpush2.msra.mxu0 0.0
    %1419 = vmatprep.subr.mxu0 0.0
    %1420 = vmatpush2.msra.mxu0 0.0
    %1421 = vmatprep.mubr.f32.mxu0 0.0
    %1422 = vmatmul.mubr.f32.gmra.mxu0 %v1355
    %v1423 = vpop.f32.mrf.mxu0
    %v1424 = vadd.f32 0.0, %v1423
    %v1425 = vpop.f32.mrf.mxu0
    %v1426 = vadd.f32 0.0, %v1425
    %1427 = vdwg.mxu0
    %v1428 = vadd.f32 %v1352, %v1424
    %v1429 = vadd.f32 %v1353, %v1426
    %v1430 = vtanh.pop %v1428
    %v1431 = vtanh.pop %v1429
    %v1432 = vmul.f32 %v1430, %v672
    %v1433 = vmul.f32 %v1431, %v673
    %v1434 = vadd.f32 %v1432, %v674
    %v1435 = vadd.f32 %v1433, %v675
    %v1436 = vmul.f32 %v1434, %v1345
    %1438 = vrot.lane.b32.xlu0 %v1435, 64
    %v1439 = vpop.permute.xlu0 %1438
    %v1441 = vmul.f32 %v1434, %v1439
    %1443 = vrot.lane.b32.xlu0 %v1441, 64
    %v1444 = vpop.permute.xlu0 %1443
    %v1446 = vadd.f32 %v1436, %v1444
    %v1447 = vtanh.pop %v1446
    %1449 = vrot.lane.b32.xlu0 %v1447, 64
    %v1450 = vpop.permute.xlu0 %1449
    %v1452 = vmul.f32 %v1435, %v1450
    %v1453 = vsel %vm678, %v693, %v686
    %v1454 = vsel %vm679, %v696, %v688
    %v1456 = vsel %vm701, %v1452, 0
    %1458 = vmatprep.subr.mxu0 0.0
    %1459 = vmatpush1.msra.mxu0 0.0
    %1460 = vmatprep.subr.mxu0 0.0
    %1461 = vmatpush1.msra.mxu0 0.0
    %1462 = vmatprep.subr.mxu0 0.0
    %1463 = vmatpush1.msra.mxu0 0.0
    %1464 = vmatprep.subr.mxu0 0.0
    %1465 = vmatpush1.msra.mxu0 0.0
    %1466 = vmatprep.subr.mxu0 0.0
    %1467 = vmatpush1.msra.mxu0 0.0
    %1468 = vmatprep.subr.mxu0 0.0
    %1469 = vmatpush1.msra.mxu0 0.0
    %1470 = vmatprep.subr.mxu0 0.0
    %1471 = vmatpush1.msra.mxu0 0.0
    %1472 = vmatprep.subr.mxu0 0.0
    %1473 = vmatpush1.msra.mxu0 0.0
    %1474 = vmatprep.subr.mxu0 %v664
    %1475 = vmatpush1.msra.mxu0 %v663
    %1476 = vmatprep.subr.mxu0 %v662
    %1477 = vmatpush1.msra.mxu0 %v661
    %1478 = vmatprep.subr.mxu0 %v660
    %1479 = vmatpush1.msra.mxu0 %v659
    %1480 = vmatprep.subr.mxu0 %v658
    %1481 = vmatpush1.msra.mxu0 %v657
    %1482 = vmatprep.subr.mxu0 %v656
    %1483 = vmatpush1.msra.mxu0 %v655
    %1484 = vmatprep.subr.mxu0 %v654
    %1485 = vmatpush1.msra.mxu0 %v653
    %1486 = vmatprep.subr.mxu0 %v652
    %1487 = vmatpush1.msra.mxu0 %v651
    %1488 = vmatprep.subr.mxu0 %v650
    %1489 = vmatpush1.msra.mxu0 %v649
    %1490 = vmatprep.subr.mxu0 0.0
    %1491 = vmatpush2.msra.mxu0 0.0
    %1492 = vmatprep.subr.mxu0 0.0
    %1493 = vmatpush2.msra.mxu0 0.0
    %1494 = vmatprep.subr.mxu0 0.0
    %1495 = vmatpush2.msra.mxu0 0.0
    %1496 = vmatprep.subr.mxu0 0.0
    %1497 = vmatpush2.msra.mxu0 0.0
    %1498 = vmatprep.subr.mxu0 0.0
    %1499 = vmatpush2.msra.mxu0 0.0
    %1500 = vmatprep.subr.mxu0 0.0
    %1501 = vmatpush2.msra.mxu0 0.0
    %1502 = vmatprep.subr.mxu0 0.0
    %1503 = vmatpush2.msra.mxu0 0.0
    %1504 = vmatprep.subr.mxu0 0.0
    %1505 = vmatpush2.msra.mxu0 0.0
    %1506 = vmatprep.subr.mxu0 0.0
    %1507 = vmatpush2.msra.mxu0 0.0
    %1508 = vmatprep.subr.mxu0 0.0
    %1509 = vmatpush2.msra.mxu0 0.0
    %1510 = vmatprep.subr.mxu0 0.0
    %1511 = vmatpush2.msra.mxu0 0.0
    %1512 = vmatprep.subr.mxu0 0.0
    %1513 = vmatpush2.msra.mxu0 0.0
    %1514 = vmatprep.subr.mxu0 0.0
    %1515 = vmatpush2.msra.mxu0 0.0
    %1516 = vmatprep.subr.mxu0 0.0
    %1517 = vmatpush2.msra.mxu0 0.0
    %1518 = vmatprep.subr.mxu0 0.0
    %1519 = vmatpush2.msra.mxu0 0.0
    %1520 = vmatprep.subr.mxu0 0.0
    %1521 = vmatpush2.msra.mxu0 0.0
    %1522 = vmatprep.mubr.f32.mxu0 0.0
    %1523 = vmatmul.mubr.f32.gmra.mxu0 %v1456
    %v1524 = vpop.f32.mrf.mxu0
    %v1525 = vadd.f32 0.0, %v1524
    %v1526 = vpop.f32.mrf.mxu0
    %v1527 = vadd.f32 0.0, %v1526
    %1528 = vdwg.mxu0
    %v1529 = vadd.f32 %v1453, %v1525
    %v1530 = vadd.f32 %v1454, %v1527
    %v1531 = vtanh.pop %v1529
    %v1532 = vtanh.pop %v1530
    %v1533 = vmul.f32 %v1531, %v672
    %v1534 = vmul.f32 %v1532, %v673
    %v1535 = vadd.f32 %v1533, %v674
    %v1536 = vadd.f32 %v1534, %v675
    %v1537 = vmul.f32 %v1535, %v1446
    %1539 = vrot.lane.b32.xlu0 %v1536, 64
    %v1540 = vpop.permute.xlu0 %1539
    %v1542 = vmul.f32 %v1535, %v1540
    %1544 = vrot.lane.b32.xlu0 %v1542, 64
    %v1545 = vpop.permute.xlu0 %1544
    %v1547 = vadd.f32 %v1537, %v1545
    %v1548 = vtanh.pop %v1547
    %1550 = vrot.lane.b32.xlu0 %v1548, 64
    %v1551 = vpop.permute.xlu0 %1550
    %v1553 = vmul.f32 %v1536, %v1551
    %vm1554 = vcmask 261120
    %v1555 = vsel %vm1554, %v800, %v1553
    %v1556 = vsel %vm1554, %v915, %v1452
    %v1557 = vsel %vm1554, %v1032, %v1351
    %v1558 = vsel %vm1554, %v1149, %v1250
    %v1559 = vsel %vm1554, %v1250, %v1149
    %v1560 = vsel %vm1554, %v1351, %v1032
    %v1561 = vsel %vm1554, %v1452, %v915
    %v1562 = vsel %vm1554, %v1553, %v800
    %v1565 = vunpack.c.l.s4 1966171168
    %v1566 = vunpack.c.0.s8 %v1565
    %v1567 = vlaneseq
    %v1568 = vshrl.u32 %v1567, 7
    %v1569 = vsub.s32 %v1566, %v1568
    %v1570 = vrot.slane %v1555, %v1569
    %v1571 = vcombine.high %v1570, %v1570
    %v1573 = vunpack.c.l.s4 1966171168
    %v1574 = vunpack.c.0.s8 %v1573
    %v1575 = vlaneseq
    %v1576 = vshrl.u32 %v1575, 7
    %v1577 = vsub.s32 %v1574, %v1576
    %v1578 = vrot.slane %v1570, %v1577
    %v1580 = vunpack.c.l.s4 1966171168
    %v1581 = vunpack.c.0.s8 %v1580
    %v1582 = vlaneseq
    %v1583 = vshrl.u32 %v1582, 7
    %v1584 = vsub.s32 %v1581, %v1583
    %v1585 = vrot.slane %v1571, %v1584
    %v1590 = vunpack.c.l.s4 1966171168
    %v1591 = vunpack.c.0.s8 %v1590
    %v1592 = vlaneseq
    %v1593 = vshrl.u32 %v1592, 7
    %v1594 = vsub.s32 %v1591, %v1593
    %v1595 = vrot.slane %v1556, %v1594
    %v1596 = vcombine.high %v1595, %v1595
    %v1598 = vunpack.c.l.s4 1966171168
    %v1599 = vunpack.c.0.s8 %v1598
    %v1600 = vlaneseq
    %v1601 = vshrl.u32 %v1600, 7
    %v1602 = vsub.s32 %v1599, %v1601
    %v1603 = vrot.slane %v1595, %v1602
    %v1605 = vunpack.c.l.s4 1966171168
    %v1606 = vunpack.c.0.s8 %v1605
    %v1607 = vlaneseq
    %v1608 = vshrl.u32 %v1607, 7
    %v1609 = vsub.s32 %v1606, %v1608
    %v1610 = vrot.slane %v1596, %v1609
    %v1613 = vunpack.c.l.s4 1966171168
    %v1614 = vunpack.c.0.s8 %v1613
    %v1615 = vlaneseq
    %v1616 = vshrl.u32 %v1615, 7
    %v1617 = vsub.s32 %v1614, %v1616
    %v1618 = vrot.slane %v1557, %v1617
    %v1619 = vcombine.high %v1618, %v1618
    %v1621 = vunpack.c.l.s4 1966171168
    %v1622 = vunpack.c.0.s8 %v1621
    %v1623 = vlaneseq
    %v1624 = vshrl.u32 %v1623, 7
    %v1625 = vsub.s32 %v1622, %v1624
    %v1626 = vrot.slane %v1618, %v1625
    %v1628 = vunpack.c.l.s4 1966171168
    %v1629 = vunpack.c.0.s8 %v1628
    %v1630 = vlaneseq
    %v1631 = vshrl.u32 %v1630, 7
    %v1632 = vsub.s32 %v1629, %v1631
    %v1633 = vrot.slane %v1619, %v1632
    %v1636 = vunpack.c.l.s4 1966171168
    %v1637 = vunpack.c.0.s8 %v1636
    %v1638 = vlaneseq
    %v1639 = vshrl.u32 %v1638, 7
    %v1640 = vsub.s32 %v1637, %v1639
    %v1641 = vrot.slane %v1558, %v1640
    %v1642 = vcombine.high %v1641, %v1641
    %v1644 = vunpack.c.l.s4 1966171168
    %v1645 = vunpack.c.0.s8 %v1644
    %v1646 = vlaneseq
    %v1647 = vshrl.u32 %v1646, 7
    %v1648 = vsub.s32 %v1645, %v1647
    %v1649 = vrot.slane %v1641, %v1648
    %v1651 = vunpack.c.l.s4 1966171168
    %v1652 = vunpack.c.0.s8 %v1651
    %v1653 = vlaneseq
    %v1654 = vshrl.u32 %v1653, 7
    %v1655 = vsub.s32 %v1652, %v1654
    %v1656 = vrot.slane %v1642, %v1655
    %v1659 = vunpack.c.l.s4 1966171168
    %v1660 = vunpack.c.0.s8 %v1659
    %v1661 = vlaneseq
    %v1662 = vshrl.u32 %v1661, 7
    %v1663 = vsub.s32 %v1660, %v1662
    %v1664 = vrot.slane %v1559, %v1663
    %v1665 = vcombine.high %v1664, %v1664
    %v1667 = vunpack.c.l.s4 1966171168
    %v1668 = vunpack.c.0.s8 %v1667
    %v1669 = vlaneseq
    %v1670 = vshrl.u32 %v1669, 7
    %v1671 = vsub.s32 %v1668, %v1670
    %v1672 = vrot.slane %v1664, %v1671
    %v1674 = vunpack.c.l.s4 1966171168
    %v1675 = vunpack.c.0.s8 %v1674
    %v1676 = vlaneseq
    %v1677 = vshrl.u32 %v1676, 7
    %v1678 = vsub.s32 %v1675, %v1677
    %v1679 = vrot.slane %v1665, %v1678
    %v1682 = vunpack.c.l.s4 1966171168
    %v1683 = vunpack.c.0.s8 %v1682
    %v1684 = vlaneseq
    %v1685 = vshrl.u32 %v1684, 7
    %v1686 = vsub.s32 %v1683, %v1685
    %v1687 = vrot.slane %v1560, %v1686
    %v1688 = vcombine.high %v1687, %v1687
    %v1690 = vunpack.c.l.s4 1966171168
    %v1691 = vunpack.c.0.s8 %v1690
    %v1692 = vlaneseq
    %v1693 = vshrl.u32 %v1692, 7
    %v1694 = vsub.s32 %v1691, %v1693
    %v1695 = vrot.slane %v1687, %v1694
    %v1697 = vunpack.c.l.s4 1966171168
    %v1698 = vunpack.c.0.s8 %v1697
    %v1699 = vlaneseq
    %v1700 = vshrl.u32 %v1699, 7
    %v1701 = vsub.s32 %v1698, %v1700
    %v1702 = vrot.slane %v1688, %v1701
    %v1705 = vunpack.c.l.s4 1966171168
    %v1706 = vunpack.c.0.s8 %v1705
    %v1707 = vlaneseq
    %v1708 = vshrl.u32 %v1707, 7
    %v1709 = vsub.s32 %v1706, %v1708
    %v1710 = vrot.slane %v1561, %v1709
    %v1711 = vcombine.high %v1710, %v1710
    %v1713 = vunpack.c.l.s4 1966171168
    %v1714 = vunpack.c.0.s8 %v1713
    %v1715 = vlaneseq
    %v1716 = vshrl.u32 %v1715, 7
    %v1717 = vsub.s32 %v1714, %v1716
    %v1718 = vrot.slane %v1710, %v1717
    %v1720 = vunpack.c.l.s4 1966171168
    %v1721 = vunpack.c.0.s8 %v1720
    %v1722 = vlaneseq
    %v1723 = vshrl.u32 %v1722, 7
    %v1724 = vsub.s32 %v1721, %v1723
    %v1725 = vrot.slane %v1711, %v1724
    %v1728 = vunpack.c.l.s4 1966171168
    %v1729 = vunpack.c.0.s8 %v1728
    %v1730 = vlaneseq
    %v1731 = vshrl.u32 %v1730, 7
    %v1732 = vsub.s32 %v1729, %v1731
    %v1733 = vrot.slane %v1562, %v1732
    %v1734 = vcombine.high %v1733, %v1733
    %v1736 = vunpack.c.l.s4 1966171168
    %v1737 = vunpack.c.0.s8 %v1736
    %v1738 = vlaneseq
    %v1739 = vshrl.u32 %v1738, 7
    %v1740 = vsub.s32 %v1737, %v1739
    %v1741 = vrot.slane %v1733, %v1740
    %v1743 = vunpack.c.l.s4 1966171168
    %v1744 = vunpack.c.0.s8 %v1743
    %v1745 = vlaneseq
    %v1746 = vshrl.u32 %v1745, 7
    %v1747 = vsub.s32 %v1744, %v1746
    %v1748 = vrot.slane %v1734, %v1747
    %v1749 = vlaneseq
    %v1750 = vshrl.u32 %v1749, 7
    %v1751 = vsub.s32 0, %v1750
    %v1752 = vrot.slane %v1603, %v1751
    %v1753 = vlaneseq
    %v1754 = vshrl.u32 %v1753, 7
    %v1755 = vsub.s32 0, %v1754
    %v1756 = vrot.slane %v1610, %v1755
    %v1759 = vlaneseq
    %v1760 = vshrl.u32 %v1759, 7
    %v1761 = vsub.s32 0, %v1760
    %v1762 = vrot.slane %v1626, %v1761
    %v1763 = vlaneseq
    %v1764 = vshrl.u32 %v1763, 7
    %v1765 = vsub.s32 0, %v1764
    %v1766 = vrot.slane %v1633, %v1765
    %v1769 = vlaneseq
    %v1770 = vshrl.u32 %v1769, 7
    %v1771 = vsub.s32 0, %v1770
    %v1772 = vrot.slane %v1649, %v1771
    %v1773 = vlaneseq
    %v1774 = vshrl.u32 %v1773, 7
    %v1775 = vsub.s32 0, %v1774
    %v1776 = vrot.slane %v1656, %v1775
    %v1779 = vlaneseq
    %v1780 = vshrl.u32 %v1779, 7
    %v1781 = vsub.s32 0, %v1780
    %v1782 = vrot.slane %v1672, %v1781
    %v1783 = vlaneseq
    %v1784 = vshrl.u32 %v1783, 7
    %v1785 = vsub.s32 0, %v1784
    %v1786 = vrot.slane %v1679, %v1785
    %v1789 = vlaneseq
    %v1790 = vshrl.u32 %v1789, 7
    %v1791 = vsub.s32 0, %v1790
    %v1792 = vrot.slane %v1695, %v1791
    %v1793 = vlaneseq
    %v1794 = vshrl.u32 %v1793, 7
    %v1795 = vsub.s32 0, %v1794
    %v1796 = vrot.slane %v1702, %v1795
    %v1799 = vlaneseq
    %v1800 = vshrl.u32 %v1799, 7
    %v1801 = vsub.s32 0, %v1800
    %v1802 = vrot.slane %v1718, %v1801
    %v1803 = vlaneseq
    %v1804 = vshrl.u32 %v1803, 7
    %v1805 = vsub.s32 0, %v1804
    %v1806 = vrot.slane %v1725, %v1805
    %v1809 = vlaneseq
    %v1810 = vshrl.u32 %v1809, 7
    %v1811 = vsub.s32 0, %v1810
    %v1812 = vrot.slane %v1741, %v1811
    %v1813 = vlaneseq
    %v1814 = vshrl.u32 %v1813, 7
    %v1815 = vsub.s32 0, %v1814
    %v1816 = vrot.slane %v1748, %v1815
    %vm1819 = vcmask 1040384
    %v1820 = vsel %vm1819, %v1578, %v1752
    %v1821 = vsel %vm1819, %v1585, %v1756
    %v1822 = vsel %vm231, %v1820, %v1762
    %v1823 = vsel %vm231, %v1821, %v1766
    %vm1824 = vcmask 1042432
    %v1825 = vsel %vm1824, %v1822, %v1772
    %v1826 = vsel %vm1824, %v1823, %v1776
    %v1827 = vsel %vm488, %v1825, %v1782
    %v1828 = vsel %vm488, %v1826, %v1786
    %vm1829 = vcmask 1044480
    %v1830 = vsel %vm1829, %v1827, %v1792
    %v1831 = vsel %vm1829, %v1828, %v1796
    %vm1832 = vcmask 1045504
    %v1833 = vsel %vm1832, %v1830, %v1802
    %v1834 = vsel %vm1832, %v1831, %v1806
    %vm1835 = vcmask 1046528
    %v1836 = vsel %vm1835, %v1833, %v1812
    %v1837 = vsel %vm1835, %v1834, %v1816
    %v1838 = vld [vmem:[%s2] sm:$0xff]
    %v1839 = vld [vmem:[%s2 + $0x8] sm:$0xff]
    %v1840 = vld [vmem:[#allocation7] sm:$0xff]
    %v1841 = vld [vmem:[#allocation7 + $0x8] sm:$0xff]
    %v1842 = vld [vmem:[#allocation7 + $0x10] sm:$0xff]
    %v1843 = vld [vmem:[#allocation7 + $0x18] sm:$0xff]
    %v1844 = vld [vmem:[#allocation7 + $0x20] sm:$0xff]
    %v1845 = vld [vmem:[#allocation7 + $0x28] sm:$0xff]
    %v1846 = vld [vmem:[#allocation8] sm:$0x1]
    %v1849 = vrot.slane %v1838, 7
    %v1850 = vrot.slane %v1839, 7
    %v1853 = vsel %vm1819, 0.0, %v1849
    %v1854 = vsel %vm1819, 0.0, %v1850
    %v1855 = vrot.slane %v1838, 1
    %v1856 = vrot.slane %v1839, 1
    %v1859 = vsel %vm1835, %v1855, 0.0
    %v1860 = vsel %vm1835, %v1856, 0.0
    %vm1861 = vcmask 130048
    %v1862 = vsel %vm1861, %v1838, 0
    %v1864 = vsel %vm1861, %v1839, 0
    %1866 = vmatprep.subr.mxu0 0.0
    %1867 = vmatpush1.msra.mxu0 0.0
    %1868 = vmatprep.subr.mxu0 0.0
    %1869 = vmatpush1.msra.mxu0 0.0
    %1870 = vmatprep.subr.mxu0 0.0
    %1871 = vmatpush1.msra.mxu0 0.0
    %1872 = vmatprep.subr.mxu0 0.0
    %1873 = vmatpush1.msra.mxu0 0.0
    %1874 = vmatprep.subr.mxu0 0.0
    %1875 = vmatpush1.msra.mxu0 0.0
    %1876 = vmatprep.subr.mxu0 0.0
    %1877 = vmatpush1.msra.mxu0 0.0
    %1878 = vmatprep.subr.mxu0 0.0
    %1879 = vmatpush1.msra.mxu0 0.0
    %1880 = vmatprep.subr.mxu0 0.0
    %1881 = vmatpush1.msra.mxu0 0.0
    %1882 = vmatprep.subr.mxu0 0.0
    %1883 = vmatpush1.msra.mxu0 0.0
    %1884 = vmatprep.subr.mxu0 0.0
    %1885 = vmatpush1.msra.mxu0 0.0
    %1886 = vmatprep.subr.mxu0 0.0
    %1887 = vmatpush1.msra.mxu0 0.0
    %1888 = vmatprep.subr.mxu0 0.0
    %1889 = vmatpush1.msra.mxu0 0.0
    %1890 = vmatprep.subr.mxu0 0.0
    %1891 = vmatpush1.msra.mxu0 0.0
    %1892 = vmatprep.subr.mxu0 0.0
    %1893 = vmatpush1.msra.mxu0 0.0
    %1894 = vmatprep.subr.mxu0 0.0
    %1895 = vmatpush1.msra.mxu0 %v1843
    %1896 = vmatprep.subr.mxu0 0.0
    %1897 = vmatpush1.msra.mxu0 %v1842
    %1898 = vmatprep.subr.mxu0 0.0
    %1899 = vmatpush2.msra.mxu0 0.0
    %1900 = vmatprep.subr.mxu0 0.0
    %1901 = vmatpush2.msra.mxu0 0.0
    %1902 = vmatprep.subr.mxu0 0.0
    %1903 = vmatpush2.msra.mxu0 0.0
    %1904 = vmatprep.subr.mxu0 0.0
    %1905 = vmatpush2.msra.mxu0 0.0
    %1906 = vmatprep.subr.mxu0 0.0
    %1907 = vmatpush2.msra.mxu0 0.0
    %1908 = vmatprep.subr.mxu0 0.0
    %1909 = vmatpush2.msra.mxu0 0.0
    %1910 = vmatprep.subr.mxu0 0.0
    %1911 = vmatpush2.msra.mxu0 0.0
    %1912 = vmatprep.subr.mxu0 0.0
    %1913 = vmatpush2.msra.mxu0 0.0
    %1914 = vmatprep.subr.mxu0 0.0
    %1915 = vmatpush2.msra.mxu0 0.0
    %1916 = vmatprep.subr.mxu0 0.0
    %1917 = vmatpush2.msra.mxu0 0.0
    %1918 = vmatprep.subr.mxu0 0.0
    %1919 = vmatpush2.msra.mxu0 0.0
    %1920 = vmatprep.subr.mxu0 0.0
    %1921 = vmatpush2.msra.mxu0 0.0
    %1922 = vmatprep.subr.mxu0 0.0
    %1923 = vmatpush2.msra.mxu0 0.0
    %1924 = vmatprep.subr.mxu0 0.0
    %1925 = vmatpush2.msra.mxu0 0.0
    %1926 = vmatprep.subr.mxu0 0.0
    %1927 = vmatpush2.msra.mxu0 0.0
    %1928 = vmatprep.subr.mxu0 0.0
    %1929 = vmatpush2.msra.mxu0 0.0
    %1930 = vmatprep.mubr.f32.mxu0 0.0
    %1931 = vmatmul.mubr.f32.gmra.mxu0 %v1862
    %v1932 = vpop.f32.mrf.mxu0
    %v1933 = vadd.f32 0.0, %v1932
    %v1934 = vpop.f32.mrf.mxu0
    %1935 = vmatprep.mubr.f32.mxu0 0.0
    %1936 = vmatmul.mubr.f32.gmra.mxu0 %v1864
    %v1937 = vpop.f32.mrf.mxu0
    %v1938 = vadd.f32 0.0, %v1937
    %v1939 = vpop.f32.mrf.mxu0
    %1940 = vdwg.mxu0
    %v1942 = vsel %vm1861, %v1853, 0
    %v1945 = vsel %vm1861, %v1854, 0
    %1947 = vmatprep.subr.mxu0 0.0
    %1948 = vmatpush1.msra.mxu0 0.0
    %1949 = vmatprep.subr.mxu0 0.0
    %1950 = vmatpush1.msra.mxu0 0.0
    %1951 = vmatprep.subr.mxu0 0.0
    %1952 = vmatpush1.msra.mxu0 0.0
    %1953 = vmatprep.subr.mxu0 0.0
    %1954 = vmatpush1.msra.mxu0 0.0
    %1955 = vmatprep.subr.mxu0 0.0
    %1956 = vmatpush1.msra.mxu0 0.0
    %1957 = vmatprep.subr.mxu0 0.0
    %1958 = vmatpush1.msra.mxu0 0.0
    %1959 = vmatprep.subr.mxu0 0.0
    %1960 = vmatpush1.msra.mxu0 0.0
    %1961 = vmatprep.subr.mxu0 0.0
    %1962 = vmatpush1.msra.mxu0 0.0
    %1963 = vmatprep.subr.mxu0 0.0
    %1964 = vmatpush1.msra.mxu0 0.0
    %1965 = vmatprep.subr.mxu0 0.0
    %1966 = vmatpush1.msra.mxu0 0.0
    %1967 = vmatprep.subr.mxu0 0.0
    %1968 = vmatpush1.msra.mxu0 0.0
    %1969 = vmatprep.subr.mxu0 0.0
    %1970 = vmatpush1.msra.mxu0 0.0
    %1971 = vmatprep.subr.mxu0 0.0
    %1972 = vmatpush1.msra.mxu0 0.0
    %1973 = vmatprep.subr.mxu0 0.0
    %1974 = vmatpush1.msra.mxu0 0.0
    %1975 = vmatprep.subr.mxu0 0.0
    %1976 = vmatpush1.msra.mxu0 %v1841
    %1977 = vmatprep.subr.mxu0 0.0
    %1978 = vmatpush1.msra.mxu0 %v1840
    %1979 = vmatprep.subr.mxu0 0.0
    %1980 = vmatpush2.msra.mxu0 0.0
    %1981 = vmatprep.subr.mxu0 0.0
    %1982 = vmatpush2.msra.mxu0 0.0
    %1983 = vmatprep.subr.mxu0 0.0
    %1984 = vmatpush2.msra.mxu0 0.0
    %1985 = vmatprep.subr.mxu0 0.0
    %1986 = vmatpush2.msra.mxu0 0.0
    %1987 = vmatprep.subr.mxu0 0.0
    %1988 = vmatpush2.msra.mxu0 0.0
    %1989 = vmatprep.subr.mxu0 0.0
    %1990 = vmatpush2.msra.mxu0 0.0
    %1991 = vmatprep.subr.mxu0 0.0
    %1992 = vmatpush2.msra.mxu0 0.0
    %1993 = vmatprep.subr.mxu0 0.0
    %1994 = vmatpush2.msra.mxu0 0.0
    %1995 = vmatprep.subr.mxu0 0.0
    %1996 = vmatpush2.msra.mxu0 0.0
    %1997 = vmatprep.subr.mxu0 0.0
    %1998 = vmatpush2.msra.mxu0 0.0
    %1999 = vmatprep.subr.mxu0 0.0
    %2000 = vmatpush2.msra.mxu0 0.0
    %2001 = vmatprep.subr.mxu0 0.0
    %2002 = vmatpush2.msra.mxu0 0.0
    %2003 = vmatprep.subr.mxu0 0.0
    %2004 = vmatpush2.msra.mxu0 0.0
    %2005 = vmatprep.subr.mxu0 0.0
    %2006 = vmatpush2.msra.mxu0 0.0
    %2007 = vmatprep.subr.mxu0 0.0
    %2008 = vmatpush2.msra.mxu0 0.0
    %2009 = vmatprep.subr.mxu0 0.0
    %2010 = vmatpush2.msra.mxu0 0.0
    %2011 = vmatprep.mubr.f32.mxu0 0.0
    %2012 = vmatmul.mubr.f32.gmra.mxu0 %v1942
    %v2013 = vpop.f32.mrf.mxu0
    %v2014 = vadd.f32 %v1933, %v2013
    %v2015 = vpop.f32.mrf.mxu0
    %2016 = vmatprep.mubr.f32.mxu0 0.0
    %2017 = vmatmul.mubr.f32.gmra.mxu0 %v1945
    %v2018 = vpop.f32.mrf.mxu0
    %v2019 = vadd.f32 %v1938, %v2018
    %v2020 = vpop.f32.mrf.mxu0
    %2021 = vdwg.mxu0
    %v2023 = vsel %vm1861, %v1859, 0
    %v2026 = vsel %vm1861, %v1860, 0
    %2028 = vmatprep.subr.mxu0 0.0
    %2029 = vmatpush1.msra.mxu0 0.0
    %2030 = vmatprep.subr.mxu0 0.0
    %2031 = vmatpush1.msra.mxu0 0.0
    %2032 = vmatprep.subr.mxu0 0.0
    %2033 = vmatpush1.msra.mxu0 0.0
    %2034 = vmatprep.subr.mxu0 0.0
    %2035 = vmatpush1.msra.mxu0 0.0
    %2036 = vmatprep.subr.mxu0 0.0
    %2037 = vmatpush1.msra.mxu0 0.0
    %2038 = vmatprep.subr.mxu0 0.0
    %2039 = vmatpush1.msra.mxu0 0.0
    %2040 = vmatprep.subr.mxu0 0.0
    %2041 = vmatpush1.msra.mxu0 0.0
    %2042 = vmatprep.subr.mxu0 0.0
    %2043 = vmatpush1.msra.mxu0 0.0
    %2044 = vmatprep.subr.mxu0 0.0
    %2045 = vmatpush1.msra.mxu0 0.0
    %2046 = vmatprep.subr.mxu0 0.0
    %2047 = vmatpush1.msra.mxu0 0.0
    %2048 = vmatprep.subr.mxu0 0.0
    %2049 = vmatpush1.msra.mxu0 0.0
    %2050 = vmatprep.subr.mxu0 0.0
    %2051 = vmatpush1.msra.mxu0 0.0
    %2052 = vmatprep.subr.mxu0 0.0
    %2053 = vmatpush1.msra.mxu0 0.0
    %2054 = vmatprep.subr.mxu0 0.0
    %2055 = vmatpush1.msra.mxu0 0.0
    %2056 = vmatprep.subr.mxu0 0.0
    %2057 = vmatpush1.msra.mxu0 %v1845
    %2058 = vmatprep.subr.mxu0 0.0
    %2059 = vmatpush1.msra.mxu0 %v1844
    %2060 = vmatprep.subr.mxu0 0.0
    %2061 = vmatpush2.msra.mxu0 0.0
    %2062 = vmatprep.subr.mxu0 0.0
    %2063 = vmatpush2.msra.mxu0 0.0
    %2064 = vmatprep.subr.mxu0 0.0
    %2065 = vmatpush2.msra.mxu0 0.0
    %2066 = vmatprep.subr.mxu0 0.0
    %2067 = vmatpush2.msra.mxu0 0.0
    %2068 = vmatprep.subr.mxu0 0.0
    %2069 = vmatpush2.msra.mxu0 0.0
    %2070 = vmatprep.subr.mxu0 0.0
    %2071 = vmatpush2.msra.mxu0 0.0
    %2072 = vmatprep.subr.mxu0 0.0
    %2073 = vmatpush2.msra.mxu0 0.0
    %2074 = vmatprep.subr.mxu0 0.0
    %2075 = vmatpush2.msra.mxu0 0.0
    %2076 = vmatprep.subr.mxu0 0.0
    %2077 = vmatpush2.msra.mxu0 0.0
    %2078 = vmatprep.subr.mxu0 0.0
    %2079 = vmatpush2.msra.mxu0 0.0
    %2080 = vmatprep.subr.mxu0 0.0
    %2081 = vmatpush2.msra.mxu0 0.0
    %2082 = vmatprep.subr.mxu0 0.0
    %2083 = vmatpush2.msra.mxu0 0.0
    %2084 = vmatprep.subr.mxu0 0.0
    %2085 = vmatpush2.msra.mxu0 0.0
    %2086 = vmatprep.subr.mxu0 0.0
    %2087 = vmatpush2.msra.mxu0 0.0
    %2088 = vmatprep.subr.mxu0 0.0
    %2089 = vmatpush2.msra.mxu0 0.0
    %2090 = vmatprep.subr.mxu0 0.0
    %2091 = vmatpush2.msra.mxu0 0.0
    %2092 = vmatprep.mubr.f32.mxu0 0.0
    %2093 = vmatmul.mubr.f32.gmra.mxu0 %v2023
    %v2094 = vpop.f32.mrf.mxu0
    %v2095 = vadd.f32 0.0, %v2094
    %v2096 = vpop.f32.mrf.mxu0
    %2097 = vmatprep.mubr.f32.mxu0 0.0
    %2098 = vmatmul.mubr.f32.gmra.mxu0 %v2026
    %v2099 = vpop.f32.mrf.mxu0
    %v2100 = vadd.f32 0.0, %v2099
    %v2101 = vpop.f32.mrf.mxu0
    %2102 = vdwg.mxu0
    %v2103 = vadd.f32 %v2014, %v2095
    %v2104 = vadd.f32 %v2019, %v2100
    %v2106 = vlaneseq
    %v2107 = vshrl.u32 %v2106, 7
    %v2108 = vsub.s32 0, %v2107
    %v2109 = vrot.slane %v1846, %v2108
    %v2111 = vadd.f32 %v2103, %v2109
    %v2112 = vadd.f32 %v2104, %v2109
    %vm2113 = vcmp.gt.f32.partialorder %v2111, 0.0
    %vm2114 = vcmp.gt.f32.partialorder %v2112, 0.0
    %v2115 = vmin.f32 %v2111, 0.0
    %v2116 = vmin.f32 %v2112, 0.0
    %v2117 = vmul.f32 %v2115, 1.442695
    %v2118 = vpow.pop %v2117
    %v2119 = vmul.f32 %v2116, 1.442695
    %v2120 = vpow.pop %v2119
    %v2121 = vsub.f32 %v2118, 1.0
    %v2122 = vsub.f32 %v2120, 1.0
    %v2123 = vsel %vm2113, %v2111, %v2121
    %v2124 = vsel %vm2114, %v2112, %v2122
    %v2125 = vld [vmem:[%s3] sm:$0xff]
    %v2126 = vld [vmem:[%s3 + $0x8] sm:$0xff]
    %v2127 = vld [vmem:[#allocation10] sm:$0xff]
    %v2128 = vld [vmem:[#allocation10 + $0x8] sm:$0xff]
    %v2129 = vld [vmem:[#allocation10 + $0x10] sm:$0xff]
    %v2130 = vld [vmem:[#allocation10 + $0x18] sm:$0xff]
    %v2131 = vld [vmem:[#allocation10 + $0x20] sm:$0xff]
    %v2132 = vld [vmem:[#allocation10 + $0x28] sm:$0xff]
    %v2133 = vld [vmem:[#allocation11] sm:$0x1]
    %v2136 = vrot.slane %v2125, 7
    %v2137 = vrot.slane %v2126, 7
    %v2140 = vsel %vm1819, 0.0, %v2136
    %v2141 = vsel %vm1819, 0.0, %v2137
    %v2142 = vrot.slane %v2125, 1
    %v2143 = vrot.slane %v2126, 1
    %v2146 = vsel %vm1835, %v2142, 0.0
    %v2147 = vsel %vm1835, %v2143, 0.0
    %v2148 = vsel %vm1861, %v2125, 0
    %v2150 = vsel %vm1861, %v2126, 0
    %2152 = vmatprep.subr.mxu0 0.0
    %2153 = vmatpush1.msra.mxu0 0.0
    %2154 = vmatprep.subr.mxu0 0.0
    %2155 = vmatpush1.msra.mxu0 0.0
    %2156 = vmatprep.subr.mxu0 0.0
    %2157 = vmatpush1.msra.mxu0 0.0
    %2158 = vmatprep.subr.mxu0 0.0
    %2159 = vmatpush1.msra.mxu0 0.0
    %2160 = vmatprep.subr.mxu0 0.0
    %2161 = vmatpush1.msra.mxu0 0.0
    %2162 = vmatprep.subr.mxu0 0.0
    %2163 = vmatpush1.msra.mxu0 0.0
    %2164 = vmatprep.subr.mxu0 0.0
    %2165 = vmatpush1.msra.mxu0 0.0
    %2166 = vmatprep.subr.mxu0 0.0
    %2167 = vmatpush1.msra.mxu0 0.0
    %2168 = vmatprep.subr.mxu0 0.0
    %2169 = vmatpush1.msra.mxu0 0.0
    %2170 = vmatprep.subr.mxu0 0.0
    %2171 = vmatpush1.msra.mxu0 0.0
    %2172 = vmatprep.subr.mxu0 0.0
    %2173 = vmatpush1.msra.mxu0 0.0
    %2174 = vmatprep.subr.mxu0 0.0
    %2175 = vmatpush1.msra.mxu0 0.0
    %2176 = vmatprep.subr.mxu0 0.0
    %2177 = vmatpush1.msra.mxu0 0.0
    %2178 = vmatprep.subr.mxu0 0.0
    %2179 = vmatpush1.msra.mxu0 0.0
    %2180 = vmatprep.subr.mxu0 0.0
    %2181 = vmatpush1.msra.mxu0 %v2130
    %2182 = vmatprep.subr.mxu0 0.0
    %2183 = vmatpush1.msra.mxu0 %v2129
    %2184 = vmatprep.subr.mxu0 0.0
    %2185 = vmatpush2.msra.mxu0 0.0
    %2186 = vmatprep.subr.mxu0 0.0
    %2187 = vmatpush2.msra.mxu0 0.0
    %2188 = vmatprep.subr.mxu0 0.0
    %2189 = vmatpush2.msra.mxu0 0.0
    %2190 = vmatprep.subr.mxu0 0.0
    %2191 = vmatpush2.msra.mxu0 0.0
    %2192 = vmatprep.subr.mxu0 0.0
    %2193 = vmatpush2.msra.mxu0 0.0
    %2194 = vmatprep.subr.mxu0 0.0
    %2195 = vmatpush2.msra.mxu0 0.0
    %2196 = vmatprep.subr.mxu0 0.0
    %2197 = vmatpush2.msra.mxu0 0.0
    %2198 = vmatprep.subr.mxu0 0.0
    %2199 = vmatpush2.msra.mxu0 0.0
    %2200 = vmatprep.subr.mxu0 0.0
    %2201 = vmatpush2.msra.mxu0 0.0
    %2202 = vmatprep.subr.mxu0 0.0
    %2203 = vmatpush2.msra.mxu0 0.0
    %2204 = vmatprep.subr.mxu0 0.0
    %2205 = vmatpush2.msra.mxu0 0.0
    %2206 = vmatprep.subr.mxu0 0.0
    %2207 = vmatpush2.msra.mxu0 0.0
    %2208 = vmatprep.subr.mxu0 0.0
    %2209 = vmatpush2.msra.mxu0 0.0
    %2210 = vmatprep.subr.mxu0 0.0
    %2211 = vmatpush2.msra.mxu0 0.0
    %2212 = vmatprep.subr.mxu0 0.0
    %2213 = vmatpush2.msra.mxu0 0.0
    %2214 = vmatprep.subr.mxu0 0.0
    %2215 = vmatpush2.msra.mxu0 0.0
    %2216 = vmatprep.mubr.f32.mxu0 0.0
    %2217 = vmatmul.mubr.f32.gmra.mxu0 %v2148
    %v2218 = vpop.f32.mrf.mxu0
    %v2219 = vadd.f32 0.0, %v2218
    %v2220 = vpop.f32.mrf.mxu0
    %2221 = vmatprep.mubr.f32.mxu0 0.0
    %2222 = vmatmul.mubr.f32.gmra.mxu0 %v2150
    %v2223 = vpop.f32.mrf.mxu0
    %v2224 = vadd.f32 0.0, %v2223
    %v2225 = vpop.f32.mrf.mxu0
    %2226 = vdwg.mxu0
    %v2228 = vsel %vm1861, %v2140, 0
    %v2231 = vsel %vm1861, %v2141, 0
    %2233 = vmatprep.subr.mxu0 0.0
    %2234 = vmatpush1.msra.mxu0 0.0
    %2235 = vmatprep.subr.mxu0 0.0
    %2236 = vmatpush1.msra.mxu0 0.0
    %2237 = vmatprep.subr.mxu0 0.0
    %2238 = vmatpush1.msra.mxu0 0.0
    %2239 = vmatprep.subr.mxu0 0.0
    %2240 = vmatpush1.msra.mxu0 0.0
    %2241 = vmatprep.subr.mxu0 0.0
    %2242 = vmatpush1.msra.mxu0 0.0
    %2243 = vmatprep.subr.mxu0 0.0
    %2244 = vmatpush1.msra.mxu0 0.0
    %2245 = vmatprep.subr.mxu0 0.0
    %2246 = vmatpush1.msra.mxu0 0.0
    %2247 = vmatprep.subr.mxu0 0.0
    %2248 = vmatpush1.msra.mxu0 0.0
    %2249 = vmatprep.subr.mxu0 0.0
    %2250 = vmatpush1.msra.mxu0 0.0
    %2251 = vmatprep.subr.mxu0 0.0
    %2252 = vmatpush1.msra.mxu0 0.0
    %2253 = vmatprep.subr.mxu0 0.0
    %2254 = vmatpush1.msra.mxu0 0.0
    %2255 = vmatprep.subr.mxu0 0.0
    %2256 = vmatpush1.msra.mxu0 0.0
    %2257 = vmatprep.subr.mxu0 0.0
    %2258 = vmatpush1.msra.mxu0 0.0
    %2259 = vmatprep.subr.mxu0 0.0
    %2260 = vmatpush1.msra.mxu0 0.0
    %2261 = vmatprep.subr.mxu0 0.0
    %2262 = vmatpush1.msra.mxu0 %v2128
    %2263 = vmatprep.subr.mxu0 0.0
    %2264 = vmatpush1.msra.mxu0 %v2127
    %2265 = vmatprep.subr.mxu0 0.0
    %2266 = vmatpush2.msra.mxu0 0.0
    %2267 = vmatprep.subr.mxu0 0.0
    %2268 = vmatpush2.msra.mxu0 0.0
    %2269 = vmatprep.subr.mxu0 0.0
    %2270 = vmatpush2.msra.mxu0 0.0
    %2271 = vmatprep.subr.mxu0 0.0
    %2272 = vmatpush2.msra.mxu0 0.0
    %2273 = vmatprep.subr.mxu0 0.0
    %2274 = vmatpush2.msra.mxu0 0.0
    %2275 = vmatprep.subr.mxu0 0.0
    %2276 = vmatpush2.msra.mxu0 0.0
    %2277 = vmatprep.subr.mxu0 0.0
    %2278 = vmatpush2.msra.mxu0 0.0
    %2279 = vmatprep.subr.mxu0 0.0
    %2280 = vmatpush2.msra.mxu0 0.0
    %2281 = vmatprep.subr.mxu0 0.0
    %2282 = vmatpush2.msra.mxu0 0.0
    %2283 = vmatprep.subr.mxu0 0.0
    %2284 = vmatpush2.msra.mxu0 0.0
    %2285 = vmatprep.subr.mxu0 0.0
    %2286 = vmatpush2.msra.mxu0 0.0
    %2287 = vmatprep.subr.mxu0 0.0
    %2288 = vmatpush2.msra.mxu0 0.0
    %2289 = vmatprep.subr.mxu0 0.0
    %2290 = vmatpush2.msra.mxu0 0.0
    %2291 = vmatprep.subr.mxu0 0.0
    %2292 = vmatpush2.msra.mxu0 0.0
    %2293 = vmatprep.subr.mxu0 0.0
    %2294 = vmatpush2.msra.mxu0 0.0
    %2295 = vmatprep.subr.mxu0 0.0
    %2296 = vmatpush2.msra.mxu0 0.0
    %2297 = vmatprep.mubr.f32.mxu0 0.0
    %2298 = vmatmul.mubr.f32.gmra.mxu0 %v2228
    %v2299 = vpop.f32.mrf.mxu0
    %v2300 = vadd.f32 %v2219, %v2299
    %v2301 = vpop.f32.mrf.mxu0
    %2302 = vmatprep.mubr.f32.mxu0 0.0
    %2303 = vmatmul.mubr.f32.gmra.mxu0 %v2231
    %v2304 = vpop.f32.mrf.mxu0
    %v2305 = vadd.f32 %v2224, %v2304
    %v2306 = vpop.f32.mrf.mxu0
    %2307 = vdwg.mxu0
    %v2309 = vsel %vm1861, %v2146, 0
    %v2312 = vsel %vm1861, %v2147, 0
    %2314 = vmatprep.subr.mxu0 0.0
    %2315 = vmatpush1.msra.mxu0 0.0
    %2316 = vmatprep.subr.mxu0 0.0
    %2317 = vmatpush1.msra.mxu0 0.0
    %2318 = vmatprep.subr.mxu0 0.0
    %2319 = vmatpush1.msra.mxu0 0.0
    %2320 = vmatprep.subr.mxu0 0.0
    %2321 = vmatpush1.msra.mxu0 0.0
    %2322 = vmatprep.subr.mxu0 0.0
    %2323 = vmatpush1.msra.mxu0 0.0
    %2324 = vmatprep.subr.mxu0 0.0
    %2325 = vmatpush1.msra.mxu0 0.0
    %2326 = vmatprep.subr.mxu0 0.0
    %2327 = vmatpush1.msra.mxu0 0.0
    %2328 = vmatprep.subr.mxu0 0.0
    %2329 = vmatpush1.msra.mxu0 0.0
    %2330 = vmatprep.subr.mxu0 0.0
    %2331 = vmatpush1.msra.mxu0 0.0
    %2332 = vmatprep.subr.mxu0 0.0
    %2333 = vmatpush1.msra.mxu0 0.0
    %2334 = vmatprep.subr.mxu0 0.0
    %2335 = vmatpush1.msra.mxu0 0.0
    %2336 = vmatprep.subr.mxu0 0.0
    %2337 = vmatpush1.msra.mxu0 0.0
    %2338 = vmatprep.subr.mxu0 0.0
    %2339 = vmatpush1.msra.mxu0 0.0
    %2340 = vmatprep.subr.mxu0 0.0
    %2341 = vmatpush1.msra.mxu0 0.0
    %2342 = vmatprep.subr.mxu0 0.0
    %2343 = vmatpush1.msra.mxu0 %v2132
    %2344 = vmatprep.subr.mxu0 0.0
    %2345 = vmatpush1.msra.mxu0 %v2131
    %2346 = vmatprep.subr.mxu0 0.0
    %2347 = vmatpush2.msra.mxu0 0.0
    %2348 = vmatprep.subr.mxu0 0.0
    %2349 = vmatpush2.msra.mxu0 0.0
    %2350 = vmatprep.subr.mxu0 0.0
    %2351 = vmatpush2.msra.mxu0 0.0
    %2352 = vmatprep.subr.mxu0 0.0
    %2353 = vmatpush2.msra.mxu0 0.0
    %2354 = vmatprep.subr.mxu0 0.0
    %2355 = vmatpush2.msra.mxu0 0.0
    %2356 = vmatprep.subr.mxu0 0.0
    %2357 = vmatpush2.msra.mxu0 0.0
    %2358 = vmatprep.subr.mxu0 0.0
    %2359 = vmatpush2.msra.mxu0 0.0
    %2360 = vmatprep.subr.mxu0 0.0
    %2361 = vmatpush2.msra.mxu0 0.0
    %2362 = vmatprep.subr.mxu0 0.0
    %2363 = vmatpush2.msra.mxu0 0.0
    %2364 = vmatprep.subr.mxu0 0.0
    %2365 = vmatpush2.msra.mxu0 0.0
    %2366 = vmatprep.subr.mxu0 0.0
    %2367 = vmatpush2.msra.mxu0 0.0
    %2368 = vmatprep.subr.mxu0 0.0
    %2369 = vmatpush2.msra.mxu0 0.0
    %2370 = vmatprep.subr.mxu0 0.0
    %2371 = vmatpush2.msra.mxu0 0.0
    %2372 = vmatprep.subr.mxu0 0.0
    %2373 = vmatpush2.msra.mxu0 0.0
    %2374 = vmatprep.subr.mxu0 0.0
    %2375 = vmatpush2.msra.mxu0 0.0
    %2376 = vmatprep.subr.mxu0 0.0
    %2377 = vmatpush2.msra.mxu0 0.0
    %2378 = vmatprep.mubr.f32.mxu0 0.0
    %2379 = vmatmul.mubr.f32.gmra.mxu0 %v2309
    %v2380 = vpop.f32.mrf.mxu0
    %v2381 = vadd.f32 0.0, %v2380
    %v2382 = vpop.f32.mrf.mxu0
    %2383 = vmatprep.mubr.f32.mxu0 0.0
    %2384 = vmatmul.mubr.f32.gmra.mxu0 %v2312
    %v2385 = vpop.f32.mrf.mxu0
    %v2386 = vadd.f32 0.0, %v2385
    %v2387 = vpop.f32.mrf.mxu0
    %2388 = vdwg.mxu0
    %v2389 = vadd.f32 %v2300, %v2381
    %v2390 = vadd.f32 %v2305, %v2386
    %v2392 = vlaneseq
    %v2393 = vshrl.u32 %v2392, 7
    %v2394 = vsub.s32 0, %v2393
    %v2395 = vrot.slane %v2133, %v2394
    %v2397 = vadd.f32 %v2389, %v2395
    %v2398 = vadd.f32 %v2390, %v2395
    %vm2399 = vcmp.gt.f32.partialorder %v2397, 0.0
    %vm2400 = vcmp.gt.f32.partialorder %v2398, 0.0
    %v2401 = vmin.f32 %v2397, 0.0
    %v2402 = vmin.f32 %v2398, 0.0
    %v2403 = vmul.f32 %v2401, 1.442695
    %v2404 = vpow.pop %v2403
    %v2405 = vmul.f32 %v2402, 1.442695
    %v2406 = vpow.pop %v2405
    %v2407 = vsub.f32 %v2404, 1.0
    %v2408 = vsub.f32 %v2406, 1.0
    %v2409 = vsel %vm2399, %v2397, %v2407
    %v2410 = vsel %vm2400, %v2398, %v2408
    %v2411 = vld [vmem:[%s12] sm:$0xff]
    %v2412 = vld [vmem:[%s12 + $0x8] sm:$0xff]
    %v2413 = vld [vmem:[%s12 + $0x10] sm:$0xff]
    %v2414 = vld [vmem:[%s12 + $0x18] sm:$0xff]
    %v2415 = vld [vmem:[%s12 + $0x20] sm:$0xff]
    %v2416 = vld [vmem:[%s12 + $0x28] sm:$0xff]
    %v2417 = vld [vmem:[%s12 + $0x30] sm:$0xff]
    %v2418 = vld [vmem:[%s12 + $0x38] sm:$0xff]
    %v2419 = vld [vmem:[%s12 + $0x40] sm:$0xff]
    %v2420 = vld [vmem:[%s12 + $0x48] sm:$0xff]
    %v2421 = vld [vmem:[%s12 + $0x50] sm:$0xff]
    %v2422 = vld [vmem:[%s12 + $0x58] sm:$0xff]
    %v2423 = vld [vmem:[%s12 + $0x60] sm:$0xff]
    %v2424 = vld [vmem:[%s12 + $0x68] sm:$0xff]
    %v2425 = vld [vmem:[%s12 + $0x70] sm:$0xff]
    %v2426 = vld [vmem:[%s12 + $0x78] sm:$0xff]
    %v2428 = vsel %vm701, %v2409, 0
    %v2431 = vsel %vm701, %v2410, 0
    %2433 = vmatprep.subr.mxu0 0.0
    %2434 = vmatpush1.msra.mxu0 0.0
    %2435 = vmatprep.subr.mxu0 0.0
    %2436 = vmatpush1.msra.mxu0 0.0
    %2437 = vmatprep.subr.mxu0 0.0
    %2438 = vmatpush1.msra.mxu0 0.0
    %2439 = vmatprep.subr.mxu0 0.0
    %2440 = vmatpush1.msra.mxu0 0.0
    %2441 = vmatprep.subr.mxu0 0.0
    %2442 = vmatpush1.msra.mxu0 0.0
    %2443 = vmatprep.subr.mxu0 0.0
    %2444 = vmatpush1.msra.mxu0 0.0
    %2445 = vmatprep.subr.mxu0 0.0
    %2446 = vmatpush1.msra.mxu0 0.0
    %2447 = vmatprep.subr.mxu0 0.0
    %2448 = vmatpush1.msra.mxu0 0.0
    %2449 = vmatprep.subr.mxu0 0.0
    %2450 = vmatpush1.msra.mxu0 %v2426
    %2451 = vmatprep.subr.mxu0 0.0
    %2452 = vmatpush1.msra.mxu0 %v2425
    %2453 = vmatprep.subr.mxu0 0.0
    %2454 = vmatpush1.msra.mxu0 %v2424
    %2455 = vmatprep.subr.mxu0 0.0
    %2456 = vmatpush1.msra.mxu0 %v2423
    %2457 = vmatprep.subr.mxu0 0.0
    %2458 = vmatpush1.msra.mxu0 %v2422
    %2459 = vmatprep.subr.mxu0 0.0
    %2460 = vmatpush1.msra.mxu0 %v2421
    %2461 = vmatprep.subr.mxu0 0.0
    %2462 = vmatpush1.msra.mxu0 %v2420
    %2463 = vmatprep.subr.mxu0 0.0
    %2464 = vmatpush1.msra.mxu0 %v2419
    %2465 = vmatprep.subr.mxu0 0.0
    %2466 = vmatpush2.msra.mxu0 0.0
    %2467 = vmatprep.subr.mxu0 0.0
    %2468 = vmatpush2.msra.mxu0 0.0
    %2469 = vmatprep.subr.mxu0 0.0
    %2470 = vmatpush2.msra.mxu0 0.0
    %2471 = vmatprep.subr.mxu0 0.0
    %2472 = vmatpush2.msra.mxu0 0.0
    %2473 = vmatprep.subr.mxu0 0.0
    %2474 = vmatpush2.msra.mxu0 0.0
    %2475 = vmatprep.subr.mxu0 0.0
    %2476 = vmatpush2.msra.mxu0 0.0
    %2477 = vmatprep.subr.mxu0 0.0
    %2478 = vmatpush2.msra.mxu0 0.0
    %2479 = vmatprep.subr.mxu0 0.0
    %2480 = vmatpush2.msra.mxu0 0.0
    %2481 = vmatprep.subr.mxu0 0.0
    %2482 = vmatpush2.msra.mxu0 0.0
    %2483 = vmatprep.subr.mxu0 0.0
    %2484 = vmatpush2.msra.mxu0 0.0
    %2485 = vmatprep.subr.mxu0 0.0
    %2486 = vmatpush2.msra.mxu0 0.0
    %2487 = vmatprep.subr.mxu0 0.0
    %2488 = vmatpush2.msra.mxu0 0.0
    %2489 = vmatprep.subr.mxu0 0.0
    %2490 = vmatpush2.msra.mxu0 0.0
    %2491 = vmatprep.subr.mxu0 0.0
    %2492 = vmatpush2.msra.mxu0 0.0
    %2493 = vmatprep.subr.mxu0 0.0
    %2494 = vmatpush2.msra.mxu0 0.0
    %2495 = vmatprep.subr.mxu0 0.0
    %2496 = vmatpush2.msra.mxu0 0.0
    %2497 = vmatprep.mubr.f32.mxu0 0.0
    %2498 = vmatmul.mubr.f32.gmra.mxu0 %v2428
    %v2499 = vpop.f32.mrf.mxu0
    %v2500 = vadd.f32 0.0, %v2499
    %v2501 = vpop.f32.mrf.mxu0
    %2502 = vmatprep.mubr.f32.mxu0 0.0
    %2503 = vmatmul.mubr.f32.gmra.mxu0 %v2431
    %v2504 = vpop.f32.mrf.mxu0
    %v2505 = vadd.f32 0.0, %v2504
    %v2506 = vpop.f32.mrf.mxu0
    %2507 = vdwg.mxu0
    %v2509 = vsel %vm701, %v2123, 0
    %v2512 = vsel %vm701, %v2124, 0
    %2514 = vmatprep.subr.mxu0 0.0
    %2515 = vmatpush1.msra.mxu0 0.0
    %2516 = vmatprep.subr.mxu0 0.0
    %2517 = vmatpush1.msra.mxu0 0.0
    %2518 = vmatprep.subr.mxu0 0.0
    %2519 = vmatpush1.msra.mxu0 0.0
    %2520 = vmatprep.subr.mxu0 0.0
    %2521 = vmatpush1.msra.mxu0 0.0
    %2522 = vmatprep.subr.mxu0 0.0
    %2523 = vmatpush1.msra.mxu0 0.0
    %2524 = vmatprep.subr.mxu0 0.0
    %2525 = vmatpush1.msra.mxu0 0.0
    %2526 = vmatprep.subr.mxu0 0.0
    %2527 = vmatpush1.msra.mxu0 0.0
    %2528 = vmatprep.subr.mxu0 0.0
    %2529 = vmatpush1.msra.mxu0 0.0
    %2530 = vmatprep.subr.mxu0 0.0
    %2531 = vmatpush1.msra.mxu0 %v2418
    %2532 = vmatprep.subr.mxu0 0.0
    %2533 = vmatpush1.msra.mxu0 %v2417
    %2534 = vmatprep.subr.mxu0 0.0
    %2535 = vmatpush1.msra.mxu0 %v2416
    %2536 = vmatprep.subr.mxu0 0.0
    %2537 = vmatpush1.msra.mxu0 %v2415
    %2538 = vmatprep.subr.mxu0 0.0
    %2539 = vmatpush1.msra.mxu0 %v2414
    %2540 = vmatprep.subr.mxu0 0.0
    %2541 = vmatpush1.msra.mxu0 %v2413
    %2542 = vmatprep.subr.mxu0 0.0
    %2543 = vmatpush1.msra.mxu0 %v2412
    %2544 = vmatprep.subr.mxu0 0.0
    %2545 = vmatpush1.msra.mxu0 %v2411
    %2546 = vmatprep.subr.mxu0 0.0
    %2547 = vmatpush2.msra.mxu0 0.0
    %2548 = vmatprep.subr.mxu0 0.0
    %2549 = vmatpush2.msra.mxu0 0.0
    %2550 = vmatprep.subr.mxu0 0.0
    %2551 = vmatpush2.msra.mxu0 0.0
    %2552 = vmatprep.subr.mxu0 0.0
    %2553 = vmatpush2.msra.mxu0 0.0
    %2554 = vmatprep.subr.mxu0 0.0
    %2555 = vmatpush2.msra.mxu0 0.0
    %2556 = vmatprep.subr.mxu0 0.0
    %2557 = vmatpush2.msra.mxu0 0.0
    %2558 = vmatprep.subr.mxu0 0.0
    %2559 = vmatpush2.msra.mxu0 0.0
    %2560 = vmatprep.subr.mxu0 0.0
    %2561 = vmatpush2.msra.mxu0 0.0
    %2562 = vmatprep.subr.mxu0 0.0
    %2563 = vmatpush2.msra.mxu0 0.0
    %2564 = vmatprep.subr.mxu0 0.0
    %2565 = vmatpush2.msra.mxu0 0.0
    %2566 = vmatprep.subr.mxu0 0.0
    %2567 = vmatpush2.msra.mxu0 0.0
    %2568 = vmatprep.subr.mxu0 0.0
    %2569 = vmatpush2.msra.mxu0 0.0
    %2570 = vmatprep.subr.mxu0 0.0
    %2571 = vmatpush2.msra.mxu0 0.0
    %2572 = vmatprep.subr.mxu0 0.0
    %2573 = vmatpush2.msra.mxu0 0.0
    %2574 = vmatprep.subr.mxu0 0.0
    %2575 = vmatpush2.msra.mxu0 0.0
    %2576 = vmatprep.subr.mxu0 0.0
    %2577 = vmatpush2.msra.mxu0 0.0
    %2578 = vmatprep.mubr.f32.mxu0 0.0
    %2579 = vmatmul.mubr.f32.gmra.mxu0 %v2509
    %v2580 = vpop.f32.mrf.mxu0
    %v2581 = vadd.f32 %v2500, %v2580
    %v2582 = vpop.f32.mrf.mxu0
    %2583 = vmatprep.mubr.f32.mxu0 0.0
    %2584 = vmatmul.mubr.f32.gmra.mxu0 %v2512
    %v2585 = vpop.f32.mrf.mxu0
    %v2586 = vadd.f32 %v2505, %v2585
    %v2587 = vpop.f32.mrf.mxu0
    %2588 = vdwg.mxu0
    %v2589 = vld [vmem:[#allocation13] sm:$0x1]
    %v2591 = vlaneseq
    %v2592 = vshrl.u32 %v2591, 7
    %v2593 = vsub.s32 0, %v2592
    %v2594 = vrot.slane %v2589, %v2593
    %v2596 = vadd.f32 %v2581, %v2594
    %v2597 = vadd.f32 %v2586, %v2594
    %vm2598 = vcmp.gt.f32.partialorder %v2596, 0.0
    %vm2599 = vcmp.gt.f32.partialorder %v2597, 0.0
    %v2600 = vmin.f32 %v2596, 0.0
    %v2601 = vmin.f32 %v2597, 0.0
    %v2602 = vmul.f32 %v2600, 1.442695
    %v2603 = vpow.pop %v2602
    %v2604 = vmul.f32 %v2601, 1.442695
    %v2605 = vpow.pop %v2604
    %v2606 = vsub.f32 %v2603, 1.0
    %v2607 = vsub.f32 %v2605, 1.0
    %v2608 = vsel %vm2598, %v2596, %v2606
    %v2609 = vsel %vm2599, %v2597, %v2607
    %v2610 = vld [vmem:[%s1] sm:$0xff]
    %v2611 = vld [vmem:[%s1 + $0x8] sm:$0xff]
    %v2613 = vsel %vm701, %v2608, 0
    %v2616 = vsel %vm701, %v2609, 0
    %v2619 = vsel %vm701, %v1836, 0
    %v2622 = vsel %vm701, %v1837, 0
    %2624 = vmatprep.subr.mxu0 0.0
    %2625 = vmatpush1.xpose.msra.mxu0 0.0
    %2626 = vmatprep.subr.mxu0 0.0
    %2627 = vmatpush1.xpose.msra.mxu0 0.0
    %2628 = vmatprep.subr.mxu0 0.0
    %2629 = vmatpush1.xpose.msra.mxu0 0.0
    %2630 = vmatprep.subr.mxu0 0.0
    %2631 = vmatpush1.xpose.msra.mxu0 0.0
    %2632 = vmatprep.subr.mxu0 0.0
    %2633 = vmatpush1.xpose.msra.mxu0 0.0
    %2634 = vmatprep.subr.mxu0 0.0
    %2635 = vmatpush1.xpose.msra.mxu0 0.0
    %2636 = vmatprep.subr.mxu0 0.0
    %2637 = vmatpush1.xpose.msra.mxu0 0.0
    %2638 = vmatprep.subr.mxu0 0.0
    %2639 = vmatpush1.xpose.msra.mxu0 0.0
    %2640 = vmatprep.subr.mxu0 0.0
    %2641 = vmatpush1.xpose.msra.mxu0 0.0
    %2642 = vmatprep.subr.mxu0 0.0
    %2643 = vmatpush1.xpose.msra.mxu0 0.0
    %2644 = vmatprep.subr.mxu0 0.0
    %2645 = vmatpush1.xpose.msra.mxu0 0.0
    %2646 = vmatprep.subr.mxu0 0.0
    %2647 = vmatpush1.xpose.msra.mxu0 0.0
    %2648 = vmatprep.subr.mxu0 0.0
    %2649 = vmatpush1.xpose.msra.mxu0 0.0
    %2650 = vmatprep.subr.mxu0 0.0
    %2651 = vmatpush1.xpose.msra.mxu0 0.0
    %2652 = vmatprep.subr.mxu0 0.0
    %2653 = vmatpush1.xpose.msra.mxu0 %v2622
    %2654 = vmatprep.subr.mxu0 0.0
    %2655 = vmatpush1.xpose.msra.mxu0 %v2619
    %2656 = vmatprep.subr.mxu0 0.0
    %2657 = vmatpush2.xpose.msra.mxu0 0.0
    %2658 = vmatprep.subr.mxu0 0.0
    %2659 = vmatpush2.xpose.msra.mxu0 0.0
    %2660 = vmatprep.subr.mxu0 0.0
    %2661 = vmatpush2.xpose.msra.mxu0 0.0
    %2662 = vmatprep.subr.mxu0 0.0
    %2663 = vmatpush2.xpose.msra.mxu0 0.0
    %2664 = vmatprep.subr.mxu0 0.0
    %2665 = vmatpush2.xpose.msra.mxu0 0.0
    %2666 = vmatprep.subr.mxu0 0.0
    %2667 = vmatpush2.xpose.msra.mxu0 0.0
    %2668 = vmatprep.subr.mxu0 0.0
    %2669 = vmatpush2.xpose.msra.mxu0 0.0
    %2670 = vmatprep.subr.mxu0 0.0
    %2671 = vmatpush2.xpose.msra.mxu0 0.0
    %2672 = vmatprep.subr.mxu0 0.0
    %2673 = vmatpush2.xpose.msra.mxu0 0.0
    %2674 = vmatprep.subr.mxu0 0.0
    %2675 = vmatpush2.xpose.msra.mxu0 0.0
    %2676 = vmatprep.subr.mxu0 0.0
    %2677 = vmatpush2.xpose.msra.mxu0 0.0
    %2678 = vmatprep.subr.mxu0 0.0
    %2679 = vmatpush2.xpose.msra.mxu0 0.0
    %2680 = vmatprep.subr.mxu0 0.0
    %2681 = vmatpush2.xpose.msra.mxu0 0.0
    %2682 = vmatprep.subr.mxu0 0.0
    %2683 = vmatpush2.xpose.msra.mxu0 0.0
    %2684 = vmatprep.subr.mxu0 0.0
    %2685 = vmatpush2.xpose.msra.mxu0 0.0
    %2686 = vmatprep.subr.mxu0 0.0
    %2687 = vmatpush2.xpose.msra.mxu0 0.0
    %2688 = vmatprep.mubr.f32.mxu0 0.0
    %2689 = vmatmul.mubr.f32.gmra.mxu0 %v2613
    %v2690 = vpop.f32.mrf.mxu0
    %v2691 = vadd.f32 %v2610, %v2690
    %v2692 = vpop.f32.mrf.mxu0
    %2693 = vmatprep.mubr.f32.mxu0 0.0
    %2694 = vmatmul.mubr.f32.gmra.mxu0 %v2616
    %v2695 = vpop.f32.mrf.mxu0
    %v2696 = vadd.f32 %v2611, %v2695
    %v2697 = vpop.f32.mrf.mxu0
    %2698 = vdwg.mxu0
    %v2699 = vsel %vm1861, %v2691, -inf
    %2700 = vmax.xlane.f32.xlu0 %v2699
    %v2701 = vpop.xlane.xlu0 %2700
    %v2702 = vsel %vm1861, %v2696, -inf
    %2703 = vmax.xlane.f32.xlu0 %v2702
    %v2704 = vpop.xlane.xlu0 %2703
    %v2705 = vsub.f32 %v2691, %v2701
    %v2706 = vsub.f32 %v2696, %v2704
    %v2707 = vmul.f32 %v2705, 1.442695
    %v2708 = vpow.pop %v2707
    %v2709 = vmul.f32 %v2706, 1.442695
    %v2710 = vpow.pop %v2709
    %v2711 = vsel %vm1861, %v2708, 0.0
    %2712 = vadd.xlane.f32.xlu0 %v2711
    %v2713 = vpop.xlane.xlu0 %2712
    %v2714 = vsel %vm1861, %v2710, 0.0
    %2715 = vadd.xlane.f32.xlu0 %v2714
    %v2716 = vpop.xlane.xlu0 %2715
    %v2717 = vmax.f32 %v2713, 1e-30
    %v2718 = vmax.f32 %v2716, 1e-30
    %v2719 = vrcp.pop %v2717
    %v2720 = vmul.f32 %v2708, %v2719
    %v2721 = vrcp.pop %v2718
    %v2722 = vmul.f32 %v2710, %v2721
    %v2724 = vsel %vm1861, %v2720, 0
    %v2727 = vsel %vm1861, %v2722, 0
    %2729 = vmatprep.subr.mxu0 0.0
    %2730 = vmatpush1.msra.mxu0 0.0
    %2731 = vmatprep.subr.mxu0 0.0
    %2732 = vmatpush1.msra.mxu0 0.0
    %2733 = vmatprep.subr.mxu0 0.0
    %2734 = vmatpush1.msra.mxu0 0.0
    %2735 = vmatprep.subr.mxu0 0.0
    %2736 = vmatpush1.msra.mxu0 0.0
    %2737 = vmatprep.subr.mxu0 0.0
    %2738 = vmatpush1.msra.mxu0 0.0
    %2739 = vmatprep.subr.mxu0 0.0
    %2740 = vmatpush1.msra.mxu0 0.0
    %2741 = vmatprep.subr.mxu0 0.0
    %2742 = vmatpush1.msra.mxu0 0.0
    %2743 = vmatprep.subr.mxu0 0.0
    %2744 = vmatpush1.msra.mxu0 0.0
    %2745 = vmatprep.subr.mxu0 0.0
    %2746 = vmatpush1.msra.mxu0 0.0
    %2747 = vmatprep.subr.mxu0 0.0
    %2748 = vmatpush1.msra.mxu0 0.0
    %2749 = vmatprep.subr.mxu0 0.0
    %2750 = vmatpush1.msra.mxu0 0.0
    %2751 = vmatprep.subr.mxu0 0.0
    %2752 = vmatpush1.msra.mxu0 0.0
    %2753 = vmatprep.subr.mxu0 0.0
    %2754 = vmatpush1.msra.mxu0 0.0
    %2755 = vmatprep.subr.mxu0 0.0
    %2756 = vmatpush1.msra.mxu0 0.0
    %2757 = vmatprep.subr.mxu0 0.0
    %2758 = vmatpush1.msra.mxu0 %v1837
    %2759 = vmatprep.subr.mxu0 0.0
    %2760 = vmatpush1.msra.mxu0 %v1836
    %2761 = vmatprep.subr.mxu0 0.0
    %2762 = vmatpush2.msra.mxu0 0.0
    %2763 = vmatprep.subr.mxu0 0.0
    %2764 = vmatpush2.msra.mxu0 0.0
    %2765 = vmatprep.subr.mxu0 0.0
    %2766 = vmatpush2.msra.mxu0 0.0
    %2767 = vmatprep.subr.mxu0 0.0
    %2768 = vmatpush2.msra.mxu0 0.0
    %2769 = vmatprep.subr.mxu0 0.0
    %2770 = vmatpush2.msra.mxu0 0.0
    %2771 = vmatprep.subr.mxu0 0.0
    %2772 = vmatpush2.msra.mxu0 0.0
    %2773 = vmatprep.subr.mxu0 0.0
    %2774 = vmatpush2.msra.mxu0 0.0
    %2775 = vmatprep.subr.mxu0 0.0
    %2776 = vmatpush2.msra.mxu0 0.0
    %2777 = vmatprep.subr.mxu0 0.0
    %2778 = vmatpush2.msra.mxu0 0.0
    %2779 = vmatprep.subr.mxu0 0.0
    %2780 = vmatpush2.msra.mxu0 0.0
    %2781 = vmatprep.subr.mxu0 0.0
    %2782 = vmatpush2.msra.mxu0 0.0
    %2783 = vmatprep.subr.mxu0 0.0
    %2784 = vmatpush2.msra.mxu0 0.0
    %2785 = vmatprep.subr.mxu0 0.0
    %2786 = vmatpush2.msra.mxu0 0.0
    %2787 = vmatprep.subr.mxu0 0.0
    %2788 = vmatpush2.msra.mxu0 0.0
    %2789 = vmatprep.subr.mxu0 0.0
    %2790 = vmatpush2.msra.mxu0 0.0
    %2791 = vmatprep.subr.mxu0 0.0
    %2792 = vmatpush2.msra.mxu0 0.0
    %2793 = vmatprep.mubr.f32.mxu0 0.0
    %2794 = vmatmul.mubr.f32.gmra.mxu0 %v2724
    %v2795 = vpop.f32.mrf.mxu0
    %v2796 = vadd.f32 0.0, %v2795
    %v2797 = vpop.f32.mrf.mxu0
    %2798 = vmatprep.mubr.f32.mxu0 0.0
    %2799 = vmatmul.mubr.f32.gmra.mxu0 %v2727
    %v2800 = vpop.f32.mrf.mxu0
    %v2801 = vadd.f32 0.0, %v2800
    %v2802 = vpop.f32.mrf.mxu0
    %2803 = vdwg.mxu0
    %v2804 = vmul.f32 %v2608, %v2796
    %v2805 = vmul.f32 %v2609, %v2801
    %v2806 = vld [vmem:[#allocation14] sm:$0xff]
    %v2807 = vld [vmem:[#allocation14 + $0x8] sm:$0xff]
    %v2808 = vld [vmem:[#allocation14 + $0x10] sm:$0xff]
    %v2809 = vld [vmem:[#allocation14 + $0x18] sm:$0xff]
    %v2810 = vld [vmem:[#allocation14 + $0x20] sm:$0xff]
    %v2811 = vld [vmem:[#allocation14 + $0x28] sm:$0xff]
    %v2812 = vld [vmem:[#allocation14 + $0x30] sm:$0xff]
    %v2813 = vld [vmem:[#allocation14 + $0x38] sm:$0xff]
    %v2814 = vld [vmem:[#allocation14 + $0x40] sm:$0xff]
    %v2815 = vld [vmem:[#allocation14 + $0x48] sm:$0xff]
    %v2816 = vld [vmem:[#allocation14 + $0x50] sm:$0xff]
    %v2817 = vld [vmem:[#allocation14 + $0x58] sm:$0xff]
    %v2818 = vld [vmem:[#allocation14 + $0x60] sm:$0xff]
    %v2819 = vld [vmem:[#allocation14 + $0x68] sm:$0xff]
    %v2820 = vld [vmem:[#allocation14 + $0x70] sm:$0xff]
    %v2821 = vld [vmem:[#allocation14 + $0x78] sm:$0xff]
    %v2822 = vld [vmem:[#allocation14 + $0x80] sm:$0xff]
    %v2823 = vld [vmem:[#allocation14 + $0x88] sm:$0xff]
    %v2824 = vld [vmem:[#allocation14 + $0x90] sm:$0xff]
    %v2825 = vld [vmem:[#allocation14 + $0x98] sm:$0xff]
    %v2826 = vld [vmem:[#allocation14 + $0xa0] sm:$0xff]
    %v2827 = vld [vmem:[#allocation14 + $0xa8] sm:$0xff]
    %v2828 = vld [vmem:[#allocation14 + $0xb0] sm:$0xff]
    %v2829 = vld [vmem:[#allocation14 + $0xb8] sm:$0xff]
    %v2830 = vld [vmem:[#allocation14 + $0xc0] sm:$0xff]
    %v2831 = vld [vmem:[#allocation14 + $0xc8] sm:$0xff]
    %v2832 = vld [vmem:[#allocation14 + $0xd0] sm:$0xff]
    %v2833 = vld [vmem:[#allocation14 + $0xd8] sm:$0xff]
    %v2834 = vld [vmem:[#allocation14 + $0xe0] sm:$0xff]
    %v2835 = vld [vmem:[#allocation14 + $0xe8] sm:$0xff]
    %v2836 = vld [vmem:[#allocation14 + $0xf0] sm:$0xff]
    %v2837 = vld [vmem:[#allocation14 + $0xf8] sm:$0xff]
    %v2838 = vld [vmem:[#allocation14 + $0x100] sm:$0xff]
    %v2839 = vld [vmem:[#allocation14 + $0x108] sm:$0xff]
    %v2840 = vld [vmem:[#allocation14 + $0x110] sm:$0xff]
    %v2841 = vld [vmem:[#allocation14 + $0x118] sm:$0xff]
    %v2842 = vld [vmem:[#allocation14 + $0x120] sm:$0xff]
    %v2843 = vld [vmem:[#allocation14 + $0x128] sm:$0xff]
    %v2844 = vld [vmem:[#allocation14 + $0x130] sm:$0xff]
    %v2845 = vld [vmem:[#allocation14 + $0x138] sm:$0xff]
    %v2846 = vld [vmem:[#allocation14 + $0x140] sm:$0xff]
    %v2847 = vld [vmem:[#allocation14 + $0x148] sm:$0xff]
    %v2848 = vld [vmem:[#allocation14 + $0x150] sm:$0xff]
    %v2849 = vld [vmem:[#allocation14 + $0x158] sm:$0xff]
    %v2850 = vld [vmem:[#allocation14 + $0x160] sm:$0xff]
    %v2851 = vld [vmem:[#allocation14 + $0x168] sm:$0xff]
    %v2852 = vld [vmem:[#allocation14 + $0x170] sm:$0xff]
    %v2853 = vld [vmem:[#allocation14 + $0x178] sm:$0xff]
    %v2854 = vld [vmem:[#allocation14 + $0x180] sm:$0xff]
    %v2855 = vld [vmem:[#allocation14 + $0x188] sm:$0xff]
    %v2856 = vld [vmem:[#allocation14 + $0x190] sm:$0xff]
    %v2857 = vld [vmem:[#allocation14 + $0x198] sm:$0xff]
    %v2858 = vld [vmem:[#allocation14 + $0x1a0] sm:$0xff]
    %v2859 = vld [vmem:[#allocation14 + $0x1a8] sm:$0xff]
    %v2860 = vld [vmem:[#allocation14 + $0x1b0] sm:$0xff]
    %v2861 = vld [vmem:[#allocation14 + $0x1b8] sm:$0xff]
    %v2862 = vld [vmem:[#allocation14 + $0x1c0] sm:$0xff]
    %v2863 = vld [vmem:[#allocation14 + $0x1c8] sm:$0xff]
    %v2864 = vld [vmem:[#allocation14 + $0x1d0] sm:$0xff]
    %v2865 = vld [vmem:[#allocation14 + $0x1d8] sm:$0xff]
    %v2866 = vld [vmem:[#allocation14 + $0x1e0] sm:$0xff]
    %v2867 = vld [vmem:[#allocation14 + $0x1e8] sm:$0xff]
    %v2868 = vld [vmem:[#allocation14 + $0x1f0] sm:$0xff]
    %v2869 = vld [vmem:[#allocation14 + $0x1f8] sm:$0xff]
    %v2870 = vld [vmem:[#allocation14 + $0x200] sm:$0xff]
    %v2871 = vld [vmem:[#allocation14 + $0x208] sm:$0xff]
    %v2872 = vld [vmem:[#allocation14 + $0x210] sm:$0xff]
    %v2873 = vld [vmem:[#allocation14 + $0x218] sm:$0xff]
    %v2874 = vld [vmem:[#allocation14 + $0x220] sm:$0xff]
    %v2875 = vld [vmem:[#allocation14 + $0x228] sm:$0xff]
    %v2876 = vld [vmem:[#allocation14 + $0x230] sm:$0xff]
    %v2877 = vld [vmem:[#allocation14 + $0x238] sm:$0xff]
    %v2878 = vld [vmem:[#allocation14 + $0x240] sm:$0xff]
    %v2879 = vld [vmem:[#allocation14 + $0x248] sm:$0xff]
    %v2880 = vld [vmem:[#allocation14 + $0x250] sm:$0xff]
    %v2881 = vld [vmem:[#allocation14 + $0x258] sm:$0xff]
    %v2882 = vld [vmem:[#allocation14 + $0x260] sm:$0xff]
    %v2883 = vld [vmem:[#allocation14 + $0x268] sm:$0xff]
    %v2884 = vld [vmem:[#allocation14 + $0x270] sm:$0xff]
    %v2885 = vld [vmem:[#allocation14 + $0x278] sm:$0xff]
    %v2886 = vld [vmem:[#allocation14 + $0x280] sm:$0xff]
    %v2887 = vld [vmem:[#allocation14 + $0x288] sm:$0xff]
    %v2888 = vld [vmem:[#allocation14 + $0x290] sm:$0xff]
    %v2889 = vld [vmem:[#allocation14 + $0x298] sm:$0xff]
    %v2890 = vld [vmem:[#allocation14 + $0x2a0] sm:$0xff]
    %v2891 = vld [vmem:[#allocation14 + $0x2a8] sm:$0xff]
    %v2892 = vld [vmem:[#allocation14 + $0x2b0] sm:$0xff]
    %v2893 = vld [vmem:[#allocation14 + $0x2b8] sm:$0xff]
    %v2894 = vld [vmem:[#allocation14 + $0x2c0] sm:$0xff]
    %v2895 = vld [vmem:[#allocation14 + $0x2c8] sm:$0xff]
    %v2896 = vld [vmem:[#allocation14 + $0x2d0] sm:$0xff]
    %v2897 = vld [vmem:[#allocation14 + $0x2d8] sm:$0xff]
    %v2898 = vld [vmem:[#allocation14 + $0x2e0] sm:$0xff]
    %v2899 = vld [vmem:[#allocation14 + $0x2e8] sm:$0xff]
    %v2900 = vld [vmem:[#allocation14 + $0x2f0] sm:$0xff]
    %v2901 = vld [vmem:[#allocation14 + $0x2f8] sm:$0xff]
    %v2903 = vsel %vm701, %v2796, 0
    %v2906 = vsel %vm701, %v2801, 0
    %2908 = vmatprep.subr.mxu0 0.0
    %2909 = vmatpush1.msra.mxu0 0.0
    %2910 = vmatprep.subr.mxu0 0.0
    %2911 = vmatpush1.msra.mxu0 0.0
    %2912 = vmatprep.subr.mxu0 0.0
    %2913 = vmatpush1.msra.mxu0 0.0
    %2914 = vmatprep.subr.mxu0 0.0
    %2915 = vmatpush1.msra.mxu0 0.0
    %2916 = vmatprep.subr.mxu0 0.0
    %2917 = vmatpush1.msra.mxu0 0.0
    %2918 = vmatprep.subr.mxu0 0.0
    %2919 = vmatpush1.msra.mxu0 0.0
    %2920 = vmatprep.subr.mxu0 0.0
    %2921 = vmatpush1.msra.mxu0 0.0
    %2922 = vmatprep.subr.mxu0 0.0
    %2923 = vmatpush1.msra.mxu0 0.0
    %2924 = vmatprep.subr.mxu0 %v2867
    %2925 = vmatpush1.msra.mxu0 %v2866
    %2926 = vmatprep.subr.mxu0 %v2863
    %2927 = vmatpush1.msra.mxu0 %v2862
    %2928 = vmatprep.subr.mxu0 %v2859
    %2929 = vmatpush1.msra.mxu0 %v2858
    %2930 = vmatprep.subr.mxu0 %v2855
    %2931 = vmatpush1.msra.mxu0 %v2854
    %2932 = vmatprep.subr.mxu0 %v2851
    %2933 = vmatpush1.msra.mxu0 %v2850
    %2934 = vmatprep.subr.mxu0 %v2847
    %2935 = vmatpush1.msra.mxu0 %v2846
    %2936 = vmatprep.subr.mxu0 %v2843
    %2937 = vmatpush1.msra.mxu0 %v2842
    %2938 = vmatprep.subr.mxu0 %v2839
    %2939 = vmatpush1.msra.mxu0 %v2838
    %2940 = vmatprep.subr.mxu0 0.0
    %2941 = vmatpush2.msra.mxu0 0.0
    %2942 = vmatprep.subr.mxu0 0.0
    %2943 = vmatpush2.msra.mxu0 0.0
    %2944 = vmatprep.subr.mxu0 0.0
    %2945 = vmatpush2.msra.mxu0 0.0
    %2946 = vmatprep.subr.mxu0 0.0
    %2947 = vmatpush2.msra.mxu0 0.0
    %2948 = vmatprep.subr.mxu0 0.0
    %2949 = vmatpush2.msra.mxu0 0.0
    %2950 = vmatprep.subr.mxu0 0.0
    %2951 = vmatpush2.msra.mxu0 0.0
    %2952 = vmatprep.subr.mxu0 0.0
    %2953 = vmatpush2.msra.mxu0 0.0
    %2954 = vmatprep.subr.mxu0 0.0
    %2955 = vmatpush2.msra.mxu0 0.0
    %2956 = vmatprep.subr.mxu0 0.0
    %2957 = vmatpush2.msra.mxu0 0.0
    %2958 = vmatprep.subr.mxu0 0.0
    %2959 = vmatpush2.msra.mxu0 0.0
    %2960 = vmatprep.subr.mxu0 0.0
    %2961 = vmatpush2.msra.mxu0 0.0
    %2962 = vmatprep.subr.mxu0 0.0
    %2963 = vmatpush2.msra.mxu0 0.0
    %2964 = vmatprep.subr.mxu0 0.0
    %2965 = vmatpush2.msra.mxu0 0.0
    %2966 = vmatprep.subr.mxu0 0.0
    %2967 = vmatpush2.msra.mxu0 0.0
    %2968 = vmatprep.subr.mxu0 0.0
    %2969 = vmatpush2.msra.mxu0 0.0
    %2970 = vmatprep.subr.mxu0 0.0
    %2971 = vmatpush2.msra.mxu0 0.0
    %2972 = vmatprep.mubr.f32.mxu0 0.0
    %2973 = vmatmul.mubr.f32.gmra.mxu0 %v2903
    %v2974 = vpop.f32.mrf.mxu0
    %v2975 = vadd.f32 0.0, %v2974
    %v2976 = vpop.f32.mrf.mxu0
    %v2977 = vadd.f32 0.0, %v2976
    %2978 = vmatprep.mubr.f32.mxu0 0.0
    %2979 = vmatmul.mubr.f32.gmra.mxu0 %v2906
    %v2980 = vpop.f32.mrf.mxu0
    %v2981 = vadd.f32 0.0, %v2980
    %v2982 = vpop.f32.mrf.mxu0
    %v2983 = vadd.f32 0.0, %v2982
    %2984 = vdwg.mxu0
    %2985 = vmatprep.subr.mxu0 0.0
    %2986 = vmatpush1.msra.mxu0 0.0
    %2987 = vmatprep.subr.mxu0 0.0
    %2988 = vmatpush1.msra.mxu0 0.0
    %2989 = vmatprep.subr.mxu0 0.0
    %2990 = vmatpush1.msra.mxu0 0.0
    %2991 = vmatprep.subr.mxu0 0.0
    %2992 = vmatpush1.msra.mxu0 0.0
    %2993 = vmatprep.subr.mxu0 0.0
    %2994 = vmatpush1.msra.mxu0 0.0
    %2995 = vmatprep.subr.mxu0 0.0
    %2996 = vmatpush1.msra.mxu0 0.0
    %2997 = vmatprep.subr.mxu0 0.0
    %2998 = vmatpush1.msra.mxu0 0.0
    %2999 = vmatprep.subr.mxu0 0.0
    %3000 = vmatpush1.msra.mxu0 0.0
    %3001 = vmatprep.subr.mxu0 %v2869
    %3002 = vmatpush1.msra.mxu0 %v2868
    %3003 = vmatprep.subr.mxu0 %v2865
    %3004 = vmatpush1.msra.mxu0 %v2864
    %3005 = vmatprep.subr.mxu0 %v2861
    %3006 = vmatpush1.msra.mxu0 %v2860
    %3007 = vmatprep.subr.mxu0 %v2857
    %3008 = vmatpush1.msra.mxu0 %v2856
    %3009 = vmatprep.subr.mxu0 %v2853
    %3010 = vmatpush1.msra.mxu0 %v2852
    %3011 = vmatprep.subr.mxu0 %v2849
    %3012 = vmatpush1.msra.mxu0 %v2848
    %3013 = vmatprep.subr.mxu0 %v2845
    %3014 = vmatpush1.msra.mxu0 %v2844
    %3015 = vmatprep.subr.mxu0 %v2841
    %3016 = vmatpush1.msra.mxu0 %v2840
    %3017 = vmatprep.subr.mxu0 0.0
    %3018 = vmatpush2.msra.mxu0 0.0
    %3019 = vmatprep.subr.mxu0 0.0
    %3020 = vmatpush2.msra.mxu0 0.0
    %3021 = vmatprep.subr.mxu0 0.0
    %3022 = vmatpush2.msra.mxu0 0.0
    %3023 = vmatprep.subr.mxu0 0.0
    %3024 = vmatpush2.msra.mxu0 0.0
    %3025 = vmatprep.subr.mxu0 0.0
    %3026 = vmatpush2.msra.mxu0 0.0
    %3027 = vmatprep.subr.mxu0 0.0
    %3028 = vmatpush2.msra.mxu0 0.0
    %3029 = vmatprep.subr.mxu0 0.0
    %3030 = vmatpush2.msra.mxu0 0.0
    %3031 = vmatprep.subr.mxu0 0.0
    %3032 = vmatpush2.msra.mxu0 0.0
    %3033 = vmatprep.subr.mxu0 0.0
    %3034 = vmatpush2.msra.mxu0 0.0
    %3035 = vmatprep.subr.mxu0 0.0
    %3036 = vmatpush2.msra.mxu0 0.0
    %3037 = vmatprep.subr.mxu0 0.0
    %3038 = vmatpush2.msra.mxu0 0.0
    %3039 = vmatprep.subr.mxu0 0.0
    %3040 = vmatpush2.msra.mxu0 0.0
    %3041 = vmatprep.subr.mxu0 0.0
    %3042 = vmatpush2.msra.mxu0 0.0
    %3043 = vmatprep.subr.mxu0 0.0
    %3044 = vmatpush2.msra.mxu0 0.0
    %3045 = vmatprep.subr.mxu0 0.0
    %3046 = vmatpush2.msra.mxu0 0.0
    %3047 = vmatprep.subr.mxu0 0.0
    %3048 = vmatpush2.msra.mxu0 0.0
    %3049 = vmatprep.mubr.f32.mxu0 0.0
    %3050 = vmatmul.mubr.f32.gmra.mxu0 %v2903
    %v3051 = vpop.f32.mrf.mxu0
    %v3052 = vadd.f32 0.0, %v3051
    %v3053 = vpop.f32.mrf.mxu0
    %v3054 = vadd.f32 0.0, %v3053
    %3055 = vmatprep.mubr.f32.mxu0 0.0
    %3056 = vmatmul.mubr.f32.gmra.mxu0 %v2906
    %v3057 = vpop.f32.mrf.mxu0
    %v3058 = vadd.f32 0.0, %v3057
    %v3059 = vpop.f32.mrf.mxu0
    %v3060 = vadd.f32 0.0, %v3059
    %3061 = vdwg.mxu0
    %3062 = vmatprep.subr.mxu0 0.0
    %3063 = vmatpush1.msra.mxu0 0.0
    %3064 = vmatprep.subr.mxu0 0.0
    %3065 = vmatpush1.msra.mxu0 0.0
    %3066 = vmatprep.subr.mxu0 0.0
    %3067 = vmatpush1.msra.mxu0 0.0
    %3068 = vmatprep.subr.mxu0 0.0
    %3069 = vmatpush1.msra.mxu0 0.0
    %3070 = vmatprep.subr.mxu0 0.0
    %3071 = vmatpush1.msra.mxu0 0.0
    %3072 = vmatprep.subr.mxu0 0.0
    %3073 = vmatpush1.msra.mxu0 0.0
    %3074 = vmatprep.subr.mxu0 0.0
    %3075 = vmatpush1.msra.mxu0 0.0
    %3076 = vmatprep.subr.mxu0 0.0
    %3077 = vmatpush1.msra.mxu0 0.0
    %3078 = vmatprep.subr.mxu0 %v2835
    %3079 = vmatpush1.msra.mxu0 %v2834
    %3080 = vmatprep.subr.mxu0 %v2831
    %3081 = vmatpush1.msra.mxu0 %v2830
    %3082 = vmatprep.subr.mxu0 %v2827
    %3083 = vmatpush1.msra.mxu0 %v2826
    %3084 = vmatprep.subr.mxu0 %v2823
    %3085 = vmatpush1.msra.mxu0 %v2822
    %3086 = vmatprep.subr.mxu0 %v2819
    %3087 = vmatpush1.msra.mxu0 %v2818
    %3088 = vmatprep.subr.mxu0 %v2815
    %3089 = vmatpush1.msra.mxu0 %v2814
    %3090 = vmatprep.subr.mxu0 %v2811
    %3091 = vmatpush1.msra.mxu0 %v2810
    %3092 = vmatprep.subr.mxu0 %v2807
    %3093 = vmatpush1.msra.mxu0 %v2806
    %3094 = vmatprep.subr.mxu0 0.0
    %3095 = vmatpush2.msra.mxu0 0.0
    %3096 = vmatprep.subr.mxu0 0.0
    %3097 = vmatpush2.msra.mxu0 0.0
    %3098 = vmatprep.subr.mxu0 0.0
    %3099 = vmatpush2.msra.mxu0 0.0
    %3100 = vmatprep.subr.mxu0 0.0
    %3101 = vmatpush2.msra.mxu0 0.0
    %3102 = vmatprep.subr.mxu0 0.0
    %3103 = vmatpush2.msra.mxu0 0.0
    %3104 = vmatprep.subr.mxu0 0.0
    %3105 = vmatpush2.msra.mxu0 0.0
    %3106 = vmatprep.subr.mxu0 0.0
    %3107 = vmatpush2.msra.mxu0 0.0
    %3108 = vmatprep.subr.mxu0 0.0
    %3109 = vmatpush2.msra.mxu0 0.0
    %3110 = vmatprep.subr.mxu0 0.0
    %3111 = vmatpush2.msra.mxu0 0.0
    %3112 = vmatprep.subr.mxu0 0.0
    %3113 = vmatpush2.msra.mxu0 0.0
    %3114 = vmatprep.subr.mxu0 0.0
    %3115 = vmatpush2.msra.mxu0 0.0
    %3116 = vmatprep.subr.mxu0 0.0
    %3117 = vmatpush2.msra.mxu0 0.0
    %3118 = vmatprep.subr.mxu0 0.0
    %3119 = vmatpush2.msra.mxu0 0.0
    %3120 = vmatprep.subr.mxu0 0.0
    %3121 = vmatpush2.msra.mxu0 0.0
    %3122 = vmatprep.subr.mxu0 0.0
    %3123 = vmatpush2.msra.mxu0 0.0
    %3124 = vmatprep.subr.mxu0 0.0
    %3125 = vmatpush2.msra.mxu0 0.0
    %3126 = vmatprep.mubr.f32.mxu0 0.0
    %3127 = vmatmul.mubr.f32.gmra.mxu0 %v2613
    %v3128 = vpop.f32.mrf.mxu0
    %v3129 = vadd.f32 %v2975, %v3128
    %v3130 = vpop.f32.mrf.mxu0
    %v3131 = vadd.f32 %v2977, %v3130
    %3132 = vmatprep.mubr.f32.mxu0 0.0
    %3133 = vmatmul.mubr.f32.gmra.mxu0 %v2616
    %v3134 = vpop.f32.mrf.mxu0
    %v3135 = vadd.f32 %v2981, %v3134
    %v3136 = vpop.f32.mrf.mxu0
    %v3137 = vadd.f32 %v2983, %v3136
    %3138 = vdwg.mxu0
    %3139 = vmatprep.subr.mxu0 0.0
    %3140 = vmatpush1.msra.mxu0 0.0
    %3141 = vmatprep.subr.mxu0 0.0
    %3142 = vmatpush1.msra.mxu0 0.0
    %3143 = vmatprep.subr.mxu0 0.0
    %3144 = vmatpush1.msra.mxu0 0.0
    %3145 = vmatprep.subr.mxu0 0.0
    %3146 = vmatpush1.msra.mxu0 0.0
    %3147 = vmatprep.subr.mxu0 0.0
    %3148 = vmatpush1.msra.mxu0 0.0
    %3149 = vmatprep.subr.mxu0 0.0
    %3150 = vmatpush1.msra.mxu0 0.0
    %3151 = vmatprep.subr.mxu0 0.0
    %3152 = vmatpush1.msra.mxu0 0.0
    %3153 = vmatprep.subr.mxu0 0.0
    %3154 = vmatpush1.msra.mxu0 0.0
    %3155 = vmatprep.subr.mxu0 %v2837
    %3156 = vmatpush1.msra.mxu0 %v2836
    %3157 = vmatprep.subr.mxu0 %v2833
    %3158 = vmatpush1.msra.mxu0 %v2832
    %3159 = vmatprep.subr.mxu0 %v2829
    %3160 = vmatpush1.msra.mxu0 %v2828
    %3161 = vmatprep.subr.mxu0 %v2825
    %3162 = vmatpush1.msra.mxu0 %v2824
    %3163 = vmatprep.subr.mxu0 %v2821
    %3164 = vmatpush1.msra.mxu0 %v2820
    %3165 = vmatprep.subr.mxu0 %v2817
    %3166 = vmatpush1.msra.mxu0 %v2816
    %3167 = vmatprep.subr.mxu0 %v2813
    %3168 = vmatpush1.msra.mxu0 %v2812
    %3169 = vmatprep.subr.mxu0 %v2809
    %3170 = vmatpush1.msra.mxu0 %v2808
    %3171 = vmatprep.subr.mxu0 0.0
    %3172 = vmatpush2.msra.mxu0 0.0
    %3173 = vmatprep.subr.mxu0 0.0
    %3174 = vmatpush2.msra.mxu0 0.0
    %3175 = vmatprep.subr.mxu0 0.0
    %3176 = vmatpush2.msra.mxu0 0.0
    %3177 = vmatprep.subr.mxu0 0.0
    %3178 = vmatpush2.msra.mxu0 0.0
    %3179 = vmatprep.subr.mxu0 0.0
    %3180 = vmatpush2.msra.mxu0 0.0
    %3181 = vmatprep.subr.mxu0 0.0
    %3182 = vmatpush2.msra.mxu0 0.0
    %3183 = vmatprep.subr.mxu0 0.0
    %3184 = vmatpush2.msra.mxu0 0.0
    %3185 = vmatprep.subr.mxu0 0.0
    %3186 = vmatpush2.msra.mxu0 0.0
    %3187 = vmatprep.subr.mxu0 0.0
    %3188 = vmatpush2.msra.mxu0 0.0
    %3189 = vmatprep.subr.mxu0 0.0
    %3190 = vmatpush2.msra.mxu0 0.0
    %3191 = vmatprep.subr.mxu0 0.0
    %3192 = vmatpush2.msra.mxu0 0.0
    %3193 = vmatprep.subr.mxu0 0.0
    %3194 = vmatpush2.msra.mxu0 0.0
    %3195 = vmatprep.subr.mxu0 0.0
    %3196 = vmatpush2.msra.mxu0 0.0
    %3197 = vmatprep.subr.mxu0 0.0
    %3198 = vmatpush2.msra.mxu0 0.0
    %3199 = vmatprep.subr.mxu0 0.0
    %3200 = vmatpush2.msra.mxu0 0.0
    %3201 = vmatprep.subr.mxu0 0.0
    %3202 = vmatpush2.msra.mxu0 0.0
    %3203 = vmatprep.mubr.f32.mxu0 0.0
    %3204 = vmatmul.mubr.f32.gmra.mxu0 %v2613
    %v3205 = vpop.f32.mrf.mxu0
    %v3206 = vadd.f32 %v3052, %v3205
    %v3207 = vpop.f32.mrf.mxu0
    %v3208 = vadd.f32 %v3054, %v3207
    %3209 = vmatprep.mubr.f32.mxu0 0.0
    %3210 = vmatmul.mubr.f32.gmra.mxu0 %v2616
    %v3211 = vpop.f32.mrf.mxu0
    %v3212 = vadd.f32 %v3058, %v3211
    %v3213 = vpop.f32.mrf.mxu0
    %v3214 = vadd.f32 %v3060, %v3213
    %3215 = vdwg.mxu0
    %v3217 = vsel %vm701, %v2804, 0
    %v3220 = vsel %vm701, %v2805, 0
    %3222 = vmatprep.subr.mxu0 0.0
    %3223 = vmatpush1.msra.mxu0 0.0
    %3224 = vmatprep.subr.mxu0 0.0
    %3225 = vmatpush1.msra.mxu0 0.0
    %3226 = vmatprep.subr.mxu0 0.0
    %3227 = vmatpush1.msra.mxu0 0.0
    %3228 = vmatprep.subr.mxu0 0.0
    %3229 = vmatpush1.msra.mxu0 0.0
    %3230 = vmatprep.subr.mxu0 0.0
    %3231 = vmatpush1.msra.mxu0 0.0
    %3232 = vmatprep.subr.mxu0 0.0
    %3233 = vmatpush1.msra.mxu0 0.0
    %3234 = vmatprep.subr.mxu0 0.0
    %3235 = vmatpush1.msra.mxu0 0.0
    %3236 = vmatprep.subr.mxu0 0.0
    %3237 = vmatpush1.msra.mxu0 0.0
    %3238 = vmatprep.subr.mxu0 %v2899
    %3239 = vmatpush1.msra.mxu0 %v2898
    %3240 = vmatprep.subr.mxu0 %v2895
    %3241 = vmatpush1.msra.mxu0 %v2894
    %3242 = vmatprep.subr.mxu0 %v2891
    %3243 = vmatpush1.msra.mxu0 %v2890
    %3244 = vmatprep.subr.mxu0 %v2887
    %3245 = vmatpush1.msra.mxu0 %v2886
    %3246 = vmatprep.subr.mxu0 %v2883
    %3247 = vmatpush1.msra.mxu0 %v2882
    %3248 = vmatprep.subr.mxu0 %v2879
    %3249 = vmatpush1.msra.mxu0 %v2878
    %3250 = vmatprep.subr.mxu0 %v2875
    %3251 = vmatpush1.msra.mxu0 %v2874
    %3252 = vmatprep.subr.mxu0 %v2871
    %3253 = vmatpush1.msra.mxu0 %v2870
    %3254 = vmatprep.subr.mxu0 0.0
    %3255 = vmatpush2.msra.mxu0 0.0
    %3256 = vmatprep.subr.mxu0 0.0
    %3257 = vmatpush2.msra.mxu0 0.0
    %3258 = vmatprep.subr.mxu0 0.0
    %3259 = vmatpush2.msra.mxu0 0.0
    %3260 = vmatprep.subr.mxu0 0.0
    %3261 = vmatpush2.msra.mxu0 0.0
    %3262 = vmatprep.subr.mxu0 0.0
    %3263 = vmatpush2.msra.mxu0 0.0
    %3264 = vmatprep.subr.mxu0 0.0
    %3265 = vmatpush2.msra.mxu0 0.0
    %3266 = vmatprep.subr.mxu0 0.0
    %3267 = vmatpush2.msra.mxu0 0.0
    %3268 = vmatprep.subr.mxu0 0.0
    %3269 = vmatpush2.msra.mxu0 0.0
    %3270 = vmatprep.subr.mxu0 0.0
    %3271 = vmatpush2.msra.mxu0 0.0
    %3272 = vmatprep.subr.mxu0 0.0
    %3273 = vmatpush2.msra.mxu0 0.0
    %3274 = vmatprep.subr.mxu0 0.0
    %3275 = vmatpush2.msra.mxu0 0.0
    %3276 = vmatprep.subr.mxu0 0.0
    %3277 = vmatpush2.msra.mxu0 0.0
    %3278 = vmatprep.subr.mxu0 0.0
    %3279 = vmatpush2.msra.mxu0 0.0
    %3280 = vmatprep.subr.mxu0 0.0
    %3281 = vmatpush2.msra.mxu0 0.0
    %3282 = vmatprep.subr.mxu0 0.0
    %3283 = vmatpush2.msra.mxu0 0.0
    %3284 = vmatprep.subr.mxu0 0.0
    %3285 = vmatpush2.msra.mxu0 0.0
    %3286 = vmatprep.mubr.f32.mxu0 0.0
    %3287 = vmatmul.mubr.f32.gmra.mxu0 %v3217
    %v3288 = vpop.f32.mrf.mxu0
    %v3289 = vadd.f32 0.0, %v3288
    %v3290 = vpop.f32.mrf.mxu0
    %v3291 = vadd.f32 0.0, %v3290
    %3292 = vmatprep.mubr.f32.mxu0 0.0
    %3293 = vmatmul.mubr.f32.gmra.mxu0 %v3220
    %v3294 = vpop.f32.mrf.mxu0
    %v3295 = vadd.f32 0.0, %v3294
    %v3296 = vpop.f32.mrf.mxu0
    %v3297 = vadd.f32 0.0, %v3296
    %3298 = vdwg.mxu0
    %3299 = vmatprep.subr.mxu0 0.0
    %3300 = vmatpush1.msra.mxu0 0.0
    %3301 = vmatprep.subr.mxu0 0.0
    %3302 = vmatpush1.msra.mxu0 0.0
    %3303 = vmatprep.subr.mxu0 0.0
    %3304 = vmatpush1.msra.mxu0 0.0
    %3305 = vmatprep.subr.mxu0 0.0
    %3306 = vmatpush1.msra.mxu0 0.0
    %3307 = vmatprep.subr.mxu0 0.0
    %3308 = vmatpush1.msra.mxu0 0.0
    %3309 = vmatprep.subr.mxu0 0.0
    %3310 = vmatpush1.msra.mxu0 0.0
    %3311 = vmatprep.subr.mxu0 0.0
    %3312 = vmatpush1.msra.mxu0 0.0
    %3313 = vmatprep.subr.mxu0 0.0
    %3314 = vmatpush1.msra.mxu0 0.0
    %3315 = vmatprep.subr.mxu0 %v2901
    %3316 = vmatpush1.msra.mxu0 %v2900
    %3317 = vmatprep.subr.mxu0 %v2897
    %3318 = vmatpush1.msra.mxu0 %v2896
    %3319 = vmatprep.subr.mxu0 %v2893
    %3320 = vmatpush1.msra.mxu0 %v2892
    %3321 = vmatprep.subr.mxu0 %v2889
    %3322 = vmatpush1.msra.mxu0 %v2888
    %3323 = vmatprep.subr.mxu0 %v2885
    %3324 = vmatpush1.msra.mxu0 %v2884
    %3325 = vmatprep.subr.mxu0 %v2881
    %3326 = vmatpush1.msra.mxu0 %v2880
    %3327 = vmatprep.subr.mxu0 %v2877
    %3328 = vmatpush1.msra.mxu0 %v2876
    %3329 = vmatprep.subr.mxu0 %v2873
    %3330 = vmatpush1.msra.mxu0 %v2872
    %3331 = vmatprep.subr.mxu0 0.0
    %3332 = vmatpush2.msra.mxu0 0.0
    %3333 = vmatprep.subr.mxu0 0.0
    %3334 = vmatpush2.msra.mxu0 0.0
    %3335 = vmatprep.subr.mxu0 0.0
    %3336 = vmatpush2.msra.mxu0 0.0
    %3337 = vmatprep.subr.mxu0 0.0
    %3338 = vmatpush2.msra.mxu0 0.0
    %3339 = vmatprep.subr.mxu0 0.0
    %3340 = vmatpush2.msra.mxu0 0.0
    %3341 = vmatprep.subr.mxu0 0.0
    %3342 = vmatpush2.msra.mxu0 0.0
    %3343 = vmatprep.subr.mxu0 0.0
    %3344 = vmatpush2.msra.mxu0 0.0
    %3345 = vmatprep.subr.mxu0 0.0
    %3346 = vmatpush2.msra.mxu0 0.0
    %3347 = vmatprep.subr.mxu0 0.0
    %3348 = vmatpush2.msra.mxu0 0.0
    %3349 = vmatprep.subr.mxu0 0.0
    %3350 = vmatpush2.msra.mxu0 0.0
    %3351 = vmatprep.subr.mxu0 0.0
    %3352 = vmatpush2.msra.mxu0 0.0
    %3353 = vmatprep.subr.mxu0 0.0
    %3354 = vmatpush2.msra.mxu0 0.0
    %3355 = vmatprep.subr.mxu0 0.0
    %3356 = vmatpush2.msra.mxu0 0.0
    %3357 = vmatprep.subr.mxu0 0.0
    %3358 = vmatpush2.msra.mxu0 0.0
    %3359 = vmatprep.subr.mxu0 0.0
    %3360 = vmatpush2.msra.mxu0 0.0
    %3361 = vmatprep.subr.mxu0 0.0
    %3362 = vmatpush2.msra.mxu0 0.0
    %3363 = vmatprep.mubr.f32.mxu0 0.0
    %3364 = vmatmul.mubr.f32.gmra.mxu0 %v3217
    %v3365 = vpop.f32.mrf.mxu0
    %v3366 = vadd.f32 0.0, %v3365
    %v3367 = vpop.f32.mrf.mxu0
    %v3368 = vadd.f32 0.0, %v3367
    %3369 = vmatprep.mubr.f32.mxu0 0.0
    %3370 = vmatmul.mubr.f32.gmra.mxu0 %v3220
    %v3371 = vpop.f32.mrf.mxu0
    %v3372 = vadd.f32 0.0, %v3371
    %v3373 = vpop.f32.mrf.mxu0
    %v3374 = vadd.f32 0.0, %v3373
    %3375 = vdwg.mxu0
    %v3376 = vadd.f32 %v3129, %v3289
    %v3377 = vadd.f32 %v3131, %v3291
    %v3378 = vadd.f32 %v3206, %v3366
    %v3379 = vadd.f32 %v3208, %v3368
    %v3380 = vadd.f32 %v3135, %v3295
    %v3381 = vadd.f32 %v3137, %v3297
    %v3382 = vadd.f32 %v3212, %v3372
    %v3383 = vadd.f32 %v3214, %v3374
    %v3384 = vld [vmem:[%s16] sm:$0xf]
    %v3386 = vlaneseq
    %v3387 = vshrl.u32 %v3386, 7
    %v3388 = vsub.s32 0, %v3387
    %v3389 = vrot.slane %v3384, %v3388
    %v3390 = vlaneseq
    %v3391 = vshrl.u32 %v3390, 7
    %v3392 = vsub.s32 1, %v3391
    %v3393 = vrot.slane %v3384, %v3392
    %v3394 = vlaneseq
    %v3395 = vshrl.u32 %v3394, 7
    %v3396 = vsub.s32 2, %v3395
    %v3397 = vrot.slane %v3384, %v3396
    %v3398 = vlaneseq
    %v3399 = vshrl.u32 %v3398, 7
    %v3400 = vsub.s32 3, %v3399
    %v3401 = vrot.slane %v3384, %v3400
    %v3406 = vadd.f32 %v3376, %v3389
    %v3407 = vadd.f32 %v3377, %v3393
    %v3408 = vadd.f32 %v3378, %v3397
    %v3409 = vadd.f32 %v3379, %v3401
    %v3410 = vadd.f32 %v3380, %v3389
    %v3411 = vadd.f32 %v3381, %v3393
    %v3412 = vadd.f32 %v3382, %v3397
    %v3413 = vadd.f32 %v3383, %v3401
    %v3414 = vld [vmem:[#allocation16] sm:$0xff]
    %v3415 = vld [vmem:[#allocation16 + $0x8] sm:$0xff]
    %v3416 = vld [vmem:[#allocation16 + $0x10] sm:$0xff]
    %v3417 = vld [vmem:[#allocation16 + $0x18] sm:$0xff]
    %v3418 = vld [vmem:[#allocation16 + $0x20] sm:$0xff]
    %v3419 = vld [vmem:[#allocation16 + $0x28] sm:$0xff]
    %v3420 = vld [vmem:[#allocation16 + $0x30] sm:$0xff]
    %v3421 = vld [vmem:[#allocation16 + $0x38] sm:$0xff]
    %v3422 = vld [vmem:[#allocation16 + $0x40] sm:$0xff]
    %v3423 = vld [vmem:[#allocation16 + $0x48] sm:$0xff]
    %v3424 = vld [vmem:[#allocation16 + $0x50] sm:$0xff]
    %v3425 = vld [vmem:[#allocation16 + $0x58] sm:$0xff]
    %v3426 = vld [vmem:[#allocation16 + $0x60] sm:$0xff]
    %v3427 = vld [vmem:[#allocation16 + $0x68] sm:$0xff]
    %v3428 = vld [vmem:[#allocation16 + $0x70] sm:$0xff]
    %v3429 = vld [vmem:[#allocation16 + $0x78] sm:$0xff]
    %v3430 = vld [vmem:[#allocation16 + $0x80] sm:$0xff]
    %v3431 = vld [vmem:[#allocation16 + $0x88] sm:$0xff]
    %v3432 = vld [vmem:[#allocation16 + $0x90] sm:$0xff]
    %v3433 = vld [vmem:[#allocation16 + $0x98] sm:$0xff]
    %v3434 = vld [vmem:[#allocation16 + $0xa0] sm:$0xff]
    %v3435 = vld [vmem:[#allocation16 + $0xa8] sm:$0xff]
    %v3436 = vld [vmem:[#allocation16 + $0xb0] sm:$0xff]
    %v3437 = vld [vmem:[#allocation16 + $0xb8] sm:$0xff]
    %v3438 = vld [vmem:[#allocation16 + $0xc0] sm:$0xff]
    %v3439 = vld [vmem:[#allocation16 + $0xc8] sm:$0xff]
    %v3440 = vld [vmem:[#allocation16 + $0xd0] sm:$0xff]
    %v3441 = vld [vmem:[#allocation16 + $0xd8] sm:$0xff]
    %v3442 = vld [vmem:[#allocation16 + $0xe0] sm:$0xff]
    %v3443 = vld [vmem:[#allocation16 + $0xe8] sm:$0xff]
    %v3444 = vld [vmem:[#allocation16 + $0xf0] sm:$0xff]
    %v3445 = vld [vmem:[#allocation16 + $0xf8] sm:$0xff]
    %v3446 = vld [vmem:[#allocation16 + $0x100] sm:$0xff]
    %v3447 = vld [vmem:[#allocation16 + $0x108] sm:$0xff]
    %v3448 = vld [vmem:[#allocation16 + $0x110] sm:$0xff]
    %v3449 = vld [vmem:[#allocation16 + $0x118] sm:$0xff]
    %v3450 = vld [vmem:[#allocation16 + $0x120] sm:$0xff]
    %v3451 = vld [vmem:[#allocation16 + $0x128] sm:$0xff]
    %v3452 = vld [vmem:[#allocation16 + $0x130] sm:$0xff]
    %v3453 = vld [vmem:[#allocation16 + $0x138] sm:$0xff]
    %v3454 = vld [vmem:[#allocation16 + $0x140] sm:$0xff]
    %v3455 = vld [vmem:[#allocation16 + $0x148] sm:$0xff]
    %v3456 = vld [vmem:[#allocation16 + $0x150] sm:$0xff]
    %v3457 = vld [vmem:[#allocation16 + $0x158] sm:$0xff]
    %v3458 = vld [vmem:[#allocation16 + $0x160] sm:$0xff]
    %v3459 = vld [vmem:[#allocation16 + $0x168] sm:$0xff]
    %v3460 = vld [vmem:[#allocation16 + $0x170] sm:$0xff]
    %v3461 = vld [vmem:[#allocation16 + $0x178] sm:$0xff]
    %v3462 = vld [vmem:[#allocation16 + $0x180] sm:$0xff]
    %v3463 = vld [vmem:[#allocation16 + $0x188] sm:$0xff]
    %v3464 = vld [vmem:[#allocation16 + $0x190] sm:$0xff]
    %v3465 = vld [vmem:[#allocation16 + $0x198] sm:$0xff]
    %v3466 = vld [vmem:[#allocation16 + $0x1a0] sm:$0xff]
    %v3467 = vld [vmem:[#allocation16 + $0x1a8] sm:$0xff]
    %v3468 = vld [vmem:[#allocation16 + $0x1b0] sm:$0xff]
    %v3469 = vld [vmem:[#allocation16 + $0x1b8] sm:$0xff]
    %v3470 = vld [vmem:[#allocation16 + $0x1c0] sm:$0xff]
    %v3471 = vld [vmem:[#allocation16 + $0x1c8] sm:$0xff]
    %v3472 = vld [vmem:[#allocation16 + $0x1d0] sm:$0xff]
    %v3473 = vld [vmem:[#allocation16 + $0x1d8] sm:$0xff]
    %v3474 = vld [vmem:[#allocation16 + $0x1e0] sm:$0xff]
    %v3475 = vld [vmem:[#allocation16 + $0x1e8] sm:$0xff]
    %v3476 = vld [vmem:[#allocation16 + $0x1f0] sm:$0xff]
    %v3477 = vld [vmem:[#allocation16 + $0x1f8] sm:$0xff]
    %v3478 = vadd.s32 %v192, 256
    %v3479 = vadd.s32 %v192, 384
    %v3480 = vand.u32 %v192, 64
    %v3481 = vand.u32 %v665, 64
    %v3482 = vand.u32 %v3478, 64
    %v3483 = vand.u32 %v3479, 64
    %vm3484 = vcmp.eq.s32.totalorder %v3480, 0
    %vm3485 = vcmp.eq.s32.totalorder %v3481, 0
    %vm3486 = vcmp.eq.s32.totalorder %v3482, 0
    %vm3487 = vcmp.eq.s32.totalorder %v3483, 0
    %vm3488 = vcmp.lt.s32.totalorder %v192, 384
    %vm3489 = vcmp.lt.s32.totalorder %v665, 384
    %vm3490 = vcmp.lt.s32.totalorder %v3478, 384
    %vm3491 = vcmp.lt.s32.totalorder %v3479, 384
    %v3492 = vsel %vm3488, 0.5, 1.0
    %v3493 = vsel %vm3489, 0.5, 1.0
    %v3494 = vsel %vm3490, 0.5, 1.0
    %v3495 = vsel %vm3491, 0.5, 1.0
    %v3496 = vsel %vm3488, 0.5, 0.0
    %v3497 = vsel %vm3489, 0.5, 0.0
    %v3498 = vsel %vm3490, 0.5, 0.0
    %v3499 = vsel %vm3491, 0.5, 0.0
    %v3500 = vsel %vm3484, 1, 0
    %v3501 = vsel %vm3485, 1, 0
    %v3502 = vsel %vm3486, 1, 0
    %v3503 = vsel %vm3487, 1, 0
    %vm3504 = vcmp.eq.s32.totalorder %v3500, 1
    %vm3505 = vcmp.eq.s32.totalorder %v3501, 1
    %vm3506 = vcmp.eq.s32.totalorder %v3502, 1
    %vm3507 = vcmp.eq.s32.totalorder %v3503, 1
    %v3516 = vrot.slane %v3410, 7
    %v3517 = vsel %vm685, %v3516, %v3406
    %v3518 = vrot.slane %v3411, 7
    %v3519 = vsel %vm685, %v3518, %v3407
    %v3520 = vrot.slane %v3412, 7
    %v3521 = vsel %vm685, %v3520, %v3408
    %v3522 = vrot.slane %v3413, 7
    %v3523 = vsel %vm685, %v3522, %v3409
    %v3528 = vrot.slane %v3406, 7
    %v3529 = vrot.slane %v3410, 6
    %v3530 = vsel %vm685, %v3529, %v3528
    %v3531 = vrot.slane %v3407, 7
    %v3532 = vrot.slane %v3411, 6
    %v3533 = vsel %vm685, %v3532, %v3531
    %v3534 = vrot.slane %v3408, 7
    %v3535 = vrot.slane %v3412, 6
    %v3536 = vsel %vm685, %v3535, %v3534
    %v3537 = vrot.slane %v3409, 7
    %v3538 = vrot.slane %v3413, 6
    %v3539 = vsel %vm685, %v3538, %v3537
    %v3544 = vsel %vm3504, %v3517, %v3530
    %v3545 = vsel %vm3505, %v3519, %v3533
    %v3546 = vsel %vm3506, %v3521, %v3536
    %v3547 = vsel %vm3507, %v3523, %v3539
    %3548 = vmatprep.subr.mxu0 %v3475
    %3549 = vmatpush1.msra.mxu0 %v3474
    %3550 = vmatprep.subr.mxu0 %v3471
    %3551 = vmatpush1.msra.mxu0 %v3470
    %3552 = vmatprep.subr.mxu0 %v3467
    %3553 = vmatpush1.msra.mxu0 %v3466
    %3554 = vmatprep.subr.mxu0 %v3463
    %3555 = vmatpush1.msra.mxu0 %v3462
    %3556 = vmatprep.subr.mxu0 %v3459
    %3557 = vmatpush1.msra.mxu0 %v3458
    %3558 = vmatprep.subr.mxu0 %v3455
    %3559 = vmatpush1.msra.mxu0 %v3454
    %3560 = vmatprep.subr.mxu0 %v3451
    %3561 = vmatpush1.msra.mxu0 %v3450
    %3562 = vmatprep.subr.mxu0 %v3447
    %3563 = vmatpush1.msra.mxu0 %v3446
    %3564 = vmatprep.subr.mxu0 %v3443
    %3565 = vmatpush1.msra.mxu0 %v3442
    %3566 = vmatprep.subr.mxu0 %v3439
    %3567 = vmatpush1.msra.mxu0 %v3438
    %3568 = vmatprep.subr.mxu0 %v3435
    %3569 = vmatpush1.msra.mxu0 %v3434
    %3570 = vmatprep.subr.mxu0 %v3431
    %3571 = vmatpush1.msra.mxu0 %v3430
    %3572 = vmatprep.subr.mxu0 %v3427
    %3573 = vmatpush1.msra.mxu0 %v3426
    %3574 = vmatprep.subr.mxu0 %v3423
    %3575 = vmatpush1.msra.mxu0 %v3422
    %3576 = vmatprep.subr.mxu0 %v3419
    %3577 = vmatpush1.msra.mxu0 %v3418
    %3578 = vmatprep.subr.mxu0 %v3415
    %3579 = vmatpush1.msra.mxu0 %v3414
    %3580 = vmatprep.subr.mxu0 0.0
    %3581 = vmatpush2.msra.mxu0 0.0
    %3582 = vmatprep.subr.mxu0 0.0
    %3583 = vmatpush2.msra.mxu0 0.0
    %3584 = vmatprep.subr.mxu0 0.0
    %3585 = vmatpush2.msra.mxu0 0.0
    %3586 = vmatprep.subr.mxu0 0.0
    %3587 = vmatpush2.msra.mxu0 0.0
    %3588 = vmatprep.subr.mxu0 0.0
    %3589 = vmatpush2.msra.mxu0 0.0
    %3590 = vmatprep.subr.mxu0 0.0
    %3591 = vmatpush2.msra.mxu0 0.0
    %3592 = vmatprep.subr.mxu0 0.0
    %3593 = vmatpush2.msra.mxu0 0.0
    %3594 = vmatprep.subr.mxu0 0.0
    %3595 = vmatpush2.msra.mxu0 0.0
    %3596 = vmatprep.subr.mxu0 0.0
    %3597 = vmatpush2.msra.mxu0 0.0
    %3598 = vmatprep.subr.mxu0 0.0
    %3599 = vmatpush2.msra.mxu0 0.0
    %3600 = vmatprep.subr.mxu0 0.0
    %3601 = vmatpush2.msra.mxu0 0.0
    %3602 = vmatprep.subr.mxu0 0.0
    %3603 = vmatpush2.msra.mxu0 0.0
    %3604 = vmatprep.subr.mxu0 0.0
    %3605 = vmatpush2.msra.mxu0 0.0
    %3606 = vmatprep.subr.mxu0 0.0
    %3607 = vmatpush2.msra.mxu0 0.0
    %3608 = vmatprep.subr.mxu0 0.0
    %3609 = vmatpush2.msra.mxu0 0.0
    %3610 = vmatprep.subr.mxu0 0.0
    %3611 = vmatpush2.msra.mxu0 0.0
    %3612 = vmatprep.mubr.f32.mxu0 0.0
    %3613 = vmatmul.mubr.f32.gmra.mxu0 0.0
    %v3614 = vpop.f32.mrf.mxu0
    %v3615 = vadd.f32 0.0, %v3614
    %v3616 = vpop.f32.mrf.mxu0
    %v3617 = vadd.f32 0.0, %v3616
    %3618 = vdwg.mxu0
    %3619 = vmatprep.subr.mxu0 %v3477
    %3620 = vmatpush1.msra.mxu0 %v3476
    %3621 = vmatprep.subr.mxu0 %v3473
    %3622 = vmatpush1.msra.mxu0 %v3472
    %3623 = vmatprep.subr.mxu0 %v3469
    %3624 = vmatpush1.msra.mxu0 %v3468
    %3625 = vmatprep.subr.mxu0 %v3465
    %3626 = vmatpush1.msra.mxu0 %v3464
    %3627 = vmatprep.subr.mxu0 %v3461
    %3628 = vmatpush1.msra.mxu0 %v3460
    %3629 = vmatprep.subr.mxu0 %v3457
    %3630 = vmatpush1.msra.mxu0 %v3456
    %3631 = vmatprep.subr.mxu0 %v3453
    %3632 = vmatpush1.msra.mxu0 %v3452
    %3633 = vmatprep.subr.mxu0 %v3449
    %3634 = vmatpush1.msra.mxu0 %v3448
    %3635 = vmatprep.subr.mxu0 %v3445
    %3636 = vmatpush1.msra.mxu0 %v3444
    %3637 = vmatprep.subr.mxu0 %v3441
    %3638 = vmatpush1.msra.mxu0 %v3440
    %3639 = vmatprep.subr.mxu0 %v3437
    %3640 = vmatpush1.msra.mxu0 %v3436
    %3641 = vmatprep.subr.mxu0 %v3433
    %3642 = vmatpush1.msra.mxu0 %v3432
    %3643 = vmatprep.subr.mxu0 %v3429
    %3644 = vmatpush1.msra.mxu0 %v3428
    %3645 = vmatprep.subr.mxu0 %v3425
    %3646 = vmatpush1.msra.mxu0 %v3424
    %3647 = vmatprep.subr.mxu0 %v3421
    %3648 = vmatpush1.msra.mxu0 %v3420
    %3649 = vmatprep.subr.mxu0 %v3417
    %3650 = vmatpush1.msra.mxu0 %v3416
    %3651 = vmatprep.subr.mxu0 0.0
    %3652 = vmatpush2.msra.mxu0 0.0
    %3653 = vmatprep.subr.mxu0 0.0
    %3654 = vmatpush2.msra.mxu0 0.0
    %3655 = vmatprep.subr.mxu0 0.0
    %3656 = vmatpush2.msra.mxu0 0.0
    %3657 = vmatprep.subr.mxu0 0.0
    %3658 = vmatpush2.msra.mxu0 0.0
    %3659 = vmatprep.subr.mxu0 0.0
    %3660 = vmatpush2.msra.mxu0 0.0
    %3661 = vmatprep.subr.mxu0 0.0
    %3662 = vmatpush2.msra.mxu0 0.0
    %3663 = vmatprep.subr.mxu0 0.0
    %3664 = vmatpush2.msra.mxu0 0.0
    %3665 = vmatprep.subr.mxu0 0.0
    %3666 = vmatpush2.msra.mxu0 0.0
    %3667 = vmatprep.subr.mxu0 0.0
    %3668 = vmatpush2.msra.mxu0 0.0
    %3669 = vmatprep.subr.mxu0 0.0
    %3670 = vmatpush2.msra.mxu0 0.0
    %3671 = vmatprep.subr.mxu0 0.0
    %3672 = vmatpush2.msra.mxu0 0.0
    %3673 = vmatprep.subr.mxu0 0.0
    %3674 = vmatpush2.msra.mxu0 0.0
    %3675 = vmatprep.subr.mxu0 0.0
    %3676 = vmatpush2.msra.mxu0 0.0
    %3677 = vmatprep.subr.mxu0 0.0
    %3678 = vmatpush2.msra.mxu0 0.0
    %3679 = vmatprep.subr.mxu0 0.0
    %3680 = vmatpush2.msra.mxu0 0.0
    %3681 = vmatprep.subr.mxu0 0.0
    %3682 = vmatpush2.msra.mxu0 0.0
    %3683 = vmatprep.mubr.f32.mxu0 0.0
    %3684 = vmatmul.mubr.f32.gmra.mxu0 0.0
    %v3685 = vpop.f32.mrf.mxu0
    %v3686 = vadd.f32 0.0, %v3685
    %v3687 = vpop.f32.mrf.mxu0
    %v3688 = vadd.f32 0.0, %v3687
    %3689 = vdwg.mxu0
    %v3690 = vadd.f32 %v3544, %v3615
    %v3691 = vadd.f32 %v3545, %v3617
    %v3692 = vadd.f32 %v3546, %v3686
    %v3693 = vadd.f32 %v3547, %v3688
    %v3694 = vtanh.pop %v3690
    %v3695 = vtanh.pop %v3691
    %v3696 = vtanh.pop %v3692
    %v3697 = vtanh.pop %v3693
    %v3698 = vmul.f32 %v3694, %v3492
    %v3699 = vmul.f32 %v3695, %v3493
    %v3700 = vmul.f32 %v3696, %v3494
    %v3701 = vmul.f32 %v3697, %v3495
    %v3702 = vadd.f32 %v3698, %v3496
    %v3703 = vadd.f32 %v3699, %v3497
    %v3704 = vadd.f32 %v3700, %v3498
    %v3705 = vadd.f32 %v3701, %v3499
    %v3706 = vmul.f32 %v3703, 0.0
    %v3707 = vmul.f32 %v3702, %v3705
    %v3708 = vadd.f32 %v3706, %v3707
    %v3709 = vtanh.pop %v3708
    %v3710 = vmul.f32 %v3704, %v3709
    %v3711 = vrot.slane %v3406, 1
    %v3712 = vsel %vm685, %v3410, %v3711
    %v3713 = vrot.slane %v3407, 1
    %v3714 = vsel %vm685, %v3411, %v3713
    %v3715 = vrot.slane %v3408, 1
    %v3716 = vsel %vm685, %v3412, %v3715
    %v3717 = vrot.slane %v3409, 1
    %v3718 = vsel %vm685, %v3413, %v3717
    %v3723 = vrot.slane %v3406, 6
    %v3724 = vrot.slane %v3410, 5
    %v3725 = vsel %vm685, %v3724, %v3723
    %v3726 = vrot.slane %v3407, 6
    %v3727 = vrot.slane %v3411, 5
    %v3728 = vsel %vm685, %v3727, %v3726
    %v3729 = vrot.slane %v3408, 6
    %v3730 = vrot.slane %v3412, 5
    %v3731 = vsel %vm685, %v3730, %v3729
    %v3732 = vrot.slane %v3409, 6
    %v3733 = vrot.slane %v3413, 5
    %v3734 = vsel %vm685, %v3733, %v3732
    %v3739 = vsel %vm3504, %v3712, %v3725
    %v3740 = vsel %vm3505, %v3714, %v3728
    %v3741 = vsel %vm3506, %v3716, %v3731
    %v3742 = vsel %vm3507, %v3718, %v3734
    %3743 = vmatprep.subr.mxu0 %v3475
    %3744 = vmatpush1.msra.mxu0 %v3474
    %3745 = vmatprep.subr.mxu0 %v3471
    %3746 = vmatpush1.msra.mxu0 %v3470
    %3747 = vmatprep.subr.mxu0 %v3467
    %3748 = vmatpush1.msra.mxu0 %v3466
    %3749 = vmatprep.subr.mxu0 %v3463
    %3750 = vmatpush1.msra.mxu0 %v3462
    %3751 = vmatprep.subr.mxu0 %v3459
    %3752 = vmatpush1.msra.mxu0 %v3458
    %3753 = vmatprep.subr.mxu0 %v3455
    %3754 = vmatpush1.msra.mxu0 %v3454
    %3755 = vmatprep.subr.mxu0 %v3451
    %3756 = vmatpush1.msra.mxu0 %v3450
    %3757 = vmatprep.subr.mxu0 %v3447
    %3758 = vmatpush1.msra.mxu0 %v3446
    %3759 = vmatprep.subr.mxu0 %v3443
    %3760 = vmatpush1.msra.mxu0 %v3442
    %3761 = vmatprep.subr.mxu0 %v3439
    %3762 = vmatpush1.msra.mxu0 %v3438
    %3763 = vmatprep.subr.mxu0 %v3435
    %3764 = vmatpush1.msra.mxu0 %v3434
    %3765 = vmatprep.subr.mxu0 %v3431
    %3766 = vmatpush1.msra.mxu0 %v3430
    %3767 = vmatprep.subr.mxu0 %v3427
    %3768 = vmatpush1.msra.mxu0 %v3426
    %3769 = vmatprep.subr.mxu0 %v3423
    %3770 = vmatpush1.msra.mxu0 %v3422
    %3771 = vmatprep.subr.mxu0 %v3419
    %3772 = vmatpush1.msra.mxu0 %v3418
    %3773 = vmatprep.subr.mxu0 %v3415
    %3774 = vmatpush1.msra.mxu0 %v3414
    %3775 = vmatprep.subr.mxu0 0.0
    %3776 = vmatpush2.msra.mxu0 0.0
    %3777 = vmatprep.subr.mxu0 0.0
    %3778 = vmatpush2.msra.mxu0 0.0
    %3779 = vmatprep.subr.mxu0 0.0
    %3780 = vmatpush2.msra.mxu0 0.0
    %3781 = vmatprep.subr.mxu0 0.0
    %3782 = vmatpush2.msra.mxu0 0.0
    %3783 = vmatprep.subr.mxu0 0.0
    %3784 = vmatpush2.msra.mxu0 0.0
    %3785 = vmatprep.subr.mxu0 0.0
    %3786 = vmatpush2.msra.mxu0 0.0
    %3787 = vmatprep.subr.mxu0 0.0
    %3788 = vmatpush2.msra.mxu0 0.0
    %3789 = vmatprep.subr.mxu0 0.0
    %3790 = vmatpush2.msra.mxu0 0.0
    %3791 = vmatprep.subr.mxu0 0.0
    %3792 = vmatpush2.msra.mxu0 0.0
    %3793 = vmatprep.subr.mxu0 0.0
    %3794 = vmatpush2.msra.mxu0 0.0
    %3795 = vmatprep.subr.mxu0 0.0
    %3796 = vmatpush2.msra.mxu0 0.0
    %3797 = vmatprep.subr.mxu0 0.0
    %3798 = vmatpush2.msra.mxu0 0.0
    %3799 = vmatprep.subr.mxu0 0.0
    %3800 = vmatpush2.msra.mxu0 0.0
    %3801 = vmatprep.subr.mxu0 0.0
    %3802 = vmatpush2.msra.mxu0 0.0
    %3803 = vmatprep.subr.mxu0 0.0
    %3804 = vmatpush2.msra.mxu0 0.0
    %3805 = vmatprep.subr.mxu0 0.0
    %3806 = vmatpush2.msra.mxu0 0.0
    %3807 = vmatprep.mubr.f32.mxu0 0.0
    %3808 = vmatmul.mubr.f32.gmra.mxu0 %v3710
    %v3809 = vpop.f32.mrf.mxu0
    %v3810 = vadd.f32 0.0, %v3809
    %v3811 = vpop.f32.mrf.mxu0
    %v3812 = vadd.f32 0.0, %v3811
    %3813 = vdwg.mxu0
    %3814 = vmatprep.subr.mxu0 %v3477
    %3815 = vmatpush1.msra.mxu0 %v3476
    %3816 = vmatprep.subr.mxu0 %v3473
    %3817 = vmatpush1.msra.mxu0 %v3472
    %3818 = vmatprep.subr.mxu0 %v3469
    %3819 = vmatpush1.msra.mxu0 %v3468
    %3820 = vmatprep.subr.mxu0 %v3465
    %3821 = vmatpush1.msra.mxu0 %v3464
    %3822 = vmatprep.subr.mxu0 %v3461
    %3823 = vmatpush1.msra.mxu0 %v3460
    %3824 = vmatprep.subr.mxu0 %v3457
    %3825 = vmatpush1.msra.mxu0 %v3456
    %3826 = vmatprep.subr.mxu0 %v3453
    %3827 = vmatpush1.msra.mxu0 %v3452
    %3828 = vmatprep.subr.mxu0 %v3449
    %3829 = vmatpush1.msra.mxu0 %v3448
    %3830 = vmatprep.subr.mxu0 %v3445
    %3831 = vmatpush1.msra.mxu0 %v3444
    %3832 = vmatprep.subr.mxu0 %v3441
    %3833 = vmatpush1.msra.mxu0 %v3440
    %3834 = vmatprep.subr.mxu0 %v3437
    %3835 = vmatpush1.msra.mxu0 %v3436
    %3836 = vmatprep.subr.mxu0 %v3433
    %3837 = vmatpush1.msra.mxu0 %v3432
    %3838 = vmatprep.subr.mxu0 %v3429
    %3839 = vmatpush1.msra.mxu0 %v3428
    %3840 = vmatprep.subr.mxu0 %v3425
    %3841 = vmatpush1.msra.mxu0 %v3424
    %3842 = vmatprep.subr.mxu0 %v3421
    %3843 = vmatpush1.msra.mxu0 %v3420
    %3844 = vmatprep.subr.mxu0 %v3417
    %3845 = vmatpush1.msra.mxu0 %v3416
    %3846 = vmatprep.subr.mxu0 0.0
    %3847 = vmatpush2.msra.mxu0 0.0
    %3848 = vmatprep.subr.mxu0 0.0
    %3849 = vmatpush2.msra.mxu0 0.0
    %3850 = vmatprep.subr.mxu0 0.0
    %3851 = vmatpush2.msra.mxu0 0.0
    %3852 = vmatprep.subr.mxu0 0.0
    %3853 = vmatpush2.msra.mxu0 0.0
    %3854 = vmatprep.subr.mxu0 0.0
    %3855 = vmatpush2.msra.mxu0 0.0
    %3856 = vmatprep.subr.mxu0 0.0
    %3857 = vmatpush2.msra.mxu0 0.0
    %3858 = vmatprep.subr.mxu0 0.0
    %3859 = vmatpush2.msra.mxu0 0.0
    %3860 = vmatprep.subr.mxu0 0.0
    %3861 = vmatpush2.msra.mxu0 0.0
    %3862 = vmatprep.subr.mxu0 0.0
    %3863 = vmatpush2.msra.mxu0 0.0
    %3864 = vmatprep.subr.mxu0 0.0
    %3865 = vmatpush2.msra.mxu0 0.0
    %3866 = vmatprep.subr.mxu0 0.0
    %3867 = vmatpush2.msra.mxu0 0.0
    %3868 = vmatprep.subr.mxu0 0.0
    %3869 = vmatpush2.msra.mxu0 0.0
    %3870 = vmatprep.subr.mxu0 0.0
    %3871 = vmatpush2.msra.mxu0 0.0
    %3872 = vmatprep.subr.mxu0 0.0
    %3873 = vmatpush2.msra.mxu0 0.0
    %3874 = vmatprep.subr.mxu0 0.0
    %3875 = vmatpush2.msra.mxu0 0.0
    %3876 = vmatprep.subr.mxu0 0.0
    %3877 = vmatpush2.msra.mxu0 0.0
    %3878 = vmatprep.mubr.f32.mxu0 0.0
    %3879 = vmatmul.mubr.f32.gmra.mxu0 %v3710
    %v3880 = vpop.f32.mrf.mxu0
    %v3881 = vadd.f32 0.0, %v3880
    %v3882 = vpop.f32.mrf.mxu0
    %v3883 = vadd.f32 0.0, %v3882
    %3884 = vdwg.mxu0
    %v3885 = vadd.f32 %v3739, %v3810
    %v3886 = vadd.f32 %v3740, %v3812
    %v3887 = vadd.f32 %v3741, %v3881
    %v3888 = vadd.f32 %v3742, %v3883
    %v3889 = vtanh.pop %v3885
    %v3890 = vtanh.pop %v3886
    %v3891 = vtanh.pop %v3887
    %v3892 = vtanh.pop %v3888
    %v3893 = vmul.f32 %v3889, %v3492
    %v3894 = vmul.f32 %v3890, %v3493
    %v3895 = vmul.f32 %v3891, %v3494
    %v3896 = vmul.f32 %v3892, %v3495
    %v3897 = vadd.f32 %v3893, %v3496
    %v3898 = vadd.f32 %v3894, %v3497
    %v3899 = vadd.f32 %v3895, %v3498
    %v3900 = vadd.f32 %v3896, %v3499
    %v3901 = vmul.f32 %v3898, %v3708
    %v3902 = vmul.f32 %v3897, %v3900
    %v3903 = vadd.f32 %v3901, %v3902
    %v3904 = vtanh.pop %v3903
    %v3905 = vmul.f32 %v3899, %v3904
    %v3906 = vrot.slane %v3406, 2
    %v3907 = vrot.slane %v3410, 1
    %v3908 = vsel %vm685, %v3907, %v3906
    %v3909 = vrot.slane %v3407, 2
    %v3910 = vrot.slane %v3411, 1
    %v3911 = vsel %vm685, %v3910, %v3909
    %v3912 = vrot.slane %v3408, 2
    %v3913 = vrot.slane %v3412, 1
    %v3914 = vsel %vm685, %v3913, %v3912
    %v3915 = vrot.slane %v3409, 2
    %v3916 = vrot.slane %v3413, 1
    %v3917 = vsel %vm685, %v3916, %v3915
    %v3922 = vrot.slane %v3406, 5
    %v3923 = vrot.slane %v3410, 4
    %v3924 = vsel %vm685, %v3923, %v3922
    %v3925 = vrot.slane %v3407, 5
    %v3926 = vrot.slane %v3411, 4
    %v3927 = vsel %vm685, %v3926, %v3925
    %v3928 = vrot.slane %v3408, 5
    %v3929 = vrot.slane %v3412, 4
    %v3930 = vsel %vm685, %v3929, %v3928
    %v3931 = vrot.slane %v3409, 5
    %v3932 = vrot.slane %v3413, 4
    %v3933 = vsel %vm685, %v3932, %v3931
    %v3938 = vsel %vm3504, %v3908, %v3924
    %v3939 = vsel %vm3505, %v3911, %v3927
    %v3940 = vsel %vm3506, %v3914, %v3930
    %v3941 = vsel %vm3507, %v3917, %v3933
    %3942 = vmatprep.subr.mxu0 %v3475
    %3943 = vmatpush1.msra.mxu0 %v3474
    %3944 = vmatprep.subr.mxu0 %v3471
    %3945 = vmatpush1.msra.mxu0 %v3470
    %3946 = vmatprep.subr.mxu0 %v3467
    %3947 = vmatpush1.msra.mxu0 %v3466
    %3948 = vmatprep.subr.mxu0 %v3463
    %3949 = vmatpush1.msra.mxu0 %v3462
    %3950 = vmatprep.subr.mxu0 %v3459
    %3951 = vmatpush1.msra.mxu0 %v3458
    %3952 = vmatprep.subr.mxu0 %v3455
    %3953 = vmatpush1.msra.mxu0 %v3454
    %3954 = vmatprep.subr.mxu0 %v3451
    %3955 = vmatpush1.msra.mxu0 %v3450
    %3956 = vmatprep.subr.mxu0 %v3447
    %3957 = vmatpush1.msra.mxu0 %v3446
    %3958 = vmatprep.subr.mxu0 %v3443
    %3959 = vmatpush1.msra.mxu0 %v3442
    %3960 = vmatprep.subr.mxu0 %v3439
    %3961 = vmatpush1.msra.mxu0 %v3438
    %3962 = vmatprep.subr.mxu0 %v3435
    %3963 = vmatpush1.msra.mxu0 %v3434
    %3964 = vmatprep.subr.mxu0 %v3431
    %3965 = vmatpush1.msra.mxu0 %v3430
    %3966 = vmatprep.subr.mxu0 %v3427
    %3967 = vmatpush1.msra.mxu0 %v3426
    %3968 = vmatprep.subr.mxu0 %v3423
    %3969 = vmatpush1.msra.mxu0 %v3422
    %3970 = vmatprep.subr.mxu0 %v3419
    %3971 = vmatpush1.msra.mxu0 %v3418
    %3972 = vmatprep.subr.mxu0 %v3415
    %3973 = vmatpush1.msra.mxu0 %v3414
    %3974 = vmatprep.subr.mxu0 0.0
    %3975 = vmatpush2.msra.mxu0 0.0
    %3976 = vmatprep.subr.mxu0 0.0
    %3977 = vmatpush2.msra.mxu0 0.0
    %3978 = vmatprep.subr.mxu0 0.0
    %3979 = vmatpush2.msra.mxu0 0.0
    %3980 = vmatprep.subr.mxu0 0.0
    %3981 = vmatpush2.msra.mxu0 0.0
    %3982 = vmatprep.subr.mxu0 0.0
    %3983 = vmatpush2.msra.mxu0 0.0
    %3984 = vmatprep.subr.mxu0 0.0
    %3985 = vmatpush2.msra.mxu0 0.0
    %3986 = vmatprep.subr.mxu0 0.0
    %3987 = vmatpush2.msra.mxu0 0.0
    %3988 = vmatprep.subr.mxu0 0.0
    %3989 = vmatpush2.msra.mxu0 0.0
    %3990 = vmatprep.subr.mxu0 0.0
    %3991 = vmatpush2.msra.mxu0 0.0
    %3992 = vmatprep.subr.mxu0 0.0
    %3993 = vmatpush2.msra.mxu0 0.0
    %3994 = vmatprep.subr.mxu0 0.0
    %3995 = vmatpush2.msra.mxu0 0.0
    %3996 = vmatprep.subr.mxu0 0.0
    %3997 = vmatpush2.msra.mxu0 0.0
    %3998 = vmatprep.subr.mxu0 0.0
    %3999 = vmatpush2.msra.mxu0 0.0
    %4000 = vmatprep.subr.mxu0 0.0
    %4001 = vmatpush2.msra.mxu0 0.0
    %4002 = vmatprep.subr.mxu0 0.0
    %4003 = vmatpush2.msra.mxu0 0.0
    %4004 = vmatprep.subr.mxu0 0.0
    %4005 = vmatpush2.msra.mxu0 0.0
    %4006 = vmatprep.mubr.f32.mxu0 0.0
    %4007 = vmatmul.mubr.f32.gmra.mxu0 %v3905
    %v4008 = vpop.f32.mrf.mxu0
    %v4009 = vadd.f32 0.0, %v4008
    %v4010 = vpop.f32.mrf.mxu0
    %v4011 = vadd.f32 0.0, %v4010
    %4012 = vdwg.mxu0
    %4013 = vmatprep.subr.mxu0 %v3477
    %4014 = vmatpush1.msra.mxu0 %v3476
    %4015 = vmatprep.subr.mxu0 %v3473
    %4016 = vmatpush1.msra.mxu0 %v3472
    %4017 = vmatprep.subr.mxu0 %v3469
    %4018 = vmatpush1.msra.mxu0 %v3468
    %4019 = vmatprep.subr.mxu0 %v3465
    %4020 = vmatpush1.msra.mxu0 %v3464
    %4021 = vmatprep.subr.mxu0 %v3461
    %4022 = vmatpush1.msra.mxu0 %v3460
    %4023 = vmatprep.subr.mxu0 %v3457
    %4024 = vmatpush1.msra.mxu0 %v3456
    %4025 = vmatprep.subr.mxu0 %v3453
    %4026 = vmatpush1.msra.mxu0 %v3452
    %4027 = vmatprep.subr.mxu0 %v3449
    %4028 = vmatpush1.msra.mxu0 %v3448
    %4029 = vmatprep.subr.mxu0 %v3445
    %4030 = vmatpush1.msra.mxu0 %v3444
    %4031 = vmatprep.subr.mxu0 %v3441
    %4032 = vmatpush1.msra.mxu0 %v3440
    %4033 = vmatprep.subr.mxu0 %v3437
    %4034 = vmatpush1.msra.mxu0 %v3436
    %4035 = vmatprep.subr.mxu0 %v3433
    %4036 = vmatpush1.msra.mxu0 %v3432
    %4037 = vmatprep.subr.mxu0 %v3429
    %4038 = vmatpush1.msra.mxu0 %v3428
    %4039 = vmatprep.subr.mxu0 %v3425
    %4040 = vmatpush1.msra.mxu0 %v3424
    %4041 = vmatprep.subr.mxu0 %v3421
    %4042 = vmatpush1.msra.mxu0 %v3420
    %4043 = vmatprep.subr.mxu0 %v3417
    %4044 = vmatpush1.msra.mxu0 %v3416
    %4045 = vmatprep.subr.mxu0 0.0
    %4046 = vmatpush2.msra.mxu0 0.0
    %4047 = vmatprep.subr.mxu0 0.0
    %4048 = vmatpush2.msra.mxu0 0.0
    %4049 = vmatprep.subr.mxu0 0.0
    %4050 = vmatpush2.msra.mxu0 0.0
    %4051 = vmatprep.subr.mxu0 0.0
    %4052 = vmatpush2.msra.mxu0 0.0
    %4053 = vmatprep.subr.mxu0 0.0
    %4054 = vmatpush2.msra.mxu0 0.0
    %4055 = vmatprep.subr.mxu0 0.0
    %4056 = vmatpush2.msra.mxu0 0.0
    %4057 = vmatprep.subr.mxu0 0.0
    %4058 = vmatpush2.msra.mxu0 0.0
    %4059 = vmatprep.subr.mxu0 0.0
    %4060 = vmatpush2.msra.mxu0 0.0
    %4061 = vmatprep.subr.mxu0 0.0
    %4062 = vmatpush2.msra.mxu0 0.0
    %4063 = vmatprep.subr.mxu0 0.0
    %4064 = vmatpush2.msra.mxu0 0.0
    %4065 = vmatprep.subr.mxu0 0.0
    %4066 = vmatpush2.msra.mxu0 0.0
    %4067 = vmatprep.subr.mxu0 0.0
    %4068 = vmatpush2.msra.mxu0 0.0
    %4069 = vmatprep.subr.mxu0 0.0
    %4070 = vmatpush2.msra.mxu0 0.0
    %4071 = vmatprep.subr.mxu0 0.0
    %4072 = vmatpush2.msra.mxu0 0.0
    %4073 = vmatprep.subr.mxu0 0.0
    %4074 = vmatpush2.msra.mxu0 0.0
    %4075 = vmatprep.subr.mxu0 0.0
    %4076 = vmatpush2.msra.mxu0 0.0
    %4077 = vmatprep.mubr.f32.mxu0 0.0
    %4078 = vmatmul.mubr.f32.gmra.mxu0 %v3905
    %v4079 = vpop.f32.mrf.mxu0
    %v4080 = vadd.f32 0.0, %v4079
    %v4081 = vpop.f32.mrf.mxu0
    %v4082 = vadd.f32 0.0, %v4081
    %4083 = vdwg.mxu0
    %v4084 = vadd.f32 %v3938, %v4009
    %v4085 = vadd.f32 %v3939, %v4011
    %v4086 = vadd.f32 %v3940, %v4080
    %v4087 = vadd.f32 %v3941, %v4082
    %v4088 = vtanh.pop %v4084
    %v4089 = vtanh.pop %v4085
    %v4090 = vtanh.pop %v4086
    %v4091 = vtanh.pop %v4087
    %v4092 = vmul.f32 %v4088, %v3492
    %v4093 = vmul.f32 %v4089, %v3493
    %v4094 = vmul.f32 %v4090, %v3494
    %v4095 = vmul.f32 %v4091, %v3495
    %v4096 = vadd.f32 %v4092, %v3496
    %v4097 = vadd.f32 %v4093, %v3497
    %v4098 = vadd.f32 %v4094, %v3498
    %v4099 = vadd.f32 %v4095, %v3499
    %v4100 = vmul.f32 %v4097, %v3903
    %v4101 = vmul.f32 %v4096, %v4099
    %v4102 = vadd.f32 %v4100, %v4101
    %v4103 = vtanh.pop %v4102
    %v4104 = vmul.f32 %v4098, %v4103
    %v4105 = vrot.slane %v3406, 3
    %v4106 = vrot.slane %v3410, 2
    %v4107 = vsel %vm685, %v4106, %v4105
    %v4108 = vrot.slane %v3407, 3
    %v4109 = vrot.slane %v3411, 2
    %v4110 = vsel %vm685, %v4109, %v4108
    %v4111 = vrot.slane %v3408, 3
    %v4112 = vrot.slane %v3412, 2
    %v4113 = vsel %vm685, %v4112, %v4111
    %v4114 = vrot.slane %v3409, 3
    %v4115 = vrot.slane %v3413, 2
    %v4116 = vsel %vm685, %v4115, %v4114
    %v4121 = vrot.slane %v3406, 4
    %v4122 = vrot.slane %v3410, 3
    %v4123 = vsel %vm685, %v4122, %v4121
    %v4124 = vrot.slane %v3407, 4
    %v4125 = vrot.slane %v3411, 3
    %v4126 = vsel %vm685, %v4125, %v4124
    %v4127 = vrot.slane %v3408, 4
    %v4128 = vrot.slane %v3412, 3
    %v4129 = vsel %vm685, %v4128, %v4127
    %v4130 = vrot.slane %v3409, 4
    %v4131 = vrot.slane %v3413, 3
    %v4132 = vsel %vm685, %v4131, %v4130
    %v4137 = vsel %vm3504, %v4107, %v4123
    %v4138 = vsel %vm3505, %v4110, %v4126
    %v4139 = vsel %vm3506, %v4113, %v4129
    %v4140 = vsel %vm3507, %v4116, %v4132
    %4141 = vmatprep.subr.mxu0 %v3475
    %4142 = vmatpush1.msra.mxu0 %v3474
    %4143 = vmatprep.subr.mxu0 %v3471
    %4144 = vmatpush1.msra.mxu0 %v3470
    %4145 = vmatprep.subr.mxu0 %v3467
    %4146 = vmatpush1.msra.mxu0 %v3466
    %4147 = vmatprep.subr.mxu0 %v3463
    %4148 = vmatpush1.msra.mxu0 %v3462
    %4149 = vmatprep.subr.mxu0 %v3459
    %4150 = vmatpush1.msra.mxu0 %v3458
    %4151 = vmatprep.subr.mxu0 %v3455
    %4152 = vmatpush1.msra.mxu0 %v3454
    %4153 = vmatprep.subr.mxu0 %v3451
    %4154 = vmatpush1.msra.mxu0 %v3450
    %4155 = vmatprep.subr.mxu0 %v3447
    %4156 = vmatpush1.msra.mxu0 %v3446
    %4157 = vmatprep.subr.mxu0 %v3443
    %4158 = vmatpush1.msra.mxu0 %v3442
    %4159 = vmatprep.subr.mxu0 %v3439
    %4160 = vmatpush1.msra.mxu0 %v3438
    %4161 = vmatprep.subr.mxu0 %v3435
    %4162 = vmatpush1.msra.mxu0 %v3434
    %4163 = vmatprep.subr.mxu0 %v3431
    %4164 = vmatpush1.msra.mxu0 %v3430
    %4165 = vmatprep.subr.mxu0 %v3427
    %4166 = vmatpush1.msra.mxu0 %v3426
    %4167 = vmatprep.subr.mxu0 %v3423
    %4168 = vmatpush1.msra.mxu0 %v3422
    %4169 = vmatprep.subr.mxu0 %v3419
    %4170 = vmatpush1.msra.mxu0 %v3418
    %4171 = vmatprep.subr.mxu0 %v3415
    %4172 = vmatpush1.msra.mxu0 %v3414
    %4173 = vmatprep.subr.mxu0 0.0
    %4174 = vmatpush2.msra.mxu0 0.0
    %4175 = vmatprep.subr.mxu0 0.0
    %4176 = vmatpush2.msra.mxu0 0.0
    %4177 = vmatprep.subr.mxu0 0.0
    %4178 = vmatpush2.msra.mxu0 0.0
    %4179 = vmatprep.subr.mxu0 0.0
    %4180 = vmatpush2.msra.mxu0 0.0
    %4181 = vmatprep.subr.mxu0 0.0
    %4182 = vmatpush2.msra.mxu0 0.0
    %4183 = vmatprep.subr.mxu0 0.0
    %4184 = vmatpush2.msra.mxu0 0.0
    %4185 = vmatprep.subr.mxu0 0.0
    %4186 = vmatpush2.msra.mxu0 0.0
    %4187 = vmatprep.subr.mxu0 0.0
    %4188 = vmatpush2.msra.mxu0 0.0
    %4189 = vmatprep.subr.mxu0 0.0
    %4190 = vmatpush2.msra.mxu0 0.0
    %4191 = vmatprep.subr.mxu0 0.0
    %4192 = vmatpush2.msra.mxu0 0.0
    %4193 = vmatprep.subr.mxu0 0.0
    %4194 = vmatpush2.msra.mxu0 0.0
    %4195 = vmatprep.subr.mxu0 0.0
    %4196 = vmatpush2.msra.mxu0 0.0
    %4197 = vmatprep.subr.mxu0 0.0
    %4198 = vmatpush2.msra.mxu0 0.0
    %4199 = vmatprep.subr.mxu0 0.0
    %4200 = vmatpush2.msra.mxu0 0.0
    %4201 = vmatprep.subr.mxu0 0.0
    %4202 = vmatpush2.msra.mxu0 0.0
    %4203 = vmatprep.subr.mxu0 0.0
    %4204 = vmatpush2.msra.mxu0 0.0
    %4205 = vmatprep.mubr.f32.mxu0 0.0
    %4206 = vmatmul.mubr.f32.gmra.mxu0 %v4104
    %v4207 = vpop.f32.mrf.mxu0
    %v4208 = vadd.f32 0.0, %v4207
    %v4209 = vpop.f32.mrf.mxu0
    %v4210 = vadd.f32 0.0, %v4209
    %4211 = vdwg.mxu0
    %4212 = vmatprep.subr.mxu0 %v3477
    %4213 = vmatpush1.msra.mxu0 %v3476
    %4214 = vmatprep.subr.mxu0 %v3473
    %4215 = vmatpush1.msra.mxu0 %v3472
    %4216 = vmatprep.subr.mxu0 %v3469
    %4217 = vmatpush1.msra.mxu0 %v3468
    %4218 = vmatprep.subr.mxu0 %v3465
    %4219 = vmatpush1.msra.mxu0 %v3464
    %4220 = vmatprep.subr.mxu0 %v3461
    %4221 = vmatpush1.msra.mxu0 %v3460
    %4222 = vmatprep.subr.mxu0 %v3457
    %4223 = vmatpush1.msra.mxu0 %v3456
    %4224 = vmatprep.subr.mxu0 %v3453
    %4225 = vmatpush1.msra.mxu0 %v3452
    %4226 = vmatprep.subr.mxu0 %v3449
    %4227 = vmatpush1.msra.mxu0 %v3448
    %4228 = vmatprep.subr.mxu0 %v3445
    %4229 = vmatpush1.msra.mxu0 %v3444
    %4230 = vmatprep.subr.mxu0 %v3441
    %4231 = vmatpush1.msra.mxu0 %v3440
    %4232 = vmatprep.subr.mxu0 %v3437
    %4233 = vmatpush1.msra.mxu0 %v3436
    %4234 = vmatprep.subr.mxu0 %v3433
    %4235 = vmatpush1.msra.mxu0 %v3432
    %4236 = vmatprep.subr.mxu0 %v3429
    %4237 = vmatpush1.msra.mxu0 %v3428
    %4238 = vmatprep.subr.mxu0 %v3425
    %4239 = vmatpush1.msra.mxu0 %v3424
    %4240 = vmatprep.subr.mxu0 %v3421
    %4241 = vmatpush1.msra.mxu0 %v3420
    %4242 = vmatprep.subr.mxu0 %v3417
    %4243 = vmatpush1.msra.mxu0 %v3416
    %4244 = vmatprep.subr.mxu0 0.0
    %4245 = vmatpush2.msra.mxu0 0.0
    %4246 = vmatprep.subr.mxu0 0.0
    %4247 = vmatpush2.msra.mxu0 0.0
    %4248 = vmatprep.subr.mxu0 0.0
    %4249 = vmatpush2.msra.mxu0 0.0
    %4250 = vmatprep.subr.mxu0 0.0
    %4251 = vmatpush2.msra.mxu0 0.0
    %4252 = vmatprep.subr.mxu0 0.0
    %4253 = vmatpush2.msra.mxu0 0.0
    %4254 = vmatprep.subr.mxu0 0.0
    %4255 = vmatpush2.msra.mxu0 0.0
    %4256 = vmatprep.subr.mxu0 0.0
    %4257 = vmatpush2.msra.mxu0 0.0
    %4258 = vmatprep.subr.mxu0 0.0
    %4259 = vmatpush2.msra.mxu0 0.0
    %4260 = vmatprep.subr.mxu0 0.0
    %4261 = vmatpush2.msra.mxu0 0.0
    %4262 = vmatprep.subr.mxu0 0.0
    %4263 = vmatpush2.msra.mxu0 0.0
    %4264 = vmatprep.subr.mxu0 0.0
    %4265 = vmatpush2.msra.mxu0 0.0
    %4266 = vmatprep.subr.mxu0 0.0
    %4267 = vmatpush2.msra.mxu0 0.0
    %4268 = vmatprep.subr.mxu0 0.0
    %4269 = vmatpush2.msra.mxu0 0.0
    %4270 = vmatprep.subr.mxu0 0.0
    %4271 = vmatpush2.msra.mxu0 0.0
    %4272 = vmatprep.subr.mxu0 0.0
    %4273 = vmatpush2.msra.mxu0 0.0
    %4274 = vmatprep.subr.mxu0 0.0
    %4275 = vmatpush2.msra.mxu0 0.0
    %4276 = vmatprep.mubr.f32.mxu0 0.0
    %4277 = vmatmul.mubr.f32.gmra.mxu0 %v4104
    %v4278 = vpop.f32.mrf.mxu0
    %v4279 = vadd.f32 0.0, %v4278
    %v4280 = vpop.f32.mrf.mxu0
    %v4281 = vadd.f32 0.0, %v4280
    %4282 = vdwg.mxu0
    %v4283 = vadd.f32 %v4137, %v4208
    %v4284 = vadd.f32 %v4138, %v4210
    %v4285 = vadd.f32 %v4139, %v4279
    %v4286 = vadd.f32 %v4140, %v4281
    %v4287 = vtanh.pop %v4283
    %v4288 = vtanh.pop %v4284
    %v4289 = vtanh.pop %v4285
    %v4290 = vtanh.pop %v4286
    %v4291 = vmul.f32 %v4287, %v3492
    %v4292 = vmul.f32 %v4288, %v3493
    %v4293 = vmul.f32 %v4289, %v3494
    %v4294 = vmul.f32 %v4290, %v3495
    %v4295 = vadd.f32 %v4291, %v3496
    %v4296 = vadd.f32 %v4292, %v3497
    %v4297 = vadd.f32 %v4293, %v3498
    %v4298 = vadd.f32 %v4294, %v3499
    %v4299 = vmul.f32 %v4296, %v4102
    %v4300 = vmul.f32 %v4295, %v4298
    %v4301 = vadd.f32 %v4299, %v4300
    %v4302 = vtanh.pop %v4301
    %v4303 = vmul.f32 %v4297, %v4302
    %v4304 = vsel %vm3504, %v4123, %v4107
    %v4305 = vsel %vm3505, %v4126, %v4110
    %v4306 = vsel %vm3506, %v4129, %v4113
    %v4307 = vsel %vm3507, %v4132, %v4116
    %4308 = vmatprep.subr.mxu0 %v3475
    %4309 = vmatpush1.msra.mxu0 %v3474
    %4310 = vmatprep.subr.mxu0 %v3471
    %4311 = vmatpush1.msra.mxu0 %v3470
    %4312 = vmatprep.subr.mxu0 %v3467
    %4313 = vmatpush1.msra.mxu0 %v3466
    %4314 = vmatprep.subr.mxu0 %v3463
    %4315 = vmatpush1.msra.mxu0 %v3462
    %4316 = vmatprep.subr.mxu0 %v3459
    %4317 = vmatpush1.msra.mxu0 %v3458
    %4318 = vmatprep.subr.mxu0 %v3455
    %4319 = vmatpush1.msra.mxu0 %v3454
    %4320 = vmatprep.subr.mxu0 %v3451
    %4321 = vmatpush1.msra.mxu0 %v3450
    %4322 = vmatprep.subr.mxu0 %v3447
    %4323 = vmatpush1.msra.mxu0 %v3446
    %4324 = vmatprep.subr.mxu0 %v3443
    %4325 = vmatpush1.msra.mxu0 %v3442
    %4326 = vmatprep.subr.mxu0 %v3439
    %4327 = vmatpush1.msra.mxu0 %v3438
    %4328 = vmatprep.subr.mxu0 %v3435
    %4329 = vmatpush1.msra.mxu0 %v3434
    %4330 = vmatprep.subr.mxu0 %v3431
    %4331 = vmatpush1.msra.mxu0 %v3430
    %4332 = vmatprep.subr.mxu0 %v3427
    %4333 = vmatpush1.msra.mxu0 %v3426
    %4334 = vmatprep.subr.mxu0 %v3423
    %4335 = vmatpush1.msra.mxu0 %v3422
    %4336 = vmatprep.subr.mxu0 %v3419
    %4337 = vmatpush1.msra.mxu0 %v3418
    %4338 = vmatprep.subr.mxu0 %v3415
    %4339 = vmatpush1.msra.mxu0 %v3414
    %4340 = vmatprep.subr.mxu0 0.0
    %4341 = vmatpush2.msra.mxu0 0.0
    %4342 = vmatprep.subr.mxu0 0.0
    %4343 = vmatpush2.msra.mxu0 0.0
    %4344 = vmatprep.subr.mxu0 0.0
    %4345 = vmatpush2.msra.mxu0 0.0
    %4346 = vmatprep.subr.mxu0 0.0
    %4347 = vmatpush2.msra.mxu0 0.0
    %4348 = vmatprep.subr.mxu0 0.0
    %4349 = vmatpush2.msra.mxu0 0.0
    %4350 = vmatprep.subr.mxu0 0.0
    %4351 = vmatpush2.msra.mxu0 0.0
    %4352 = vmatprep.subr.mxu0 0.0
    %4353 = vmatpush2.msra.mxu0 0.0
    %4354 = vmatprep.subr.mxu0 0.0
    %4355 = vmatpush2.msra.mxu0 0.0
    %4356 = vmatprep.subr.mxu0 0.0
    %4357 = vmatpush2.msra.mxu0 0.0
    %4358 = vmatprep.subr.mxu0 0.0
    %4359 = vmatpush2.msra.mxu0 0.0
    %4360 = vmatprep.subr.mxu0 0.0
    %4361 = vmatpush2.msra.mxu0 0.0
    %4362 = vmatprep.subr.mxu0 0.0
    %4363 = vmatpush2.msra.mxu0 0.0
    %4364 = vmatprep.subr.mxu0 0.0
    %4365 = vmatpush2.msra.mxu0 0.0
    %4366 = vmatprep.subr.mxu0 0.0
    %4367 = vmatpush2.msra.mxu0 0.0
    %4368 = vmatprep.subr.mxu0 0.0
    %4369 = vmatpush2.msra.mxu0 0.0
    %4370 = vmatprep.subr.mxu0 0.0
    %4371 = vmatpush2.msra.mxu0 0.0
    %4372 = vmatprep.mubr.f32.mxu0 0.0
    %4373 = vmatmul.mubr.f32.gmra.mxu0 %v4303
    %v4374 = vpop.f32.mrf.mxu0
    %v4375 = vadd.f32 0.0, %v4374
    %v4376 = vpop.f32.mrf.mxu0
    %v4377 = vadd.f32 0.0, %v4376
    %4378 = vdwg.mxu0
    %4379 = vmatprep.subr.mxu0 %v3477
    %4380 = vmatpush1.msra.mxu0 %v3476
    %4381 = vmatprep.subr.mxu0 %v3473
    %4382 = vmatpush1.msra.mxu0 %v3472
    %4383 = vmatprep.subr.mxu0 %v3469
    %4384 = vmatpush1.msra.mxu0 %v3468
    %4385 = vmatprep.subr.mxu0 %v3465
    %4386 = vmatpush1.msra.mxu0 %v3464
    %4387 = vmatprep.subr.mxu0 %v3461
    %4388 = vmatpush1.msra.mxu0 %v3460
    %4389 = vmatprep.subr.mxu0 %v3457
    %4390 = vmatpush1.msra.mxu0 %v3456
    %4391 = vmatprep.subr.mxu0 %v3453
    %4392 = vmatpush1.msra.mxu0 %v3452
    %4393 = vmatprep.subr.mxu0 %v3449
    %4394 = vmatpush1.msra.mxu0 %v3448
    %4395 = vmatprep.subr.mxu0 %v3445
    %4396 = vmatpush1.msra.mxu0 %v3444
    %4397 = vmatprep.subr.mxu0 %v3441
    %4398 = vmatpush1.msra.mxu0 %v3440
    %4399 = vmatprep.subr.mxu0 %v3437
    %4400 = vmatpush1.msra.mxu0 %v3436
    %4401 = vmatprep.subr.mxu0 %v3433
    %4402 = vmatpush1.msra.mxu0 %v3432
    %4403 = vmatprep.subr.mxu0 %v3429
    %4404 = vmatpush1.msra.mxu0 %v3428
    %4405 = vmatprep.subr.mxu0 %v3425
    %4406 = vmatpush1.msra.mxu0 %v3424
    %4407 = vmatprep.subr.mxu0 %v3421
    %4408 = vmatpush1.msra.mxu0 %v3420
    %4409 = vmatprep.subr.mxu0 %v3417
    %4410 = vmatpush1.msra.mxu0 %v3416
    %4411 = vmatprep.subr.mxu0 0.0
    %4412 = vmatpush2.msra.mxu0 0.0
    %4413 = vmatprep.subr.mxu0 0.0
    %4414 = vmatpush2.msra.mxu0 0.0
    %4415 = vmatprep.subr.mxu0 0.0
    %4416 = vmatpush2.msra.mxu0 0.0
    %4417 = vmatprep.subr.mxu0 0.0
    %4418 = vmatpush2.msra.mxu0 0.0
    %4419 = vmatprep.subr.mxu0 0.0
    %4420 = vmatpush2.msra.mxu0 0.0
    %4421 = vmatprep.subr.mxu0 0.0
    %4422 = vmatpush2.msra.mxu0 0.0
    %4423 = vmatprep.subr.mxu0 0.0
    %4424 = vmatpush2.msra.mxu0 0.0
    %4425 = vmatprep.subr.mxu0 0.0
    %4426 = vmatpush2.msra.mxu0 0.0
    %4427 = vmatprep.subr.mxu0 0.0
    %4428 = vmatpush2.msra.mxu0 0.0
    %4429 = vmatprep.subr.mxu0 0.0
    %4430 = vmatpush2.msra.mxu0 0.0
    %4431 = vmatprep.subr.mxu0 0.0
    %4432 = vmatpush2.msra.mxu0 0.0
    %4433 = vmatprep.subr.mxu0 0.0
    %4434 = vmatpush2.msra.mxu0 0.0
    %4435 = vmatprep.subr.mxu0 0.0
    %4436 = vmatpush2.msra.mxu0 0.0
    %4437 = vmatprep.subr.mxu0 0.0
    %4438 = vmatpush2.msra.mxu0 0.0
    %4439 = vmatprep.subr.mxu0 0.0
    %4440 = vmatpush2.msra.mxu0 0.0
    %4441 = vmatprep.subr.mxu0 0.0
    %4442 = vmatpush2.msra.mxu0 0.0
    %4443 = vmatprep.mubr.f32.mxu0 0.0
    %4444 = vmatmul.mubr.f32.gmra.mxu0 %v4303
    %v4445 = vpop.f32.mrf.mxu0
    %v4446 = vadd.f32 0.0, %v4445
    %v4447 = vpop.f32.mrf.mxu0
    %v4448 = vadd.f32 0.0, %v4447
    %4449 = vdwg.mxu0
    %v4450 = vadd.f32 %v4304, %v4375
    %v4451 = vadd.f32 %v4305, %v4377
    %v4452 = vadd.f32 %v4306, %v4446
    %v4453 = vadd.f32 %v4307, %v4448
    %v4454 = vtanh.pop %v4450
    %v4455 = vtanh.pop %v4451
    %v4456 = vtanh.pop %v4452
    %v4457 = vtanh.pop %v4453
    %v4458 = vmul.f32 %v4454, %v3492
    %v4459 = vmul.f32 %v4455, %v3493
    %v4460 = vmul.f32 %v4456, %v3494
    %v4461 = vmul.f32 %v4457, %v3495
    %v4462 = vadd.f32 %v4458, %v3496
    %v4463 = vadd.f32 %v4459, %v3497
    %v4464 = vadd.f32 %v4460, %v3498
    %v4465 = vadd.f32 %v4461, %v3499
    %v4466 = vmul.f32 %v4463, %v4301
    %v4467 = vmul.f32 %v4462, %v4465
    %v4468 = vadd.f32 %v4466, %v4467
    %v4469 = vtanh.pop %v4468
    %v4470 = vmul.f32 %v4464, %v4469
    %v4471 = vsel %vm3504, %v3924, %v3908
    %v4472 = vsel %vm3505, %v3927, %v3911
    %v4473 = vsel %vm3506, %v3930, %v3914
    %v4474 = vsel %vm3507, %v3933, %v3917
    %4475 = vmatprep.subr.mxu0 %v3475
    %4476 = vmatpush1.msra.mxu0 %v3474
    %4477 = vmatprep.subr.mxu0 %v3471
    %4478 = vmatpush1.msra.mxu0 %v3470
    %4479 = vmatprep.subr.mxu0 %v3467
    %4480 = vmatpush1.msra.mxu0 %v3466
    %4481 = vmatprep.subr.mxu0 %v3463
    %4482 = vmatpush1.msra.mxu0 %v3462
    %4483 = vmatprep.subr.mxu0 %v3459
    %4484 = vmatpush1.msra.mxu0 %v3458
    %4485 = vmatprep.subr.mxu0 %v3455
    %4486 = vmatpush1.msra.mxu0 %v3454
    %4487 = vmatprep.subr.mxu0 %v3451
    %4488 = vmatpush1.msra.mxu0 %v3450
    %4489 = vmatprep.subr.mxu0 %v3447
    %4490 = vmatpush1.msra.mxu0 %v3446
    %4491 = vmatprep.subr.mxu0 %v3443
    %4492 = vmatpush1.msra.mxu0 %v3442
    %4493 = vmatprep.subr.mxu0 %v3439
    %4494 = vmatpush1.msra.mxu0 %v3438
    %4495 = vmatprep.subr.mxu0 %v3435
    %4496 = vmatpush1.msra.mxu0 %v3434
    %4497 = vmatprep.subr.mxu0 %v3431
    %4498 = vmatpush1.msra.mxu0 %v3430
    %4499 = vmatprep.subr.mxu0 %v3427
    %4500 = vmatpush1.msra.mxu0 %v3426
    %4501 = vmatprep.subr.mxu0 %v3423
    %4502 = vmatpush1.msra.mxu0 %v3422
    %4503 = vmatprep.subr.mxu0 %v3419
    %4504 = vmatpush1.msra.mxu0 %v3418
    %4505 = vmatprep.subr.mxu0 %v3415
    %4506 = vmatpush1.msra.mxu0 %v3414
    %4507 = vmatprep.subr.mxu0 0.0
    %4508 = vmatpush2.msra.mxu0 0.0
    %4509 = vmatprep.subr.mxu0 0.0
    %4510 = vmatpush2.msra.mxu0 0.0
    %4511 = vmatprep.subr.mxu0 0.0
    %4512 = vmatpush2.msra.mxu0 0.0
    %4513 = vmatprep.subr.mxu0 0.0
    %4514 = vmatpush2.msra.mxu0 0.0
    %4515 = vmatprep.subr.mxu0 0.0
    %4516 = vmatpush2.msra.mxu0 0.0
    %4517 = vmatprep.subr.mxu0 0.0
    %4518 = vmatpush2.msra.mxu0 0.0
    %4519 = vmatprep.subr.mxu0 0.0
    %4520 = vmatpush2.msra.mxu0 0.0
    %4521 = vmatprep.subr.mxu0 0.0
    %4522 = vmatpush2.msra.mxu0 0.0
    %4523 = vmatprep.subr.mxu0 0.0
    %4524 = vmatpush2.msra.mxu0 0.0
    %4525 = vmatprep.subr.mxu0 0.0
    %4526 = vmatpush2.msra.mxu0 0.0
    %4527 = vmatprep.subr.mxu0 0.0
    %4528 = vmatpush2.msra.mxu0 0.0
    %4529 = vmatprep.subr.mxu0 0.0
    %4530 = vmatpush2.msra.mxu0 0.0
    %4531 = vmatprep.subr.mxu0 0.0
    %4532 = vmatpush2.msra.mxu0 0.0
    %4533 = vmatprep.subr.mxu0 0.0
    %4534 = vmatpush2.msra.mxu0 0.0
    %4535 = vmatprep.subr.mxu0 0.0
    %4536 = vmatpush2.msra.mxu0 0.0
    %4537 = vmatprep.subr.mxu0 0.0
    %4538 = vmatpush2.msra.mxu0 0.0
    %4539 = vmatprep.mubr.f32.mxu0 0.0
    %4540 = vmatmul.mubr.f32.gmra.mxu0 %v4470
    %v4541 = vpop.f32.mrf.mxu0
    %v4542 = vadd.f32 0.0, %v4541
    %v4543 = vpop.f32.mrf.mxu0
    %v4544 = vadd.f32 0.0, %v4543
    %4545 = vdwg.mxu0
    %4546 = vmatprep.subr.mxu0 %v3477
    %4547 = vmatpush1.msra.mxu0 %v3476
    %4548 = vmatprep.subr.mxu0 %v3473
    %4549 = vmatpush1.msra.mxu0 %v3472
    %4550 = vmatprep.subr.mxu0 %v3469
    %4551 = vmatpush1.msra.mxu0 %v3468
    %4552 = vmatprep.subr.mxu0 %v3465
    %4553 = vmatpush1.msra.mxu0 %v3464
    %4554 = vmatprep.subr.mxu0 %v3461
    %4555 = vmatpush1.msra.mxu0 %v3460
    %4556 = vmatprep.subr.mxu0 %v3457
    %4557 = vmatpush1.msra.mxu0 %v3456
    %4558 = vmatprep.subr.mxu0 %v3453
    %4559 = vmatpush1.msra.mxu0 %v3452
    %4560 = vmatprep.subr.mxu0 %v3449
    %4561 = vmatpush1.msra.mxu0 %v3448
    %4562 = vmatprep.subr.mxu0 %v3445
    %4563 = vmatpush1.msra.mxu0 %v3444
    %4564 = vmatprep.subr.mxu0 %v3441
    %4565 = vmatpush1.msra.mxu0 %v3440
    %4566 = vmatprep.subr.mxu0 %v3437
    %4567 = vmatpush1.msra.mxu0 %v3436
    %4568 = vmatprep.subr.mxu0 %v3433
    %4569 = vmatpush1.msra.mxu0 %v3432
    %4570 = vmatprep.subr.mxu0 %v3429
    %4571 = vmatpush1.msra.mxu0 %v3428
    %4572 = vmatprep.subr.mxu0 %v3425
    %4573 = vmatpush1.msra.mxu0 %v3424
    %4574 = vmatprep.subr.mxu0 %v3421
    %4575 = vmatpush1.msra.mxu0 %v3420
    %4576 = vmatprep.subr.mxu0 %v3417
    %4577 = vmatpush1.msra.mxu0 %v3416
    %4578 = vmatprep.subr.mxu0 0.0
    %4579 = vmatpush2.msra.mxu0 0.0
    %4580 = vmatprep.subr.mxu0 0.0
    %4581 = vmatpush2.msra.mxu0 0.0
    %4582 = vmatprep.subr.mxu0 0.0
    %4583 = vmatpush2.msra.mxu0 0.0
    %4584 = vmatprep.subr.mxu0 0.0
    %4585 = vmatpush2.msra.mxu0 0.0
    %4586 = vmatprep.subr.mxu0 0.0
    %4587 = vmatpush2.msra.mxu0 0.0
    %4588 = vmatprep.subr.mxu0 0.0
    %4589 = vmatpush2.msra.mxu0 0.0
    %4590 = vmatprep.subr.mxu0 0.0
    %4591 = vmatpush2.msra.mxu0 0.0
    %4592 = vmatprep.subr.mxu0 0.0
    %4593 = vmatpush2.msra.mxu0 0.0
    %4594 = vmatprep.subr.mxu0 0.0
    %4595 = vmatpush2.msra.mxu0 0.0
    %4596 = vmatprep.subr.mxu0 0.0
    %4597 = vmatpush2.msra.mxu0 0.0
    %4598 = vmatprep.subr.mxu0 0.0
    %4599 = vmatpush2.msra.mxu0 0.0
    %4600 = vmatprep.subr.mxu0 0.0
    %4601 = vmatpush2.msra.mxu0 0.0
    %4602 = vmatprep.subr.mxu0 0.0
    %4603 = vmatpush2.msra.mxu0 0.0
    %4604 = vmatprep.subr.mxu0 0.0
    %4605 = vmatpush2.msra.mxu0 0.0
    %4606 = vmatprep.subr.mxu0 0.0
    %4607 = vmatpush2.msra.mxu0 0.0
    %4608 = vmatprep.subr.mxu0 0.0
    %4609 = vmatpush2.msra.mxu0 0.0
    %4610 = vmatprep.mubr.f32.mxu0 0.0
    %4611 = vmatmul.mubr.f32.gmra.mxu0 %v4470
    %v4612 = vpop.f32.mrf.mxu0
    %v4613 = vadd.f32 0.0, %v4612
    %v4614 = vpop.f32.mrf.mxu0
    %v4615 = vadd.f32 0.0, %v4614
    %4616 = vdwg.mxu0
    %v4617 = vadd.f32 %v4471, %v4542
    %v4618 = vadd.f32 %v4472, %v4544
    %v4619 = vadd.f32 %v4473, %v4613
    %v4620 = vadd.f32 %v4474, %v4615
    %v4621 = vtanh.pop %v4617
    %v4622 = vtanh.pop %v4618
    %v4623 = vtanh.pop %v4619
    %v4624 = vtanh.pop %v4620
    %v4625 = vmul.f32 %v4621, %v3492
    %v4626 = vmul.f32 %v4622, %v3493
    %v4627 = vmul.f32 %v4623, %v3494
    %v4628 = vmul.f32 %v4624, %v3495
    %v4629 = vadd.f32 %v4625, %v3496
    %v4630 = vadd.f32 %v4626, %v3497
    %v4631 = vadd.f32 %v4627, %v3498
    %v4632 = vadd.f32 %v4628, %v3499
    %v4633 = vmul.f32 %v4630, %v4468
    %v4634 = vmul.f32 %v4629, %v4632
    %v4635 = vadd.f32 %v4633, %v4634
    %v4636 = vtanh.pop %v4635
    %v4637 = vmul.f32 %v4631, %v4636
    %v4638 = vsel %vm3504, %v3725, %v3712
    %v4639 = vsel %vm3505, %v3728, %v3714
    %v4640 = vsel %vm3506, %v3731, %v3716
    %v4641 = vsel %vm3507, %v3734, %v3718
    %4642 = vmatprep.subr.mxu0 %v3475
    %4643 = vmatpush1.msra.mxu0 %v3474
    %4644 = vmatprep.subr.mxu0 %v3471
    %4645 = vmatpush1.msra.mxu0 %v3470
    %4646 = vmatprep.subr.mxu0 %v3467
    %4647 = vmatpush1.msra.mxu0 %v3466
    %4648 = vmatprep.subr.mxu0 %v3463
    %4649 = vmatpush1.msra.mxu0 %v3462
    %4650 = vmatprep.subr.mxu0 %v3459
    %4651 = vmatpush1.msra.mxu0 %v3458
    %4652 = vmatprep.subr.mxu0 %v3455
    %4653 = vmatpush1.msra.mxu0 %v3454
    %4654 = vmatprep.subr.mxu0 %v3451
    %4655 = vmatpush1.msra.mxu0 %v3450
    %4656 = vmatprep.subr.mxu0 %v3447
    %4657 = vmatpush1.msra.mxu0 %v3446
    %4658 = vmatprep.subr.mxu0 %v3443
    %4659 = vmatpush1.msra.mxu0 %v3442
    %4660 = vmatprep.subr.mxu0 %v3439
    %4661 = vmatpush1.msra.mxu0 %v3438
    %4662 = vmatprep.subr.mxu0 %v3435
    %4663 = vmatpush1.msra.mxu0 %v3434
    %4664 = vmatprep.subr.mxu0 %v3431
    %4665 = vmatpush1.msra.mxu0 %v3430
    %4666 = vmatprep.subr.mxu0 %v3427
    %4667 = vmatpush1.msra.mxu0 %v3426
    %4668 = vmatprep.subr.mxu0 %v3423
    %4669 = vmatpush1.msra.mxu0 %v3422
    %4670 = vmatprep.subr.mxu0 %v3419
    %4671 = vmatpush1.msra.mxu0 %v3418
    %4672 = vmatprep.subr.mxu0 %v3415
    %4673 = vmatpush1.msra.mxu0 %v3414
    %4674 = vmatprep.subr.mxu0 0.0
    %4675 = vmatpush2.msra.mxu0 0.0
    %4676 = vmatprep.subr.mxu0 0.0
    %4677 = vmatpush2.msra.mxu0 0.0
    %4678 = vmatprep.subr.mxu0 0.0
    %4679 = vmatpush2.msra.mxu0 0.0
    %4680 = vmatprep.subr.mxu0 0.0
    %4681 = vmatpush2.msra.mxu0 0.0
    %4682 = vmatprep.subr.mxu0 0.0
    %4683 = vmatpush2.msra.mxu0 0.0
    %4684 = vmatprep.subr.mxu0 0.0
    %4685 = vmatpush2.msra.mxu0 0.0
    %4686 = vmatprep.subr.mxu0 0.0
    %4687 = vmatpush2.msra.mxu0 0.0
    %4688 = vmatprep.subr.mxu0 0.0
    %4689 = vmatpush2.msra.mxu0 0.0
    %4690 = vmatprep.subr.mxu0 0.0
    %4691 = vmatpush2.msra.mxu0 0.0
    %4692 = vmatprep.subr.mxu0 0.0
    %4693 = vmatpush2.msra.mxu0 0.0
    %4694 = vmatprep.subr.mxu0 0.0
    %4695 = vmatpush2.msra.mxu0 0.0
    %4696 = vmatprep.subr.mxu0 0.0
    %4697 = vmatpush2.msra.mxu0 0.0
    %4698 = vmatprep.subr.mxu0 0.0
    %4699 = vmatpush2.msra.mxu0 0.0
    %4700 = vmatprep.subr.mxu0 0.0
    %4701 = vmatpush2.msra.mxu0 0.0
    %4702 = vmatprep.subr.mxu0 0.0
    %4703 = vmatpush2.msra.mxu0 0.0
    %4704 = vmatprep.subr.mxu0 0.0
    %4705 = vmatpush2.msra.mxu0 0.0
    %4706 = vmatprep.mubr.f32.mxu0 0.0
    %4707 = vmatmul.mubr.f32.gmra.mxu0 %v4637
    %v4708 = vpop.f32.mrf.mxu0
    %v4709 = vadd.f32 0.0, %v4708
    %v4710 = vpop.f32.mrf.mxu0
    %v4711 = vadd.f32 0.0, %v4710
    %4712 = vdwg.mxu0
    %4713 = vmatprep.subr.mxu0 %v3477
    %4714 = vmatpush1.msra.mxu0 %v3476
    %4715 = vmatprep.subr.mxu0 %v3473
    %4716 = vmatpush1.msra.mxu0 %v3472
    %4717 = vmatprep.subr.mxu0 %v3469
    %4718 = vmatpush1.msra.mxu0 %v3468
    %4719 = vmatprep.subr.mxu0 %v3465
    %4720 = vmatpush1.msra.mxu0 %v3464
    %4721 = vmatprep.subr.mxu0 %v3461
    %4722 = vmatpush1.msra.mxu0 %v3460
    %4723 = vmatprep.subr.mxu0 %v3457
    %4724 = vmatpush1.msra.mxu0 %v3456
    %4725 = vmatprep.subr.mxu0 %v3453
    %4726 = vmatpush1.msra.mxu0 %v3452
    %4727 = vmatprep.subr.mxu0 %v3449
    %4728 = vmatpush1.msra.mxu0 %v3448
    %4729 = vmatprep.subr.mxu0 %v3445
    %4730 = vmatpush1.msra.mxu0 %v3444
    %4731 = vmatprep.subr.mxu0 %v3441
    %4732 = vmatpush1.msra.mxu0 %v3440
    %4733 = vmatprep.subr.mxu0 %v3437
    %4734 = vmatpush1.msra.mxu0 %v3436
    %4735 = vmatprep.subr.mxu0 %v3433
    %4736 = vmatpush1.msra.mxu0 %v3432
    %4737 = vmatprep.subr.mxu0 %v3429
    %4738 = vmatpush1.msra.mxu0 %v3428
    %4739 = vmatprep.subr.mxu0 %v3425
    %4740 = vmatpush1.msra.mxu0 %v3424
    %4741 = vmatprep.subr.mxu0 %v3421
    %4742 = vmatpush1.msra.mxu0 %v3420
    %4743 = vmatprep.subr.mxu0 %v3417
    %4744 = vmatpush1.msra.mxu0 %v3416
    %4745 = vmatprep.subr.mxu0 0.0
    %4746 = vmatpush2.msra.mxu0 0.0
    %4747 = vmatprep.subr.mxu0 0.0
    %4748 = vmatpush2.msra.mxu0 0.0
    %4749 = vmatprep.subr.mxu0 0.0
    %4750 = vmatpush2.msra.mxu0 0.0
    %4751 = vmatprep.subr.mxu0 0.0
    %4752 = vmatpush2.msra.mxu0 0.0
    %4753 = vmatprep.subr.mxu0 0.0
    %4754 = vmatpush2.msra.mxu0 0.0
    %4755 = vmatprep.subr.mxu0 0.0
    %4756 = vmatpush2.msra.mxu0 0.0
    %4757 = vmatprep.subr.mxu0 0.0
    %4758 = vmatpush2.msra.mxu0 0.0
    %4759 = vmatprep.subr.mxu0 0.0
    %4760 = vmatpush2.msra.mxu0 0.0
    %4761 = vmatprep.subr.mxu0 0.0
    %4762 = vmatpush2.msra.mxu0 0.0
    %4763 = vmatprep.subr.mxu0 0.0
    %4764 = vmatpush2.msra.mxu0 0.0
    %4765 = vmatprep.subr.mxu0 0.0
    %4766 = vmatpush2.msra.mxu0 0.0
    %4767 = vmatprep.subr.mxu0 0.0
    %4768 = vmatpush2.msra.mxu0 0.0
    %4769 = vmatprep.subr.mxu0 0.0
    %4770 = vmatpush2.msra.mxu0 0.0
    %4771 = vmatprep.subr.mxu0 0.0
    %4772 = vmatpush2.msra.mxu0 0.0
    %4773 = vmatprep.subr.mxu0 0.0
    %4774 = vmatpush2.msra.mxu0 0.0
    %4775 = vmatprep.subr.mxu0 0.0
    %4776 = vmatpush2.msra.mxu0 0.0
    %4777 = vmatprep.mubr.f32.mxu0 0.0
    %4778 = vmatmul.mubr.f32.gmra.mxu0 %v4637
    %v4779 = vpop.f32.mrf.mxu0
    %v4780 = vadd.f32 0.0, %v4779
    %v4781 = vpop.f32.mrf.mxu0
    %v4782 = vadd.f32 0.0, %v4781
    %4783 = vdwg.mxu0
    %v4784 = vadd.f32 %v4638, %v4709
    %v4785 = vadd.f32 %v4639, %v4711
    %v4786 = vadd.f32 %v4640, %v4780
    %v4787 = vadd.f32 %v4641, %v4782
    %v4788 = vtanh.pop %v4784
    %v4789 = vtanh.pop %v4785
    %v4790 = vtanh.pop %v4786
    %v4791 = vtanh.pop %v4787
    %v4792 = vmul.f32 %v4788, %v3492
    %v4793 = vmul.f32 %v4789, %v3493
    %v4794 = vmul.f32 %v4790, %v3494
    %v4795 = vmul.f32 %v4791, %v3495
    %v4796 = vadd.f32 %v4792, %v3496
    %v4797 = vadd.f32 %v4793, %v3497
    %v4798 = vadd.f32 %v4794, %v3498
    %v4799 = vadd.f32 %v4795, %v3499
    %v4800 = vmul.f32 %v4797, %v4635
    %v4801 = vmul.f32 %v4796, %v4799
    %v4802 = vadd.f32 %v4800, %v4801
    %v4803 = vtanh.pop %v4802
    %v4804 = vmul.f32 %v4798, %v4803
    %v4805 = vsel %vm3504, %v3530, %v3517
    %v4806 = vsel %vm3505, %v3533, %v3519
    %v4807 = vsel %vm3506, %v3536, %v3521
    %v4808 = vsel %vm3507, %v3539, %v3523
    %4809 = vmatprep.subr.mxu0 %v3475
    %4810 = vmatpush1.msra.mxu0 %v3474
    %4811 = vmatprep.subr.mxu0 %v3471
    %4812 = vmatpush1.msra.mxu0 %v3470
    %4813 = vmatprep.subr.mxu0 %v3467
    %4814 = vmatpush1.msra.mxu0 %v3466
    %4815 = vmatprep.subr.mxu0 %v3463
    %4816 = vmatpush1.msra.mxu0 %v3462
    %4817 = vmatprep.subr.mxu0 %v3459
    %4818 = vmatpush1.msra.mxu0 %v3458
    %4819 = vmatprep.subr.mxu0 %v3455
    %4820 = vmatpush1.msra.mxu0 %v3454
    %4821 = vmatprep.subr.mxu0 %v3451
    %4822 = vmatpush1.msra.mxu0 %v3450
    %4823 = vmatprep.subr.mxu0 %v3447
    %4824 = vmatpush1.msra.mxu0 %v3446
    %4825 = vmatprep.subr.mxu0 %v3443
    %4826 = vmatpush1.msra.mxu0 %v3442
    %4827 = vmatprep.subr.mxu0 %v3439
    %4828 = vmatpush1.msra.mxu0 %v3438
    %4829 = vmatprep.subr.mxu0 %v3435
    %4830 = vmatpush1.msra.mxu0 %v3434
    %4831 = vmatprep.subr.mxu0 %v3431
    %4832 = vmatpush1.msra.mxu0 %v3430
    %4833 = vmatprep.subr.mxu0 %v3427
    %4834 = vmatpush1.msra.mxu0 %v3426
    %4835 = vmatprep.subr.mxu0 %v3423
    %4836 = vmatpush1.msra.mxu0 %v3422
    %4837 = vmatprep.subr.mxu0 %v3419
    %4838 = vmatpush1.msra.mxu0 %v3418
    %4839 = vmatprep.subr.mxu0 %v3415
    %4840 = vmatpush1.msra.mxu0 %v3414
    %4841 = vmatprep.subr.mxu0 0.0
    %4842 = vmatpush2.msra.mxu0 0.0
    %4843 = vmatprep.subr.mxu0 0.0
    %4844 = vmatpush2.msra.mxu0 0.0
    %4845 = vmatprep.subr.mxu0 0.0
    %4846 = vmatpush2.msra.mxu0 0.0
    %4847 = vmatprep.subr.mxu0 0.0
    %4848 = vmatpush2.msra.mxu0 0.0
    %4849 = vmatprep.subr.mxu0 0.0
    %4850 = vmatpush2.msra.mxu0 0.0
    %4851 = vmatprep.subr.mxu0 0.0
    %4852 = vmatpush2.msra.mxu0 0.0
    %4853 = vmatprep.subr.mxu0 0.0
    %4854 = vmatpush2.msra.mxu0 0.0
    %4855 = vmatprep.subr.mxu0 0.0
    %4856 = vmatpush2.msra.mxu0 0.0
    %4857 = vmatprep.subr.mxu0 0.0
    %4858 = vmatpush2.msra.mxu0 0.0
    %4859 = vmatprep.subr.mxu0 0.0
    %4860 = vmatpush2.msra.mxu0 0.0
    %4861 = vmatprep.subr.mxu0 0.0
    %4862 = vmatpush2.msra.mxu0 0.0
    %4863 = vmatprep.subr.mxu0 0.0
    %4864 = vmatpush2.msra.mxu0 0.0
    %4865 = vmatprep.subr.mxu0 0.0
    %4866 = vmatpush2.msra.mxu0 0.0
    %4867 = vmatprep.subr.mxu0 0.0
    %4868 = vmatpush2.msra.mxu0 0.0
    %4869 = vmatprep.subr.mxu0 0.0
    %4870 = vmatpush2.msra.mxu0 0.0
    %4871 = vmatprep.subr.mxu0 0.0
    %4872 = vmatpush2.msra.mxu0 0.0
    %4873 = vmatprep.mubr.f32.mxu0 0.0
    %4874 = vmatmul.mubr.f32.gmra.mxu0 %v4804
    %v4875 = vpop.f32.mrf.mxu0
    %v4876 = vadd.f32 0.0, %v4875
    %v4877 = vpop.f32.mrf.mxu0
    %v4878 = vadd.f32 0.0, %v4877
    %4879 = vdwg.mxu0
    %4880 = vmatprep.subr.mxu0 %v3477
    %4881 = vmatpush1.msra.mxu0 %v3476
    %4882 = vmatprep.subr.mxu0 %v3473
    %4883 = vmatpush1.msra.mxu0 %v3472
    %4884 = vmatprep.subr.mxu0 %v3469
    %4885 = vmatpush1.msra.mxu0 %v3468
    %4886 = vmatprep.subr.mxu0 %v3465
    %4887 = vmatpush1.msra.mxu0 %v3464
    %4888 = vmatprep.subr.mxu0 %v3461
    %4889 = vmatpush1.msra.mxu0 %v3460
    %4890 = vmatprep.subr.mxu0 %v3457
    %4891 = vmatpush1.msra.mxu0 %v3456
    %4892 = vmatprep.subr.mxu0 %v3453
    %4893 = vmatpush1.msra.mxu0 %v3452
    %4894 = vmatprep.subr.mxu0 %v3449
    %4895 = vmatpush1.msra.mxu0 %v3448
    %4896 = vmatprep.subr.mxu0 %v3445
    %4897 = vmatpush1.msra.mxu0 %v3444
    %4898 = vmatprep.subr.mxu0 %v3441
    %4899 = vmatpush1.msra.mxu0 %v3440
    %4900 = vmatprep.subr.mxu0 %v3437
    %4901 = vmatpush1.msra.mxu0 %v3436
    %4902 = vmatprep.subr.mxu0 %v3433
    %4903 = vmatpush1.msra.mxu0 %v3432
    %4904 = vmatprep.subr.mxu0 %v3429
    %4905 = vmatpush1.msra.mxu0 %v3428
    %4906 = vmatprep.subr.mxu0 %v3425
    %4907 = vmatpush1.msra.mxu0 %v3424
    %4908 = vmatprep.subr.mxu0 %v3421
    %4909 = vmatpush1.msra.mxu0 %v3420
    %4910 = vmatprep.subr.mxu0 %v3417
    %4911 = vmatpush1.msra.mxu0 %v3416
    %4912 = vmatprep.subr.mxu0 0.0
    %4913 = vmatpush2.msra.mxu0 0.0
    %4914 = vmatprep.subr.mxu0 0.0
    %4915 = vmatpush2.msra.mxu0 0.0
    %4916 = vmatprep.subr.mxu0 0.0
    %4917 = vmatpush2.msra.mxu0 0.0
    %4918 = vmatprep.subr.mxu0 0.0
    %4919 = vmatpush2.msra.mxu0 0.0
    %4920 = vmatprep.subr.mxu0 0.0
    %4921 = vmatpush2.msra.mxu0 0.0
    %4922 = vmatprep.subr.mxu0 0.0
    %4923 = vmatpush2.msra.mxu0 0.0
    %4924 = vmatprep.subr.mxu0 0.0
    %4925 = vmatpush2.msra.mxu0 0.0
    %4926 = vmatprep.subr.mxu0 0.0
    %4927 = vmatpush2.msra.mxu0 0.0
    %4928 = vmatprep.subr.mxu0 0.0
    %4929 = vmatpush2.msra.mxu0 0.0
    %4930 = vmatprep.subr.mxu0 0.0
    %4931 = vmatpush2.msra.mxu0 0.0
    %4932 = vmatprep.subr.mxu0 0.0
    %4933 = vmatpush2.msra.mxu0 0.0
    %4934 = vmatprep.subr.mxu0 0.0
    %4935 = vmatpush2.msra.mxu0 0.0
    %4936 = vmatprep.subr.mxu0 0.0
    %4937 = vmatpush2.msra.mxu0 0.0
    %4938 = vmatprep.subr.mxu0 0.0
    %4939 = vmatpush2.msra.mxu0 0.0
    %4940 = vmatprep.subr.mxu0 0.0
    %4941 = vmatpush2.msra.mxu0 0.0
    %4942 = vmatprep.subr.mxu0 0.0
    %4943 = vmatpush2.msra.mxu0 0.0
    %4944 = vmatprep.mubr.f32.mxu0 0.0
    %4945 = vmatmul.mubr.f32.gmra.mxu0 %v4804
    %v4946 = vpop.f32.mrf.mxu0
    %v4947 = vadd.f32 0.0, %v4946
    %v4948 = vpop.f32.mrf.mxu0
    %v4949 = vadd.f32 0.0, %v4948
    %4950 = vdwg.mxu0
    %v4951 = vadd.f32 %v4805, %v4876
    %v4952 = vadd.f32 %v4806, %v4878
    %v4953 = vadd.f32 %v4807, %v4947
    %v4954 = vadd.f32 %v4808, %v4949
    %v4955 = vtanh.pop %v4951
    %v4956 = vtanh.pop %v4952
    %v4957 = vtanh.pop %v4953
    %v4958 = vtanh.pop %v4954
    %v4959 = vmul.f32 %v4955, %v3492
    %v4960 = vmul.f32 %v4956, %v3493
    %v4961 = vmul.f32 %v4957, %v3494
    %v4962 = vmul.f32 %v4958, %v3495
    %v4963 = vadd.f32 %v4959, %v3496
    %v4964 = vadd.f32 %v4960, %v3497
    %v4965 = vadd.f32 %v4961, %v3498
    %v4966 = vadd.f32 %v4962, %v3499
    %v4967 = vmul.f32 %v4964, %v4802
    %v4968 = vmul.f32 %v4963, %v4966
    %v4969 = vadd.f32 %v4967, %v4968
    %v4970 = vtanh.pop %v4969
    %v4971 = vmul.f32 %v4965, %v4970
    %v4972 = vmax.f32 %v3710, %v3905
    %v4973 = vmax.f32 %v4972, %v4104
    %v4974 = vmax.f32 %v4973, %v4303
    %v4975 = vmax.f32 %v4974, %v4470
    %v4976 = vmax.f32 %v4975, %v4637
    %v4977 = vmax.f32 %v4976, %v4804
    %v4978 = vmax.f32 %v4977, %v4971
    %v4979 = vld [vmem:[%s17] sm:$0xff]
    %v4980 = vld [vmem:[%s17 + $0x8] sm:$0xff]
    %v4981 = vld [vmem:[%s17 + $0x10] sm:$0xff]
    %v4982 = vld [vmem:[%s17 + $0x18] sm:$0xff]
    %v4983 = vld [vmem:[%s17 + $0x20] sm:$0xff]
    %v4984 = vld [vmem:[%s17 + $0x28] sm:$0xff]
    %v4985 = vld [vmem:[%s17 + $0x30] sm:$0xff]
    %v4986 = vld [vmem:[%s17 + $0x38] sm:$0xff]
    %v4987 = vld [vmem:[%s17 + $0x40] sm:$0xff]
    %v4988 = vld [vmem:[%s17 + $0x48] sm:$0xff]
    %v4989 = vld [vmem:[%s17 + $0x50] sm:$0xff]
    %v4990 = vld [vmem:[%s17 + $0x58] sm:$0xff]
    %v4991 = vld [vmem:[%s17 + $0x60] sm:$0xff]
    %v4992 = vld [vmem:[%s17 + $0x68] sm:$0xff]
    %v4993 = vld [vmem:[%s17 + $0x70] sm:$0xff]
    %v4994 = vld [vmem:[%s17 + $0x78] sm:$0xff]
    %v4995 = vld [vmem:[#allocation17] sm:$0x1]
    %v4997 = vlaneseq
    %v4998 = vshrl.u32 %v4997, 7
    %v4999 = vsub.s32 0, %v4998
    %v5000 = vrot.slane %v4995, %v4999
    %5002 = vmatprep.subr.mxu0 0.0
    %5003 = vmatpush1.msra.mxu0 %v4994
    %5004 = vmatprep.subr.mxu0 0.0
    %5005 = vmatpush1.msra.mxu0 %v4993
    %5006 = vmatprep.subr.mxu0 0.0
    %5007 = vmatpush1.msra.mxu0 %v4992
    %5008 = vmatprep.subr.mxu0 0.0
    %5009 = vmatpush1.msra.mxu0 %v4991
    %5010 = vmatprep.subr.mxu0 0.0
    %5011 = vmatpush1.msra.mxu0 %v4990
    %5012 = vmatprep.subr.mxu0 0.0
    %5013 = vmatpush1.msra.mxu0 %v4989
    %5014 = vmatprep.subr.mxu0 0.0
    %5015 = vmatpush1.msra.mxu0 %v4988
    %5016 = vmatprep.subr.mxu0 0.0
    %5017 = vmatpush1.msra.mxu0 %v4987
    %5018 = vmatprep.subr.mxu0 0.0
    %5019 = vmatpush1.msra.mxu0 %v4986
    %5020 = vmatprep.subr.mxu0 0.0
    %5021 = vmatpush1.msra.mxu0 %v4985
    %5022 = vmatprep.subr.mxu0 0.0
    %5023 = vmatpush1.msra.mxu0 %v4984
    %5024 = vmatprep.subr.mxu0 0.0
    %5025 = vmatpush1.msra.mxu0 %v4983
    %5026 = vmatprep.subr.mxu0 0.0
    %5027 = vmatpush1.msra.mxu0 %v4982
    %5028 = vmatprep.subr.mxu0 0.0
    %5029 = vmatpush1.msra.mxu0 %v4981
    %5030 = vmatprep.subr.mxu0 0.0
    %5031 = vmatpush1.msra.mxu0 %v4980
    %5032 = vmatprep.subr.mxu0 0.0
    %5033 = vmatpush1.msra.mxu0 %v4979
    %5034 = vmatprep.subr.mxu0 0.0
    %5035 = vmatpush2.msra.mxu0 0.0
    %5036 = vmatprep.subr.mxu0 0.0
    %5037 = vmatpush2.msra.mxu0 0.0
    %5038 = vmatprep.subr.mxu0 0.0
    %5039 = vmatpush2.msra.mxu0 0.0
    %5040 = vmatprep.subr.mxu0 0.0
    %5041 = vmatpush2.msra.mxu0 0.0
    %5042 = vmatprep.subr.mxu0 0.0
    %5043 = vmatpush2.msra.mxu0 0.0
    %5044 = vmatprep.subr.mxu0 0.0
    %5045 = vmatpush2.msra.mxu0 0.0
    %5046 = vmatprep.subr.mxu0 0.0
    %5047 = vmatpush2.msra.mxu0 0.0
    %5048 = vmatprep.subr.mxu0 0.0
    %5049 = vmatpush2.msra.mxu0 0.0
    %5050 = vmatprep.subr.mxu0 0.0
    %5051 = vmatpush2.msra.mxu0 0.0
    %5052 = vmatprep.subr.mxu0 0.0
    %5053 = vmatpush2.msra.mxu0 0.0
    %5054 = vmatprep.subr.mxu0 0.0
    %5055 = vmatpush2.msra.mxu0 0.0
    %5056 = vmatprep.subr.mxu0 0.0
    %5057 = vmatpush2.msra.mxu0 0.0
    %5058 = vmatprep.subr.mxu0 0.0
    %5059 = vmatpush2.msra.mxu0 0.0
    %5060 = vmatprep.subr.mxu0 0.0
    %5061 = vmatpush2.msra.mxu0 0.0
    %5062 = vmatprep.subr.mxu0 0.0
    %5063 = vmatpush2.msra.mxu0 0.0
    %5064 = vmatprep.subr.mxu0 0.0
    %5065 = vmatpush2.msra.mxu0 0.0
    %5066 = vmatprep.mubr.f32.mxu0 0.0
    %5067 = vmatmul.mubr.f32.gmra.mxu0 %v4978
    %v5068 = vpop.f32.mrf.mxu0
    %v5069 = vadd.f32 %v5000, %v5068
    %v5070 = vpop.f32.mrf.mxu0
    %5071 = vdwg.mxu0
    %vm5072 = vcmask 58368
    %5073 = vst.msk [vmem:[#allocation19] sm:$0x3] %vm5072, %v5069
    // Predicated region
    $region118: #{lgcn_forward.1} parent=1 // pred_check
      _
    $region119: #{lgcn_forward.1} parent=1 // pred_check_branch
      %5075 = sbr.rel (0) target = $region121
    $region120: #{lgcn_forward.1} parent=1 // pred_region
      %s5077 = ssub.s32 32, 32
      %5078 = vsyncadd [#allocation4], %s5077
      %s5080 = sshll.u32 [#allocation19], 4
      %s5081 = int_to_ptr.vmem [resolvable:$true] %s5080
      %5083 = dma.vmem_to_hbm [thread:$0]  %s5081, 32, %s19, [#allocation4]
    $region121: #{lgcn_forward.1} parent=1 // pred_fallthru
      _
    // Predicated region
    $region122: #{lgcn_forward.1} parent=1 // pred_check
      _
    $region123: #{lgcn_forward.1} parent=1 // pred_check_branch
      %5085 = sbr.rel (0) target = $region125
    $region124: #{lgcn_forward.1} parent=1 // pred_region
      %5086 = dma.done [#allocation4], 32
    $region125: #{lgcn_forward.1} parent=1 // pred_fallthru
      _
    %5087 = vsyncpa [#allocation3], 1
    %5088 = vsyncpa [#allocation6], 1
    %5089 = vsyncpa [#allocation9], 1
    %5090 = vsyncpa [#allocation12], 1
    %5091 = vsyncpa [#allocation15], 1
    %5092 = vsyncpa [#allocation18], 1
    %5093 = vsyncpa [#allocation4], 1

</llo_original>
